<compile_context>
chip_gen: v5e
topology: v5e:2x2
jax: 0.10.0
libtpu: 0.0.40
codegen_flags: <defaults>
</compile_context>

<pallas_src>
import functools

import jax
import jax.numpy as jnp
from jax import lax
from jax.experimental import pallas as pl
from jax.experimental.pallas import tpu as pltpu


# ----------------------------- Pallas kernel ------------------------------

def _dkf_kernel(
    # static (bound via functools.partial)
    S, B, alpha, use_bf16,
    # inputs
    x_ref, eps_ref,
    wii_ref, wif_ref, wig_ref, wio_ref,          # LSTM input weights (X, H) per gate
    whi_ref, whf_ref, whg_ref, who_ref,          # LSTM hidden weights (H, H) per gate
    bi_ref, bf_ref, bg_ref, bo_ref,              # LSTM biases (1, H) per gate (b_ih + b_hh)
    wcz_ref, wch_ref, bc_ref,                    # combiner (linear)
    we1_ref, be1_ref, we2_ref, be2_ref,          # encoder hidden layers
    we3m_ref, be3m_ref, we3v_ref, be3v_ref,      # encoder head split: mu / logvar
    wp_ref, bp_ref,                              # p_z transition (fused mean | logvar)
    wd1_ref, bd1_ref, wd2_ref, bd2_ref,          # decoder hidden layers
    wd3_ref, bd3_ref,                            # decoder head (fused mean | logvar)
    # outputs (all (S*B, wide); reshaped/split in the wrapper)
    z_mean_ref, z_logvar_ref, z_trans_ref, x_out_ref,
    # scratch
    gxi_ref, gxf_ref, gxg_ref, gxo_ref,          # hoisted LSTM input projections
    rnn_ref, combp_ref, zprev_ref, zseq_ref,
):
    f32 = jnp.float32
    H = whi_ref.shape[0]
    Z = wcz_ref.shape[0]

    def mm(a, w):
        # bf16 matmul operands on v6e/v7x (MXU bf16-native); f32 accumulate.
        if use_bf16:
            a = a.astype(jnp.bfloat16)
            w = w.astype(jnp.bfloat16)
        return jnp.dot(a, w, preferred_element_type=f32)

    # ---- Phase 1: time-parallel LSTM input projections (one GEMM per gate) ----
    x_all = x_ref[...]
    gxi_ref[...] = mm(x_all, wii_ref[...]) + bi_ref[...]
    gxf_ref[...] = mm(x_all, wif_ref[...]) + bf_ref[...]
    gxg_ref[...] = mm(x_all, wig_ref[...]) + bg_ref[...]
    gxo_ref[...] = mm(x_all, wio_ref[...]) + bo_ref[...]

    # Loop-invariant weight loads hoisted out of the recurrence.
    whi = whi_ref[...]
    whf = whf_ref[...]
    whg = whg_ref[...]
    who = who_ref[...]

    # ---- Phase 2: backward LSTM recurrence ----
    # flip(time) -> LSTM -> flip(time)  ==  iterate t = S-1 .. 0, store at t.
    def lstm_step(i, carry):
        h, c = carry
        t = S - 1 - i
        r = pl.multiple_of(t * B, B)
        i_g = jax.nn.sigmoid(gxi_ref[pl.ds(r, B), :] + mm(h, whi))
        f_g = jax.nn.sigmoid(gxf_ref[pl.ds(r, B), :] + mm(h, whf))
        g_g = jnp.tanh(gxg_ref[pl.ds(r, B), :] + mm(h, whg))
        o_g = jax.nn.sigmoid(gxo_ref[pl.ds(r, B), :] + mm(h, who))
        c_new = f_g * c + i_g * g_g
        h_new = o_g * jnp.tanh(c_new)
        rnn_ref[pl.ds(r, B), :] = h_new
        return (h_new, c_new)

    lax.fori_loop(0, S, lstm_step,
                  (jnp.zeros((B, H), f32), jnp.zeros((B, H), f32)),
                  unroll=True)

    # ---- Phase 3: time-parallel combiner RNN-side projection (batched GEMM) ----
    combp_ref[...] = (1.0 - alpha) * mm(rnn_ref[...], wch_ref[...]) + bc_ref[...]

    # Hoist z-loop weights / biases out of the loop body.
    wcz = wcz_ref[...]
    we1 = we1_ref[...]
    be1 = be1_ref[...]
    we2 = we2_ref[...]
    be2 = be2_ref[...]
    we3m = we3m_ref[...]
    be3m = be3m_ref[...]
    we3v = we3v_ref[...]
    be3v = be3v_ref[...]

    # ---- Phase 4: sequential latent loop (combiner -> encoder -> sample) ----
    def z_step(t, z_prev):
        r = pl.multiple_of(t * B, B)
        zprev_ref[pl.ds(r, B), :] = z_prev          # builds cat([z_0, z[:-1]]) for p_z
        comb = jnp.tanh(alpha * mm(z_prev, wcz) + combp_ref[pl.ds(r, B), :])
        e = jnp.tanh(mm(comb, we1) + be1)
        e = jnp.tanh(mm(e, we2) + be2)
        mu = mm(e, we3m) + be3m                     # (B, Z) — no in-kernel head slicing
        logvar = mm(e, we3v) + be3v                 # (B, Z)
        z_mean_ref[pl.ds(r, B), :] = mu
        z_logvar_ref[pl.ds(r, B), :] = logvar
        # reparameterization trick (eps precomputed outside)
        z_t = mu + eps_ref[pl.ds(r, B), :] * jnp.exp(0.5 * logvar)
        zseq_ref[pl.ds(r, B), :] = z_t
        return z_t

    # Z_0 parameter is initialized to zeros in DKF_Base.
    lax.fori_loop(0, S, z_step, jnp.zeros((B, Z), f32), unroll=True)

    # ---- Phase 5: transition prior p(z_t | z_{t-1}) as one batched GEMM ----
    z_trans_ref[...] = mm(zprev_ref[...], wp_ref[...]) + bp_ref[...]

    # ---- Phase 6: decoder as batched GEMMs (dropout_p = 0 -> identity) ----
    d = jnp.tanh(mm(zseq_ref[...], wd1_ref[...]) + bd1_ref[...])
    d = jnp.tanh(mm(d, wd2_ref[...]) + bd2_ref[...])
    x_out_ref[...] = mm(d, wd3_ref[...]) + bd3_ref[...]


# ----------------------------- wrapper -----------------------------------

def dkf_forward(x, eps, p, *, combiner_alpha=0.5, use_bf16=False):
    S, B, Xd = x.shape
    Z = eps.shape[2]
    H = p["w_hh"].shape[0]
    C = p["wch"].shape[1]
    SB = S * B

    x2 = x.reshape(SB, Xd)
    eps2 = eps.reshape(SB, Z)

    # Split fused LSTM params per gate (PyTorch gate order i, f, g, o) at the
    # XLA level (free), so the kernel never slices gates at non-128 offsets.
    w_ih, w_hh, b = p["w_ih"], p["w_hh"], p["b_lstm"]
    wi = [w_ih[:, k * H:(k + 1) * H] for k in range(4)]
    wh = [w_hh[:, k * H:(k + 1) * H] for k in range(4)]
    bb = [b[:, k * H:(k + 1) * H] for k in range(4)]

    # Split the encoder head into mu / logvar halves at the XLA level so the
    # sequential z-loop never slices columns at a non-lane-aligned offset.
    we3m, we3v = p["we3"][:, :Z], p["we3"][:, Z:]
    be3m, be3v = p["be3"][:, :Z], p["be3"][:, Z:]

    ins = [
        x2, eps2,
        wi[0], wi[1], wi[2], wi[3],
        wh[0], wh[1], wh[2], wh[3],
        bb[0], bb[1], bb[2], bb[3],
        p["wcz"], p["wch"], p["bc"],
        p["we1"], p["be1"], p["we2"], p["be2"],
        we3m, be3m, we3v, be3v,
        p["wp"], p["bp"],
        p["wd1"], p["bd1"], p["wd2"], p["bd2"], p["wd3"], p["bd3"],
    ]
    out_shape = (
        jax.ShapeDtypeStruct((SB, Z), jnp.float32),       # z_mean
        jax.ShapeDtypeStruct((SB, Z), jnp.float32),       # z_logvar
        jax.ShapeDtypeStruct((SB, 2 * Z), jnp.float32),   # z_transition mean | logvar
        jax.ShapeDtypeStruct((SB, 2 * Xd), jnp.float32),  # x_hat mean | logvar
    )
    f32 = jnp.float32
    vm = pl.BlockSpec(memory_space=pltpu.MemorySpace.VMEM)
    kernel = functools.partial(_dkf_kernel, S, B, float(combiner_alpha), use_bf16)

    z_mean, z_logvar, z_trans, x_out = pl.pallas_call(
        kernel,
        out_shape=out_shape,
        in_specs=[vm] * len(ins),
        out_specs=(vm, vm, vm, vm),
        scratch_shapes=[
            pltpu.VMEM((SB, H), f32), pltpu.VMEM((SB, H), f32),   # gx_i, gx_f
            pltpu.VMEM((SB, H), f32), pltpu.VMEM((SB, H), f32),   # gx_g, gx_o
            pltpu.VMEM((SB, H), f32),                             # backward-RNN feats
            pltpu.VMEM((SB, C), f32),                             # (1-a)*rnn@Wch + bc
            pltpu.VMEM((SB, Z), f32),                             # z_{t-1} sequence
            pltpu.VMEM((SB, Z), f32),                             # sampled z_t sequence
        ],
        compiler_params=pltpu.CompilerParams(vmem_limit_bytes=32 * 1024 * 1024),
    )(*ins)

    z_mean = z_mean.reshape(S, B, Z)
    z_logvar = z_logvar.reshape(S, B, Z)
    z_trans = z_trans.reshape(S, B, 2 * Z)
    x_out = x_out.reshape(S, B, 2 * Xd)
    z_tm, z_tlv = z_trans[..., :Z], z_trans[..., Z:]
    x_hat, x_hat_lv = x_out[..., :Xd], x_out[..., Xd:]
    # match torch forward return: (x, x_hat, x_hat_logvar, z_mean, z_logvar,
    #                              z_transition_mean, z_transition_logvar)
    return (x, x_hat, x_hat_lv, z_mean, z_logvar, z_tm, z_tlv)


# ------------------------- pure-JAX reference -----------------------------

def dkf_reference(x, eps, p, alpha=0.5):
    S, B, Xd = x.shape
    H = p["w_hh"].shape[0]
    Z = eps.shape[2]
    # backward LSTM
    h = jnp.zeros((B, H), jnp.float32)
    c = jnp.zeros((B, H), jnp.float32)
    rnn = [None] * S
    for i in range(S):
        t = S - 1 - i
        g = x[t] @ p["w_ih"] + h @ p["w_hh"] + p["b_lstm"]
        i_g = jax.nn.sigmoid(g[:, :H])
        f_g = jax.nn.sigmoid(g[:, H:2 * H])
        g_g = jnp.tanh(g[:, 2 * H:3 * H])
        o_g = jax.nn.sigmoid(g[:, 3 * H:])
        c = f_g * c + i_g * g_g
        h = o_g * jnp.tanh(c)
        rnn[t] = h

    z_prev = jnp.zeros((B, Z), jnp.float32)
    zm, zlv, ztm, ztlv, xh, xhlv = [], [], [], [], [], []
    for t in range(S):
        trans = z_prev @ p["wp"] + p["bp"]
        ztm.append(trans[:, :Z])
        ztlv.append(trans[:, Z:])
        comb = jnp.tanh(alpha * (z_prev @ p["wcz"])
                        + (1.0 - alpha) * (rnn[t] @ p["wch"]) + p["bc"])
        e = jnp.tanh(comb @ p["we1"] + p["be1"])
        e = jnp.tanh(e @ p["we2"] + p["be2"])
        head = e @ p["we3"] + p["be3"]
        mu, logvar = head[:, :Z], head[:, Z:]
        zm.append(mu)
        zlv.append(logvar)
        z_t = mu + eps[t] * jnp.exp(0.5 * logvar)
        d = jnp.tanh(z_t @ p["wd1"] + p["bd1"])
        d = jnp.tanh(d @ p["wd2"] + p["bd2"])
        xhead = d @ p["wd3"] + p["bd3"]
        xh.append(xhead[:, :Xd])
        xhlv.append(xhead[:, Xd:])
        z_prev = z_t
    stk = lambda lst: jnp.stack(lst, axis=0)
    return (x, stk(xh), stk(xhlv), stk(zm), stk(zlv), stk(ztm), stk(ztlv))


# ----------------------------- init / main --------------------------------

def init_params(key, x_dim, z_dim, H, comb_dim, enc_dims, dec_dims):
    ks = iter(jax.random.split(key, 64))

    def lin(k_w, k_b, d_in, d_out):
        s = 1.0 / jnp.sqrt(jnp.float32(d_in))
        w = jax.random.uniform(k_w, (d_in, d_out), jnp.float32, -s, s)
        b = jax.random.uniform(k_b, (1, d_out), jnp.float32, -s, s)
        return w, b

    p = {}
    # LSTM (PyTorch gate order i,f,g,o); combine the two biases.
    p["w_ih"], b_ih = lin(next(ks), next(ks), x_dim, 4 * H)
    p["w_hh"], b_hh = lin(next(ks), next(ks), H, 4 * H)
    p["b_lstm"] = b_ih + b_hh
    # combiner (linear)
    p["wcz"], _ = lin(next(ks), next(ks), z_dim, comb_dim)
    p["wch"], p["bc"] = lin(next(ks), next(ks), H, comb_dim)
    # encoder: comb_dim -> enc_dims -> 2*z_dim (fused mu|logvar head)
    p["we1"], p["be1"] = lin(next(ks), next(ks), comb_dim, enc_dims[0])
    p["we2"], p["be2"] = lin(next(ks), next(ks), enc_dims[0], enc_dims[1])
    p["we3"], p["be3"] = lin(next(ks), next(ks), enc_dims[1], 2 * z_dim)
    # p_z transition: z_dim -> 2*z_dim (fused)
    p["wp"], p["bp"] = lin(next(ks), next(ks), z_dim, 2 * z_dim)
    # decoder: z_dim -> dec_dims -> 2*x_dim (fused mean|logvar head)
    p["wd1"], p["bd1"] = lin(next(ks), next(ks), z_dim, dec_dims[0])
    p["wd2"], p["bd2"] = lin(next(ks), next(ks), dec_dims[0], dec_dims[1])
    p["wd3"], p["bd3"] = lin(next(ks), next(ks), dec_dims[1], 2 * x_dim)
    return p


if __name__ == "__main__":
    # B=8 fills full sublanes and keeps all per-step row offsets 8-aligned.
    S, B = 8, 8
    x_dim, z_dim = 16, 16
    H, comb_dim = 64, 64
    enc_dims, dec_dims = [128, 64], [64, 64]

    key = jax.random.PRNGKey(0)
    k_x, k_eps, k_p = jax.random.split(key, 3)
    x = jax.random.normal(k_x, (S, B, x_dim), jnp.float32)
    eps = jax.random.normal(k_eps, (S, B, z_dim), jnp.float32)
    params = init_params(k_p, x_dim, z_dim, H, comb_dim, enc_dims, dec_dims)

    # use_bf16=True is the recommended setting on v6e/v7x once numerics allow;
    # keep f32 here so the check against the f32 reference is tight.
    outs = dkf_forward(x, eps, params, use_bf16=False)
    outs = jax.block_until_ready(outs)

    refs = dkf_reference(x, eps, params)
    names = ["x", "x_hat", "x_hat_logvar", "z_mean", "z_logvar",
             "z_transition_mean", "z_transition_logvar"]
    for name, a, b in zip(names, outs, refs):
        assert a.shape == b.shape, (name, a.shape, b.shape)
        assert jnp.allclose(a, b, atol=5e-3, rtol=5e-3), name

    print("KERNEL_OK")
</pallas_src>

<mosaic_0001>
module attributes {stable_mosaic.version = 11 : i64} {
  func.func @_dkf_kernel(%arg0: memref<64x16xf32, #tpu.memory_space<vmem>>, %arg1: memref<64x16xf32, #tpu.memory_space<vmem>>, %arg2: memref<16x64xf32, #tpu.memory_space<vmem>>, %arg3: memref<16x64xf32, #tpu.memory_space<vmem>>, %arg4: memref<16x64xf32, #tpu.memory_space<vmem>>, %arg5: memref<16x64xf32, #tpu.memory_space<vmem>>, %arg6: memref<64x64xf32, #tpu.memory_space<vmem>>, %arg7: memref<64x64xf32, #tpu.memory_space<vmem>>, %arg8: memref<64x64xf32, #tpu.memory_space<vmem>>, %arg9: memref<64x64xf32, #tpu.memory_space<vmem>>, %arg10: memref<1x64xf32, #tpu.memory_space<vmem>>, %arg11: memref<1x64xf32, #tpu.memory_space<vmem>>, %arg12: memref<1x64xf32, #tpu.memory_space<vmem>>, %arg13: memref<1x64xf32, #tpu.memory_space<vmem>>, %arg14: memref<16x64xf32, #tpu.memory_space<vmem>>, %arg15: memref<64x64xf32, #tpu.memory_space<vmem>>, %arg16: memref<1x64xf32, #tpu.memory_space<vmem>>, %arg17: memref<64x128xf32, #tpu.memory_space<vmem>>, %arg18: memref<1x128xf32, #tpu.memory_space<vmem>>, %arg19: memref<128x64xf32, #tpu.memory_space<vmem>>, %arg20: memref<1x64xf32, #tpu.memory_space<vmem>>, %arg21: memref<64x16xf32, #tpu.memory_space<vmem>>, %arg22: memref<1x16xf32, #tpu.memory_space<vmem>>, %arg23: memref<64x16xf32, #tpu.memory_space<vmem>>, %arg24: memref<1x16xf32, #tpu.memory_space<vmem>>, %arg25: memref<16x32xf32, #tpu.memory_space<vmem>>, %arg26: memref<1x32xf32, #tpu.memory_space<vmem>>, %arg27: memref<16x64xf32, #tpu.memory_space<vmem>>, %arg28: memref<1x64xf32, #tpu.memory_space<vmem>>, %arg29: memref<64x64xf32, #tpu.memory_space<vmem>>, %arg30: memref<1x64xf32, #tpu.memory_space<vmem>>, %arg31: memref<64x32xf32, #tpu.memory_space<vmem>>, %arg32: memref<1x32xf32, #tpu.memory_space<vmem>>, %arg33: memref<64x16xf32, #tpu.memory_space<vmem>>, %arg34: memref<64x16xf32, #tpu.memory_space<vmem>>, %arg35: memref<64x32xf32, #tpu.memory_space<vmem>>, %arg36: memref<64x32xf32, #tpu.memory_space<vmem>>, %arg37: memref<64x64xf32, #tpu.memory_space<vmem>>, %arg38: memref<64x64xf32, #tpu.memory_space<vmem>>, %arg39: memref<64x64xf32, #tpu.memory_space<vmem>>, %arg40: memref<64x64xf32, #tpu.memory_space<vmem>>, %arg41: memref<64x64xf32, #tpu.memory_space<vmem>>, %arg42: memref<64x64xf32, #tpu.memory_space<vmem>>, %arg43: memref<64x16xf32, #tpu.memory_space<vmem>>, %arg44: memref<64x16xf32, #tpu.memory_space<vmem>>) attributes {dimension_semantics = [], scalar_prefetch = 0 : i64, scratch_operands = 8 : i64, tpu.core_type = #tpu.core_type<tc>} {
    %c0 = arith.constant 0 : index
    %c0_0 = arith.constant 0 : index
    %0 = vector.load %arg0[%c0, %c0_0] : memref<64x16xf32, #tpu.memory_space<vmem>>, vector<64x16xf32>
    %c0_1 = arith.constant 0 : index
    %c0_2 = arith.constant 0 : index
    %1 = vector.load %arg2[%c0_1, %c0_2] : memref<16x64xf32, #tpu.memory_space<vmem>>, vector<16x64xf32>
    %cst = arith.constant dense<0.000000e+00> : vector<64x64xf32>
    %2 = tpu.matmul %0, %1, %cst {dimension_numbers = #tpu.dot_dimension_numbers<[1], [0], [0], [1], [0, 0, 1, 1], [], []>} : vector<64x16xf32>, vector<16x64xf32>, vector<64x64xf32> -> vector<64x64xf32>
    %c0_3 = arith.constant 0 : index
    %c0_4 = arith.constant 0 : index
    %3 = vector.load %arg10[%c0_3, %c0_4] : memref<1x64xf32, #tpu.memory_space<vmem>>, vector<1x64xf32>
    %4 = vector.broadcast %3 : vector<1x64xf32> to vector<64x64xf32>
    %5 = arith.addf %2, %4 : vector<64x64xf32>
    %c0_5 = arith.constant 0 : index
    %c0_6 = arith.constant 0 : index
    %6 = vector.load %arg37[%c0_5, %c0_6] : memref<64x64xf32, #tpu.memory_space<vmem>>, vector<64x64xf32>
    tpu.vector_store %arg37[%c0_5, %c0_6], %5 {strides = array<i32>} : memref<64x64xf32, #tpu.memory_space<vmem>>, vector<64x64xf32>,
    %c0_7 = arith.constant 0 : index
    %c0_8 = arith.constant 0 : index
    %7 = vector.load %arg3[%c0_7, %c0_8] : memref<16x64xf32, #tpu.memory_space<vmem>>, vector<16x64xf32>
    %cst_9 = arith.constant dense<0.000000e+00> : vector<64x64xf32>
    %8 = tpu.matmul %0, %7, %cst_9 {dimension_numbers = #tpu.dot_dimension_numbers<[1], [0], [0], [1], [0, 0, 1, 1], [], []>} : vector<64x16xf32>, vector<16x64xf32>, vector<64x64xf32> -> vector<64x64xf32>
    %c0_10 = arith.constant 0 : index
    %c0_11 = arith.constant 0 : index
    %9 = vector.load %arg11[%c0_10, %c0_11] : memref<1x64xf32, #tpu.memory_space<vmem>>, vector<1x64xf32>
    %10 = vector.broadcast %9 : vector<1x64xf32> to vector<64x64xf32>
    %11 = arith.addf %8, %10 : vector<64x64xf32>
    %c0_12 = arith.constant 0 : index
    %c0_13 = arith.constant 0 : index
    %12 = vector.load %arg38[%c0_12, %c0_13] : memref<64x64xf32, #tpu.memory_space<vmem>>, vector<64x64xf32>
    tpu.vector_store %arg38[%c0_12, %c0_13], %11 {strides = array<i32>} : memref<64x64xf32, #tpu.memory_space<vmem>>, vector<64x64xf32>,
    %c0_14 = arith.constant 0 : index
    %c0_15 = arith.constant 0 : index
    %13 = vector.load %arg4[%c0_14, %c0_15] : memref<16x64xf32, #tpu.memory_space<vmem>>, vector<16x64xf32>
    %cst_16 = arith.constant dense<0.000000e+00> : vector<64x64xf32>
    %14 = tpu.matmul %0, %13, %cst_16 {dimension_numbers = #tpu.dot_dimension_numbers<[1], [0], [0], [1], [0, 0, 1, 1], [], []>} : vector<64x16xf32>, vector<16x64xf32>, vector<64x64xf32> -> vector<64x64xf32>
    %c0_17 = arith.constant 0 : index
    %c0_18 = arith.constant 0 : index
    %15 = vector.load %arg12[%c0_17, %c0_18] : memref<1x64xf32, #tpu.memory_space<vmem>>, vector<1x64xf32>
    %16 = vector.broadcast %15 : vector<1x64xf32> to vector<64x64xf32>
    %17 = arith.addf %14, %16 : vector<64x64xf32>
    %c0_19 = arith.constant 0 : index
    %c0_20 = arith.constant 0 : index
    %18 = vector.load %arg39[%c0_19, %c0_20] : memref<64x64xf32, #tpu.memory_space<vmem>>, vector<64x64xf32>
    tpu.vector_store %arg39[%c0_19, %c0_20], %17 {strides = array<i32>} : memref<64x64xf32, #tpu.memory_space<vmem>>, vector<64x64xf32>,
    %c0_21 = arith.constant 0 : index
    %c0_22 = arith.constant 0 : index
    %19 = vector.load %arg5[%c0_21, %c0_22] : memref<16x64xf32, #tpu.memory_space<vmem>>, vector<16x64xf32>
    %cst_23 = arith.constant dense<0.000000e+00> : vector<64x64xf32>
    %20 = tpu.matmul %0, %19, %cst_23 {dimension_numbers = #tpu.dot_dimension_numbers<[1], [0], [0], [1], [0, 0, 1, 1], [], []>} : vector<64x16xf32>, vector<16x64xf32>, vector<64x64xf32> -> vector<64x64xf32>
    %c0_24 = arith.constant 0 : index
    %c0_25 = arith.constant 0 : index
    %21 = vector.load %arg13[%c0_24, %c0_25] : memref<1x64xf32, #tpu.memory_space<vmem>>, vector<1x64xf32>
    %22 = vector.broadcast %21 : vector<1x64xf32> to vector<64x64xf32>
    %23 = arith.addf %20, %22 : vector<64x64xf32>
    %c0_26 = arith.constant 0 : index
    %c0_27 = arith.constant 0 : index
    %24 = vector.load %arg40[%c0_26, %c0_27] : memref<64x64xf32, #tpu.memory_space<vmem>>, vector<64x64xf32>
    tpu.vector_store %arg40[%c0_26, %c0_27], %23 {strides = array<i32>} : memref<64x64xf32, #tpu.memory_space<vmem>>, vector<64x64xf32>,
    %c0_28 = arith.constant 0 : index
    %c0_29 = arith.constant 0 : index
    %25 = vector.load %arg6[%c0_28, %c0_29] : memref<64x64xf32, #tpu.memory_space<vmem>>, vector<64x64xf32>
    %c0_30 = arith.constant 0 : index
    %c0_31 = arith.constant 0 : index
    %26 = vector.load %arg7[%c0_30, %c0_31] : memref<64x64xf32, #tpu.memory_space<vmem>>, vector<64x64xf32>
    %c0_32 = arith.constant 0 : index
    %c0_33 = arith.constant 0 : index
    %27 = vector.load %arg8[%c0_32, %c0_33] : memref<64x64xf32, #tpu.memory_space<vmem>>, vector<64x64xf32>
    %c0_34 = arith.constant 0 : index
    %c0_35 = arith.constant 0 : index
    %28 = vector.load %arg9[%c0_34, %c0_35] : memref<64x64xf32, #tpu.memory_space<vmem>>, vector<64x64xf32>
    %cst_36 = arith.constant 0.000000e+00 : f32
    %29 = vector.broadcast %cst_36 : f32 to vector<8x64xf32>
    %cst_37 = arith.constant 0.000000e+00 : f32
    %30 = vector.broadcast %cst_37 : f32 to vector<8x64xf32>
    %c0_i32 = arith.constant 0 : i32
    %c7_i32 = arith.constant 7 : i32
    %31 = arith.subi %c7_i32, %c0_i32 : i32
    %c8_i32 = arith.constant 8 : i32
    %32 = arith.muli %31, %c8_i32 : i32
    %33 = tpu.assume_multiple %32, 8 : i32
    %34 = arith.index_cast %33 : i32 to index
    %c0_38 = arith.constant 0 : index
    %35 = vector.load %arg37[%34, %c0_38] : memref<64x64xf32, #tpu.memory_space<vmem>>, vector<8x64xf32>
    %cst_39 = arith.constant dense<0.000000e+00> : vector<8x64xf32>
    %36 = tpu.matmul %29, %25, %cst_39 {dimension_numbers = #tpu.dot_dimension_numbers<[1], [0], [0], [1], [0, 0, 1, 1], [], []>} : vector<8x64xf32>, vector<64x64xf32>, vector<8x64xf32> -> vector<8x64xf32>
    %37 = arith.addf %35, %36 : vector<8x64xf32>
    %38 = arith.negf %37 : vector<8x64xf32>
    %39 = math.exp %38 : vector<8x64xf32>
    %cst_40 = arith.constant 1.000000e+00 : f32
    %40 = vector.broadcast %cst_40 : f32 to vector<8x64xf32>
    %41 = arith.addf %40, %39 : vector<8x64xf32>
    %42 = arith.divf %40, %41 : vector<8x64xf32>
    %43 = arith.index_cast %33 : i32 to index
    %c0_41 = arith.constant 0 : index
    %44 = vector.load %arg38[%43, %c0_41] : memref<64x64xf32, #tpu.memory_space<vmem>>, vector<8x64xf32>
    %cst_42 = arith.constant dense<0.000000e+00> : vector<8x64xf32>
    %45 = tpu.matmul %29, %26, %cst_42 {dimension_numbers = #tpu.dot_dimension_numbers<[1], [0], [0], [1], [0, 0, 1, 1], [], []>} : vector<8x64xf32>, vector<64x64xf32>, vector<8x64xf32> -> vector<8x64xf32>
    %46 = arith.addf %44, %45 : vector<8x64xf32>
    %47 = arith.negf %46 : vector<8x64xf32>
    %48 = math.exp %47 : vector<8x64xf32>
    %cst_43 = arith.constant 1.000000e+00 : f32
    %49 = vector.broadcast %cst_43 : f32 to vector<8x64xf32>
    %50 = arith.addf %49, %48 : vector<8x64xf32>
    %51 = arith.divf %49, %50 : vector<8x64xf32>
    %52 = arith.index_cast %33 : i32 to index
    %c0_44 = arith.constant 0 : index
    %53 = vector.load %arg39[%52, %c0_44] : memref<64x64xf32, #tpu.memory_space<vmem>>, vector<8x64xf32>
    %cst_45 = arith.constant dense<0.000000e+00> : vector<8x64xf32>
    %54 = tpu.matmul %29, %27, %cst_45 {dimension_numbers = #tpu.dot_dimension_numbers<[1], [0], [0], [1], [0, 0, 1, 1], [], []>} : vector<8x64xf32>, vector<64x64xf32>, vector<8x64xf32> -> vector<8x64xf32>
    %55 = arith.addf %53, %54 : vector<8x64xf32>
    %56 = math.tanh %55 : vector<8x64xf32>
    %57 = arith.index_cast %33 : i32 to index
    %c0_46 = arith.constant 0 : index
    %58 = vector.load %arg40[%57, %c0_46] : memref<64x64xf32, #tpu.memory_space<vmem>>, vector<8x64xf32>
    %cst_47 = arith.constant dense<0.000000e+00> : vector<8x64xf32>
    %59 = tpu.matmul %29, %28, %cst_47 {dimension_numbers = #tpu.dot_dimension_numbers<[1], [0], [0], [1], [0, 0, 1, 1], [], []>} : vector<8x64xf32>, vector<64x64xf32>, vector<8x64xf32> -> vector<8x64xf32>
    %60 = arith.addf %58, %59 : vector<8x64xf32>
    %61 = arith.negf %60 : vector<8x64xf32>
    %62 = math.exp %61 : vector<8x64xf32>
    %cst_48 = arith.constant 1.000000e+00 : f32
    %63 = vector.broadcast %cst_48 : f32 to vector<8x64xf32>
    %64 = arith.addf %63, %62 : vector<8x64xf32>
    %65 = arith.divf %63, %64 : vector<8x64xf32>
    %66 = arith.mulf %51, %30 : vector<8x64xf32>
    %67 = arith.mulf %42, %56 : vector<8x64xf32>
    %68 = arith.addf %66, %67 : vector<8x64xf32>
    %69 = math.tanh %68 : vector<8x64xf32>
    %70 = arith.mulf %65, %69 : vector<8x64xf32>
    %71 = arith.index_cast %33 : i32 to index
    %c0_49 = arith.constant 0 : index
    %72 = vector.load %arg41[%71, %c0_49] : memref<64x64xf32, #tpu.memory_space<vmem>>, vector<8x64xf32>
    tpu.vector_store %arg41[%71, %c0_49], %70 {strides = array<i32>} : memref<64x64xf32, #tpu.memory_space<vmem>>, vector<8x64xf32>,
    %c1_i32 = arith.constant 1 : i32
    %c7_i32_50 = arith.constant 7 : i32
    %73 = arith.subi %c7_i32_50, %c1_i32 : i32
    %c8_i32_51 = arith.constant 8 : i32
    %74 = arith.muli %73, %c8_i32_51 : i32
    %75 = tpu.assume_multiple %74, 8 : i32
    %76 = arith.index_cast %75 : i32 to index
    %c0_52 = arith.constant 0 : index
    %77 = vector.load %arg37[%76, %c0_52] : memref<64x64xf32, #tpu.memory_space<vmem>>, vector<8x64xf32>
    %cst_53 = arith.constant dense<0.000000e+00> : vector<8x64xf32>
    %78 = tpu.matmul %70, %25, %cst_53 {dimension_numbers = #tpu.dot_dimension_numbers<[1], [0], [0], [1], [0, 0, 1, 1], [], []>} : vector<8x64xf32>, vector<64x64xf32>, vector<8x64xf32> -> vector<8x64xf32>
    %79 = arith.addf %77, %78 : vector<8x64xf32>
    %80 = arith.negf %79 : vector<8x64xf32>
    %81 = math.exp %80 : vector<8x64xf32>
    %cst_54 = arith.constant 1.000000e+00 : f32
    %82 = vector.broadcast %cst_54 : f32 to vector<8x64xf32>
    %83 = arith.addf %82, %81 : vector<8x64xf32>
    %84 = arith.divf %82, %83 : vector<8x64xf32>
    %85 = arith.index_cast %75 : i32 to index
    %c0_55 = arith.constant 0 : index
    %86 = vector.load %arg38[%85, %c0_55] : memref<64x64xf32, #tpu.memory_space<vmem>>, vector<8x64xf32>
    %cst_56 = arith.constant dense<0.000000e+00> : vector<8x64xf32>
    %87 = tpu.matmul %70, %26, %cst_56 {dimension_numbers = #tpu.dot_dimension_numbers<[1], [0], [0], [1], [0, 0, 1, 1], [], []>} : vector<8x64xf32>, vector<64x64xf32>, vector<8x64xf32> -> vector<8x64xf32>
    %88 = arith.addf %86, %87 : vector<8x64xf32>
    %89 = arith.negf %88 : vector<8x64xf32>
    %90 = math.exp %89 : vector<8x64xf32>
    %cst_57 = arith.constant 1.000000e+00 : f32
    %91 = vector.broadcast %cst_57 : f32 to vector<8x64xf32>
    %92 = arith.addf %91, %90 : vector<8x64xf32>
    %93 = arith.divf %91, %92 : vector<8x64xf32>
    %94 = arith.index_cast %75 : i32 to index
    %c0_58 = arith.constant 0 : index
    %95 = vector.load %arg39[%94, %c0_58] : memref<64x64xf32, #tpu.memory_space<vmem>>, vector<8x64xf32>
    %cst_59 = arith.constant dense<0.000000e+00> : vector<8x64xf32>
    %96 = tpu.matmul %70, %27, %cst_59 {dimension_numbers = #tpu.dot_dimension_numbers<[1], [0], [0], [1], [0, 0, 1, 1], [], []>} : vector<8x64xf32>, vector<64x64xf32>, vector<8x64xf32> -> vector<8x64xf32>
    %97 = arith.addf %95, %96 : vector<8x64xf32>
    %98 = math.tanh %97 : vector<8x64xf32>
    %99 = arith.index_cast %75 : i32 to index
    %c0_60 = arith.constant 0 : index
    %100 = vector.load %arg40[%99, %c0_60] : memref<64x64xf32, #tpu.memory_space<vmem>>, vector<8x64xf32>
    %cst_61 = arith.constant dense<0.000000e+00> : vector<8x64xf32>
    %101 = tpu.matmul %70, %28, %cst_61 {dimension_numbers = #tpu.dot_dimension_numbers<[1], [0], [0], [1], [0, 0, 1, 1], [], []>} : vector<8x64xf32>, vector<64x64xf32>, vector<8x64xf32> -> vector<8x64xf32>
    %102 = arith.addf %100, %101 : vector<8x64xf32>
    %103 = arith.negf %102 : vector<8x64xf32>
    %104 = math.exp %103 : vector<8x64xf32>
    %cst_62 = arith.constant 1.000000e+00 : f32
    %105 = vector.broadcast %cst_62 : f32 to vector<8x64xf32>
    %106 = arith.addf %105, %104 : vector<8x64xf32>
    %107 = arith.divf %105, %106 : vector<8x64xf32>
    %108 = arith.mulf %93, %68 : vector<8x64xf32>
    %109 = arith.mulf %84, %98 : vector<8x64xf32>
    %110 = arith.addf %108, %109 : vector<8x64xf32>
    %111 = math.tanh %110 : vector<8x64xf32>
    %112 = arith.mulf %107, %111 : vector<8x64xf32>
    %113 = arith.index_cast %75 : i32 to index
    %c0_63 = arith.constant 0 : index
    %114 = vector.load %arg41[%113, %c0_63] : memref<64x64xf32, #tpu.memory_space<vmem>>, vector<8x64xf32>
    tpu.vector_store %arg41[%113, %c0_63], %112 {strides = array<i32>} : memref<64x64xf32, #tpu.memory_space<vmem>>, vector<8x64xf32>,
    %c2_i32 = arith.constant 2 : i32
    %c7_i32_64 = arith.constant 7 : i32
    %115 = arith.subi %c7_i32_64, %c2_i32 : i32
    %c8_i32_65 = arith.constant 8 : i32
    %116 = arith.muli %115, %c8_i32_65 : i32
    %117 = tpu.assume_multiple %116, 8 : i32
    %118 = arith.index_cast %117 : i32 to index
    %c0_66 = arith.constant 0 : index
    %119 = vector.load %arg37[%118, %c0_66] : memref<64x64xf32, #tpu.memory_space<vmem>>, vector<8x64xf32>
    %cst_67 = arith.constant dense<0.000000e+00> : vector<8x64xf32>
    %120 = tpu.matmul %112, %25, %cst_67 {dimension_numbers = #tpu.dot_dimension_numbers<[1], [0], [0], [1], [0, 0, 1, 1], [], []>} : vector<8x64xf32>, vector<64x64xf32>, vector<8x64xf32> -> vector<8x64xf32>
    %121 = arith.addf %119, %120 : vector<8x64xf32>
    %122 = arith.negf %121 : vector<8x64xf32>
    %123 = math.exp %122 : vector<8x64xf32>
    %cst_68 = arith.constant 1.000000e+00 : f32
    %124 = vector.broadcast %cst_68 : f32 to vector<8x64xf32>
    %125 = arith.addf %124, %123 : vector<8x64xf32>
    %126 = arith.divf %124, %125 : vector<8x64xf32>
    %127 = arith.index_cast %117 : i32 to index
    %c0_69 = arith.constant 0 : index
    %128 = vector.load %arg38[%127, %c0_69] : memref<64x64xf32, #tpu.memory_space<vmem>>, vector<8x64xf32>
    %cst_70 = arith.constant dense<0.000000e+00> : vector<8x64xf32>
    %129 = tpu.matmul %112, %26, %cst_70 {dimension_numbers = #tpu.dot_dimension_numbers<[1], [0], [0], [1], [0, 0, 1, 1], [], []>} : vector<8x64xf32>, vector<64x64xf32>, vector<8x64xf32> -> vector<8x64xf32>
    %130 = arith.addf %128, %129 : vector<8x64xf32>
    %131 = arith.negf %130 : vector<8x64xf32>
    %132 = math.exp %131 : vector<8x64xf32>
    %cst_71 = arith.constant 1.000000e+00 : f32
    %133 = vector.broadcast %cst_71 : f32 to vector<8x64xf32>
    %134 = arith.addf %133, %132 : vector<8x64xf32>
    %135 = arith.divf %133, %134 : vector<8x64xf32>
    %136 = arith.index_cast %117 : i32 to index
    %c0_72 = arith.constant 0 : index
    %137 = vector.load %arg39[%136, %c0_72] : memref<64x64xf32, #tpu.memory_space<vmem>>, vector<8x64xf32>
    %cst_73 = arith.constant dense<0.000000e+00> : vector<8x64xf32>
    %138 = tpu.matmul %112, %27, %cst_73 {dimension_numbers = #tpu.dot_dimension_numbers<[1], [0], [0], [1], [0, 0, 1, 1], [], []>} : vector<8x64xf32>, vector<64x64xf32>, vector<8x64xf32> -> vector<8x64xf32>
    %139 = arith.addf %137, %138 : vector<8x64xf32>
    %140 = math.tanh %139 : vector<8x64xf32>
    %141 = arith.index_cast %117 : i32 to index
    %c0_74 = arith.constant 0 : index
    %142 = vector.load %arg40[%141, %c0_74] : memref<64x64xf32, #tpu.memory_space<vmem>>, vector<8x64xf32>
    %cst_75 = arith.constant dense<0.000000e+00> : vector<8x64xf32>
    %143 = tpu.matmul %112, %28, %cst_75 {dimension_numbers = #tpu.dot_dimension_numbers<[1], [0], [0], [1], [0, 0, 1, 1], [], []>} : vector<8x64xf32>, vector<64x64xf32>, vector<8x64xf32> -> vector<8x64xf32>
    %144 = arith.addf %142, %143 : vector<8x64xf32>
    %145 = arith.negf %144 : vector<8x64xf32>
    %146 = math.exp %145 : vector<8x64xf32>
    %cst_76 = arith.constant 1.000000e+00 : f32
    %147 = vector.broadcast %cst_76 : f32 to vector<8x64xf32>
    %148 = arith.addf %147, %146 : vector<8x64xf32>
    %149 = arith.divf %147, %148 : vector<8x64xf32>
    %150 = arith.mulf %135, %110 : vector<8x64xf32>
    %151 = arith.mulf %126, %140 : vector<8x64xf32>
    %152 = arith.addf %150, %151 : vector<8x64xf32>
    %153 = math.tanh %152 : vector<8x64xf32>
    %154 = arith.mulf %149, %153 : vector<8x64xf32>
    %155 = arith.index_cast %117 : i32 to index
    %c0_77 = arith.constant 0 : index
    %156 = vector.load %arg41[%155, %c0_77] : memref<64x64xf32, #tpu.memory_space<vmem>>, vector<8x64xf32>
    tpu.vector_store %arg41[%155, %c0_77], %154 {strides = array<i32>} : memref<64x64xf32, #tpu.memory_space<vmem>>, vector<8x64xf32>,
    %c3_i32 = arith.constant 3 : i32
    %c7_i32_78 = arith.constant 7 : i32
    %157 = arith.subi %c7_i32_78, %c3_i32 : i32
    %c8_i32_79 = arith.constant 8 : i32
    %158 = arith.muli %157, %c8_i32_79 : i32
    %159 = tpu.assume_multiple %158, 8 : i32
    %160 = arith.index_cast %159 : i32 to index
    %c0_80 = arith.constant 0 : index
    %161 = vector.load %arg37[%160, %c0_80] : memref<64x64xf32, #tpu.memory_space<vmem>>, vector<8x64xf32>
    %cst_81 = arith.constant dense<0.000000e+00> : vector<8x64xf32>
    %162 = tpu.matmul %154, %25, %cst_81 {dimension_numbers = #tpu.dot_dimension_numbers<[1], [0], [0], [1], [0, 0, 1, 1], [], []>} : vector<8x64xf32>, vector<64x64xf32>, vector<8x64xf32> -> vector<8x64xf32>
    %163 = arith.addf %161, %162 : vector<8x64xf32>
    %164 = arith.negf %163 : vector<8x64xf32>
    %165 = math.exp %164 : vector<8x64xf32>
    %cst_82 = arith.constant 1.000000e+00 : f32
    %166 = vector.broadcast %cst_82 : f32 to vector<8x64xf32>
    %167 = arith.addf %166, %165 : vector<8x64xf32>
    %168 = arith.divf %166, %167 : vector<8x64xf32>
    %169 = arith.index_cast %159 : i32 to index
    %c0_83 = arith.constant 0 : index
    %170 = vector.load %arg38[%169, %c0_83] : memref<64x64xf32, #tpu.memory_space<vmem>>, vector<8x64xf32>
    %cst_84 = arith.constant dense<0.000000e+00> : vector<8x64xf32>
    %171 = tpu.matmul %154, %26, %cst_84 {dimension_numbers = #tpu.dot_dimension_numbers<[1], [0], [0], [1], [0, 0, 1, 1], [], []>} : vector<8x64xf32>, vector<64x64xf32>, vector<8x64xf32> -> vector<8x64xf32>
    %172 = arith.addf %170, %171 : vector<8x64xf32>
    %173 = arith.negf %172 : vector<8x64xf32>
    %174 = math.exp %173 : vector<8x64xf32>
    %cst_85 = arith.constant 1.000000e+00 : f32
    %175 = vector.broadcast %cst_85 : f32 to vector<8x64xf32>
    %176 = arith.addf %175, %174 : vector<8x64xf32>
    %177 = arith.divf %175, %176 : vector<8x64xf32>
    %178 = arith.index_cast %159 : i32 to index
    %c0_86 = arith.constant 0 : index
    %179 = vector.load %arg39[%178, %c0_86] : memref<64x64xf32, #tpu.memory_space<vmem>>, vector<8x64xf32>
    %cst_87 = arith.constant dense<0.000000e+00> : vector<8x64xf32>
    %180 = tpu.matmul %154, %27, %cst_87 {dimension_numbers = #tpu.dot_dimension_numbers<[1], [0], [0], [1], [0, 0, 1, 1], [], []>} : vector<8x64xf32>, vector<64x64xf32>, vector<8x64xf32> -> vector<8x64xf32>
    %181 = arith.addf %179, %180 : vector<8x64xf32>
    %182 = math.tanh %181 : vector<8x64xf32>
    %183 = arith.index_cast %159 : i32 to index
    %c0_88 = arith.constant 0 : index
    %184 = vector.load %arg40[%183, %c0_88] : memref<64x64xf32, #tpu.memory_space<vmem>>, vector<8x64xf32>
    %cst_89 = arith.constant dense<0.000000e+00> : vector<8x64xf32>
    %185 = tpu.matmul %154, %28, %cst_89 {dimension_numbers = #tpu.dot_dimension_numbers<[1], [0], [0], [1], [0, 0, 1, 1], [], []>} : vector<8x64xf32>, vector<64x64xf32>, vector<8x64xf32> -> vector<8x64xf32>
    %186 = arith.addf %184, %185 : vector<8x64xf32>
    %187 = arith.negf %186 : vector<8x64xf32>
    %188 = math.exp %187 : vector<8x64xf32>
    %cst_90 = arith.constant 1.000000e+00 : f32
    %189 = vector.broadcast %cst_90 : f32 to vector<8x64xf32>
    %190 = arith.addf %189, %188 : vector<8x64xf32>
    %191 = arith.divf %189, %190 : vector<8x64xf32>
    %192 = arith.mulf %177, %152 : vector<8x64xf32>
    %193 = arith.mulf %168, %182 : vector<8x64xf32>
    %194 = arith.addf %192, %193 : vector<8x64xf32>
    %195 = math.tanh %194 : vector<8x64xf32>
    %196 = arith.mulf %191, %195 : vector<8x64xf32>
    %197 = arith.index_cast %159 : i32 to index
    %c0_91 = arith.constant 0 : index
    %198 = vector.load %arg41[%197, %c0_91] : memref<64x64xf32, #tpu.memory_space<vmem>>, vector<8x64xf32>
    tpu.vector_store %arg41[%197, %c0_91], %196 {strides = array<i32>} : memref<64x64xf32, #tpu.memory_space<vmem>>, vector<8x64xf32>,
    %c4_i32 = arith.constant 4 : i32
    %c7_i32_92 = arith.constant 7 : i32
    %199 = arith.subi %c7_i32_92, %c4_i32 : i32
    %c8_i32_93 = arith.constant 8 : i32
    %200 = arith.muli %199, %c8_i32_93 : i32
    %201 = tpu.assume_multiple %200, 8 : i32
    %202 = arith.index_cast %201 : i32 to index
    %c0_94 = arith.constant 0 : index
    %203 = vector.load %arg37[%202, %c0_94] : memref<64x64xf32, #tpu.memory_space<vmem>>, vector<8x64xf32>
    %cst_95 = arith.constant dense<0.000000e+00> : vector<8x64xf32>
    %204 = tpu.matmul %196, %25, %cst_95 {dimension_numbers = #tpu.dot_dimension_numbers<[1], [0], [0], [1], [0, 0, 1, 1], [], []>} : vector<8x64xf32>, vector<64x64xf32>, vector<8x64xf32> -> vector<8x64xf32>
    %205 = arith.addf %203, %204 : vector<8x64xf32>
    %206 = arith.negf %205 : vector<8x64xf32>
    %207 = math.exp %206 : vector<8x64xf32>
    %cst_96 = arith.constant 1.000000e+00 : f32
    %208 = vector.broadcast %cst_96 : f32 to vector<8x64xf32>
    %209 = arith.addf %208, %207 : vector<8x64xf32>
    %210 = arith.divf %208, %209 : vector<8x64xf32>
    %211 = arith.index_cast %201 : i32 to index
    %c0_97 = arith.constant 0 : index
    %212 = vector.load %arg38[%211, %c0_97] : memref<64x64xf32, #tpu.memory_space<vmem>>, vector<8x64xf32>
    %cst_98 = arith.constant dense<0.000000e+00> : vector<8x64xf32>
    %213 = tpu.matmul %196, %26, %cst_98 {dimension_numbers = #tpu.dot_dimension_numbers<[1], [0], [0], [1], [0, 0, 1, 1], [], []>} : vector<8x64xf32>, vector<64x64xf32>, vector<8x64xf32> -> vector<8x64xf32>
    %214 = arith.addf %212, %213 : vector<8x64xf32>
    %215 = arith.negf %214 : vector<8x64xf32>
    %216 = math.exp %215 : vector<8x64xf32>
    %cst_99 = arith.constant 1.000000e+00 : f32
    %217 = vector.broadcast %cst_99 : f32 to vector<8x64xf32>
    %218 = arith.addf %217, %216 : vector<8x64xf32>
    %219 = arith.divf %217, %218 : vector<8x64xf32>
    %220 = arith.index_cast %201 : i32 to index
    %c0_100 = arith.constant 0 : index
    %221 = vector.load %arg39[%220, %c0_100] : memref<64x64xf32, #tpu.memory_space<vmem>>, vector<8x64xf32>
    %cst_101 = arith.constant dense<0.000000e+00> : vector<8x64xf32>
    %222 = tpu.matmul %196, %27, %cst_101 {dimension_numbers = #tpu.dot_dimension_numbers<[1], [0], [0], [1], [0, 0, 1, 1], [], []>} : vector<8x64xf32>, vector<64x64xf32>, vector<8x64xf32> -> vector<8x64xf32>
    %223 = arith.addf %221, %222 : vector<8x64xf32>
    %224 = math.tanh %223 : vector<8x64xf32>
    %225 = arith.index_cast %201 : i32 to index
    %c0_102 = arith.constant 0 : index
    %226 = vector.load %arg40[%225, %c0_102] : memref<64x64xf32, #tpu.memory_space<vmem>>, vector<8x64xf32>
    %cst_103 = arith.constant dense<0.000000e+00> : vector<8x64xf32>
    %227 = tpu.matmul %196, %28, %cst_103 {dimension_numbers = #tpu.dot_dimension_numbers<[1], [0], [0], [1], [0, 0, 1, 1], [], []>} : vector<8x64xf32>, vector<64x64xf32>, vector<8x64xf32> -> vector<8x64xf32>
    %228 = arith.addf %226, %227 : vector<8x64xf32>
    %229 = arith.negf %228 : vector<8x64xf32>
    %230 = math.exp %229 : vector<8x64xf32>
    %cst_104 = arith.constant 1.000000e+00 : f32
    %231 = vector.broadcast %cst_104 : f32 to vector<8x64xf32>
    %232 = arith.addf %231, %230 : vector<8x64xf32>
    %233 = arith.divf %231, %232 : vector<8x64xf32>
    %234 = arith.mulf %219, %194 : vector<8x64xf32>
    %235 = arith.mulf %210, %224 : vector<8x64xf32>
    %236 = arith.addf %234, %235 : vector<8x64xf32>
    %237 = math.tanh %236 : vector<8x64xf32>
    %238 = arith.mulf %233, %237 : vector<8x64xf32>
    %239 = arith.index_cast %201 : i32 to index
    %c0_105 = arith.constant 0 : index
    %240 = vector.load %arg41[%239, %c0_105] : memref<64x64xf32, #tpu.memory_space<vmem>>, vector<8x64xf32>
    tpu.vector_store %arg41[%239, %c0_105], %238 {strides = array<i32>} : memref<64x64xf32, #tpu.memory_space<vmem>>, vector<8x64xf32>,
    %c5_i32 = arith.constant 5 : i32
    %c7_i32_106 = arith.constant 7 : i32
    %241 = arith.subi %c7_i32_106, %c5_i32 : i32
    %c8_i32_107 = arith.constant 8 : i32
    %242 = arith.muli %241, %c8_i32_107 : i32
    %243 = tpu.assume_multiple %242, 8 : i32
    %244 = arith.index_cast %243 : i32 to index
    %c0_108 = arith.constant 0 : index
    %245 = vector.load %arg37[%244, %c0_108] : memref<64x64xf32, #tpu.memory_space<vmem>>, vector<8x64xf32>
    %cst_109 = arith.constant dense<0.000000e+00> : vector<8x64xf32>
    %246 = tpu.matmul %238, %25, %cst_109 {dimension_numbers = #tpu.dot_dimension_numbers<[1], [0], [0], [1], [0, 0, 1, 1], [], []>} : vector<8x64xf32>, vector<64x64xf32>, vector<8x64xf32> -> vector<8x64xf32>
    %247 = arith.addf %245, %246 : vector<8x64xf32>
    %248 = arith.negf %247 : vector<8x64xf32>
    %249 = math.exp %248 : vector<8x64xf32>
    %cst_110 = arith.constant 1.000000e+00 : f32
    %250 = vector.broadcast %cst_110 : f32 to vector<8x64xf32>
    %251 = arith.addf %250, %249 : vector<8x64xf32>
    %252 = arith.divf %250, %251 : vector<8x64xf32>
    %253 = arith.index_cast %243 : i32 to index
    %c0_111 = arith.constant 0 : index
    %254 = vector.load %arg38[%253, %c0_111] : memref<64x64xf32, #tpu.memory_space<vmem>>, vector<8x64xf32>
    %cst_112 = arith.constant dense<0.000000e+00> : vector<8x64xf32>
    %255 = tpu.matmul %238, %26, %cst_112 {dimension_numbers = #tpu.dot_dimension_numbers<[1], [0], [0], [1], [0, 0, 1, 1], [], []>} : vector<8x64xf32>, vector<64x64xf32>, vector<8x64xf32> -> vector<8x64xf32>
    %256 = arith.addf %254, %255 : vector<8x64xf32>
    %257 = arith.negf %256 : vector<8x64xf32>
    %258 = math.exp %257 : vector<8x64xf32>
    %cst_113 = arith.constant 1.000000e+00 : f32
    %259 = vector.broadcast %cst_113 : f32 to vector<8x64xf32>
    %260 = arith.addf %259, %258 : vector<8x64xf32>
    %261 = arith.divf %259, %260 : vector<8x64xf32>
    %262 = arith.index_cast %243 : i32 to index
    %c0_114 = arith.constant 0 : index
    %263 = vector.load %arg39[%262, %c0_114] : memref<64x64xf32, #tpu.memory_space<vmem>>, vector<8x64xf32>
    %cst_115 = arith.constant dense<0.000000e+00> : vector<8x64xf32>
    %264 = tpu.matmul %238, %27, %cst_115 {dimension_numbers = #tpu.dot_dimension_numbers<[1], [0], [0], [1], [0, 0, 1, 1], [], []>} : vector<8x64xf32>, vector<64x64xf32>, vector<8x64xf32> -> vector<8x64xf32>
    %265 = arith.addf %263, %264 : vector<8x64xf32>
    %266 = math.tanh %265 : vector<8x64xf32>
    %267 = arith.index_cast %243 : i32 to index
    %c0_116 = arith.constant 0 : index
    %268 = vector.load %arg40[%267, %c0_116] : memref<64x64xf32, #tpu.memory_space<vmem>>, vector<8x64xf32>
    %cst_117 = arith.constant dense<0.000000e+00> : vector<8x64xf32>
    %269 = tpu.matmul %238, %28, %cst_117 {dimension_numbers = #tpu.dot_dimension_numbers<[1], [0], [0], [1], [0, 0, 1, 1], [], []>} : vector<8x64xf32>, vector<64x64xf32>, vector<8x64xf32> -> vector<8x64xf32>
    %270 = arith.addf %268, %269 : vector<8x64xf32>
    %271 = arith.negf %270 : vector<8x64xf32>
    %272 = math.exp %271 : vector<8x64xf32>
    %cst_118 = arith.constant 1.000000e+00 : f32
    %273 = vector.broadcast %cst_118 : f32 to vector<8x64xf32>
    %274 = arith.addf %273, %272 : vector<8x64xf32>
    %275 = arith.divf %273, %274 : vector<8x64xf32>
    %276 = arith.mulf %261, %236 : vector<8x64xf32>
    %277 = arith.mulf %252, %266 : vector<8x64xf32>
    %278 = arith.addf %276, %277 : vector<8x64xf32>
    %279 = math.tanh %278 : vector<8x64xf32>
    %280 = arith.mulf %275, %279 : vector<8x64xf32>
    %281 = arith.index_cast %243 : i32 to index
    %c0_119 = arith.constant 0 : index
    %282 = vector.load %arg41[%281, %c0_119] : memref<64x64xf32, #tpu.memory_space<vmem>>, vector<8x64xf32>
    tpu.vector_store %arg41[%281, %c0_119], %280 {strides = array<i32>} : memref<64x64xf32, #tpu.memory_space<vmem>>, vector<8x64xf32>,
    %c6_i32 = arith.constant 6 : i32
    %c7_i32_120 = arith.constant 7 : i32
    %283 = arith.subi %c7_i32_120, %c6_i32 : i32
    %c8_i32_121 = arith.constant 8 : i32
    %284 = arith.muli %283, %c8_i32_121 : i32
    %285 = tpu.assume_multiple %284, 8 : i32
    %286 = arith.index_cast %285 : i32 to index
    %c0_122 = arith.constant 0 : index
    %287 = vector.load %arg37[%286, %c0_122] : memref<64x64xf32, #tpu.memory_space<vmem>>, vector<8x64xf32>
    %cst_123 = arith.constant dense<0.000000e+00> : vector<8x64xf32>
    %288 = tpu.matmul %280, %25, %cst_123 {dimension_numbers = #tpu.dot_dimension_numbers<[1], [0], [0], [1], [0, 0, 1, 1], [], []>} : vector<8x64xf32>, vector<64x64xf32>, vector<8x64xf32> -> vector<8x64xf32>
    %289 = arith.addf %287, %288 : vector<8x64xf32>
    %290 = arith.negf %289 : vector<8x64xf32>
    %291 = math.exp %290 : vector<8x64xf32>
    %cst_124 = arith.constant 1.000000e+00 : f32
    %292 = vector.broadcast %cst_124 : f32 to vector<8x64xf32>
    %293 = arith.addf %292, %291 : vector<8x64xf32>
    %294 = arith.divf %292, %293 : vector<8x64xf32>
    %295 = arith.index_cast %285 : i32 to index
    %c0_125 = arith.constant 0 : index
    %296 = vector.load %arg38[%295, %c0_125] : memref<64x64xf32, #tpu.memory_space<vmem>>, vector<8x64xf32>
    %cst_126 = arith.constant dense<0.000000e+00> : vector<8x64xf32>
    %297 = tpu.matmul %280, %26, %cst_126 {dimension_numbers = #tpu.dot_dimension_numbers<[1], [0], [0], [1], [0, 0, 1, 1], [], []>} : vector<8x64xf32>, vector<64x64xf32>, vector<8x64xf32> -> vector<8x64xf32>
    %298 = arith.addf %296, %297 : vector<8x64xf32>
    %299 = arith.negf %298 : vector<8x64xf32>
    %300 = math.exp %299 : vector<8x64xf32>
    %cst_127 = arith.constant 1.000000e+00 : f32
    %301 = vector.broadcast %cst_127 : f32 to vector<8x64xf32>
    %302 = arith.addf %301, %300 : vector<8x64xf32>
    %303 = arith.divf %301, %302 : vector<8x64xf32>
    %304 = arith.index_cast %285 : i32 to index
    %c0_128 = arith.constant 0 : index
    %305 = vector.load %arg39[%304, %c0_128] : memref<64x64xf32, #tpu.memory_space<vmem>>, vector<8x64xf32>
    %cst_129 = arith.constant dense<0.000000e+00> : vector<8x64xf32>
    %306 = tpu.matmul %280, %27, %cst_129 {dimension_numbers = #tpu.dot_dimension_numbers<[1], [0], [0], [1], [0, 0, 1, 1], [], []>} : vector<8x64xf32>, vector<64x64xf32>, vector<8x64xf32> -> vector<8x64xf32>
    %307 = arith.addf %305, %306 : vector<8x64xf32>
    %308 = math.tanh %307 : vector<8x64xf32>
    %309 = arith.index_cast %285 : i32 to index
    %c0_130 = arith.constant 0 : index
    %310 = vector.load %arg40[%309, %c0_130] : memref<64x64xf32, #tpu.memory_space<vmem>>, vector<8x64xf32>
    %cst_131 = arith.constant dense<0.000000e+00> : vector<8x64xf32>
    %311 = tpu.matmul %280, %28, %cst_131 {dimension_numbers = #tpu.dot_dimension_numbers<[1], [0], [0], [1], [0, 0, 1, 1], [], []>} : vector<8x64xf32>, vector<64x64xf32>, vector<8x64xf32> -> vector<8x64xf32>
    %312 = arith.addf %310, %311 : vector<8x64xf32>
    %313 = arith.negf %312 : vector<8x64xf32>
    %314 = math.exp %313 : vector<8x64xf32>
    %cst_132 = arith.constant 1.000000e+00 : f32
    %315 = vector.broadcast %cst_132 : f32 to vector<8x64xf32>
    %316 = arith.addf %315, %314 : vector<8x64xf32>
    %317 = arith.divf %315, %316 : vector<8x64xf32>
    %318 = arith.mulf %303, %278 : vector<8x64xf32>
    %319 = arith.mulf %294, %308 : vector<8x64xf32>
    %320 = arith.addf %318, %319 : vector<8x64xf32>
    %321 = math.tanh %320 : vector<8x64xf32>
    %322 = arith.mulf %317, %321 : vector<8x64xf32>
    %323 = arith.index_cast %285 : i32 to index
    %c0_133 = arith.constant 0 : index
    %324 = vector.load %arg41[%323, %c0_133] : memref<64x64xf32, #tpu.memory_space<vmem>>, vector<8x64xf32>
    tpu.vector_store %arg41[%323, %c0_133], %322 {strides = array<i32>} : memref<64x64xf32, #tpu.memory_space<vmem>>, vector<8x64xf32>,
    %c7_i32_134 = arith.constant 7 : i32
    %c7_i32_135 = arith.constant 7 : i32
    %325 = arith.subi %c7_i32_135, %c7_i32_134 : i32
    %c8_i32_136 = arith.constant 8 : i32
    %326 = arith.muli %325, %c8_i32_136 : i32
    %327 = tpu.assume_multiple %326, 8 : i32
    %328 = arith.index_cast %327 : i32 to index
    %c0_137 = arith.constant 0 : index
    %329 = vector.load %arg37[%328, %c0_137] : memref<64x64xf32, #tpu.memory_space<vmem>>, vector<8x64xf32>
    %cst_138 = arith.constant dense<0.000000e+00> : vector<8x64xf32>
    %330 = tpu.matmul %322, %25, %cst_138 {dimension_numbers = #tpu.dot_dimension_numbers<[1], [0], [0], [1], [0, 0, 1, 1], [], []>} : vector<8x64xf32>, vector<64x64xf32>, vector<8x64xf32> -> vector<8x64xf32>
    %331 = arith.addf %329, %330 : vector<8x64xf32>
    %332 = arith.negf %331 : vector<8x64xf32>
    %333 = math.exp %332 : vector<8x64xf32>
    %cst_139 = arith.constant 1.000000e+00 : f32
    %334 = vector.broadcast %cst_139 : f32 to vector<8x64xf32>
    %335 = arith.addf %334, %333 : vector<8x64xf32>
    %336 = arith.divf %334, %335 : vector<8x64xf32>
    %337 = arith.index_cast %327 : i32 to index
    %c0_140 = arith.constant 0 : index
    %338 = vector.load %arg38[%337, %c0_140] : memref<64x64xf32, #tpu.memory_space<vmem>>, vector<8x64xf32>
    %cst_141 = arith.constant dense<0.000000e+00> : vector<8x64xf32>
    %339 = tpu.matmul %322, %26, %cst_141 {dimension_numbers = #tpu.dot_dimension_numbers<[1], [0], [0], [1], [0, 0, 1, 1], [], []>} : vector<8x64xf32>, vector<64x64xf32>, vector<8x64xf32> -> vector<8x64xf32>
    %340 = arith.addf %338, %339 : vector<8x64xf32>
    %341 = arith.negf %340 : vector<8x64xf32>
    %342 = math.exp %341 : vector<8x64xf32>
    %cst_142 = arith.constant 1.000000e+00 : f32
    %343 = vector.broadcast %cst_142 : f32 to vector<8x64xf32>
    %344 = arith.addf %343, %342 : vector<8x64xf32>
    %345 = arith.divf %343, %344 : vector<8x64xf32>
    %346 = arith.index_cast %327 : i32 to index
    %c0_143 = arith.constant 0 : index
    %347 = vector.load %arg39[%346, %c0_143] : memref<64x64xf32, #tpu.memory_space<vmem>>, vector<8x64xf32>
    %cst_144 = arith.constant dense<0.000000e+00> : vector<8x64xf32>
    %348 = tpu.matmul %322, %27, %cst_144 {dimension_numbers = #tpu.dot_dimension_numbers<[1], [0], [0], [1], [0, 0, 1, 1], [], []>} : vector<8x64xf32>, vector<64x64xf32>, vector<8x64xf32> -> vector<8x64xf32>
    %349 = arith.addf %347, %348 : vector<8x64xf32>
    %350 = math.tanh %349 : vector<8x64xf32>
    %351 = arith.index_cast %327 : i32 to index
    %c0_145 = arith.constant 0 : index
    %352 = vector.load %arg40[%351, %c0_145] : memref<64x64xf32, #tpu.memory_space<vmem>>, vector<8x64xf32>
    %cst_146 = arith.constant dense<0.000000e+00> : vector<8x64xf32>
    %353 = tpu.matmul %322, %28, %cst_146 {dimension_numbers = #tpu.dot_dimension_numbers<[1], [0], [0], [1], [0, 0, 1, 1], [], []>} : vector<8x64xf32>, vector<64x64xf32>, vector<8x64xf32> -> vector<8x64xf32>
    %354 = arith.addf %352, %353 : vector<8x64xf32>
    %355 = arith.negf %354 : vector<8x64xf32>
    %356 = math.exp %355 : vector<8x64xf32>
    %cst_147 = arith.constant 1.000000e+00 : f32
    %357 = vector.broadcast %cst_147 : f32 to vector<8x64xf32>
    %358 = arith.addf %357, %356 : vector<8x64xf32>
    %359 = arith.divf %357, %358 : vector<8x64xf32>
    %360 = arith.mulf %345, %320 : vector<8x64xf32>
    %361 = arith.mulf %336, %350 : vector<8x64xf32>
    %362 = arith.addf %360, %361 : vector<8x64xf32>
    %363 = math.tanh %362 : vector<8x64xf32>
    %364 = arith.mulf %359, %363 : vector<8x64xf32>
    %365 = arith.index_cast %327 : i32 to index
    %c0_148 = arith.constant 0 : index
    %366 = vector.load %arg41[%365, %c0_148] : memref<64x64xf32, #tpu.memory_space<vmem>>, vector<8x64xf32>
    tpu.vector_store %arg41[%365, %c0_148], %364 {strides = array<i32>} : memref<64x64xf32, #tpu.memory_space<vmem>>, vector<8x64xf32>,
    %c8_i32_149 = arith.constant 8 : i32
    %c0_150 = arith.constant 0 : index
    %c0_151 = arith.constant 0 : index
    %367 = vector.load %arg41[%c0_150, %c0_151] : memref<64x64xf32, #tpu.memory_space<vmem>>, vector<64x64xf32>
    %c0_152 = arith.constant 0 : index
    %c0_153 = arith.constant 0 : index
    %368 = vector.load %arg15[%c0_152, %c0_153] : memref<64x64xf32, #tpu.memory_space<vmem>>, vector<64x64xf32>
    %cst_154 = arith.constant dense<0.000000e+00> : vector<64x64xf32>
    %369 = tpu.matmul %367, %368, %cst_154 {dimension_numbers = #tpu.dot_dimension_numbers<[1], [0], [0], [1], [0, 0, 1, 1], [], []>} : vector<64x64xf32>, vector<64x64xf32>, vector<64x64xf32> -> vector<64x64xf32>
    %cst_155 = arith.constant 5.000000e-01 : f32
    %370 = vector.broadcast %cst_155 : f32 to vector<64x64xf32>
    %371 = arith.mulf %370, %369 : vector<64x64xf32>
    %c0_156 = arith.constant 0 : index
    %c0_157 = arith.constant 0 : index
    %372 = vector.load %arg16[%c0_156, %c0_157] : memref<1x64xf32, #tpu.memory_space<vmem>>, vector<1x64xf32>
    %373 = vector.broadcast %372 : vector<1x64xf32> to vector<64x64xf32>
    %374 = arith.addf %371, %373 : vector<64x64xf32>
    %c0_158 = arith.constant 0 : index
    %c0_159 = arith.constant 0 : index
    %375 = vector.load %arg42[%c0_158, %c0_159] : memref<64x64xf32, #tpu.memory_space<vmem>>, vector<64x64xf32>
    tpu.vector_store %arg42[%c0_158, %c0_159], %374 {strides = array<i32>} : memref<64x64xf32, #tpu.memory_space<vmem>>, vector<64x64xf32>,
    %c0_160 = arith.constant 0 : index
    %c0_161 = arith.constant 0 : index
    %376 = vector.load %arg14[%c0_160, %c0_161] : memref<16x64xf32, #tpu.memory_space<vmem>>, vector<16x64xf32>
    %c0_162 = arith.constant 0 : index
    %c0_163 = arith.constant 0 : index
    %377 = vector.load %arg17[%c0_162, %c0_163] : memref<64x128xf32, #tpu.memory_space<vmem>>, vector<64x128xf32>
    %c0_164 = arith.constant 0 : index
    %c0_165 = arith.constant 0 : index
    %378 = vector.load %arg18[%c0_164, %c0_165] : memref<1x128xf32, #tpu.memory_space<vmem>>, vector<1x128xf32>
    %c0_166 = arith.constant 0 : index
    %c0_167 = arith.constant 0 : index
    %379 = vector.load %arg19[%c0_166, %c0_167] : memref<128x64xf32, #tpu.memory_space<vmem>>, vector<128x64xf32>
    %c0_168 = arith.constant 0 : index
    %c0_169 = arith.constant 0 : index
    %380 = vector.load %arg20[%c0_168, %c0_169] : memref<1x64xf32, #tpu.memory_space<vmem>>, vector<1x64xf32>
    %c0_170 = arith.constant 0 : index
    %c0_171 = arith.constant 0 : index
    %381 = vector.load %arg21[%c0_170, %c0_171] : memref<64x16xf32, #tpu.memory_space<vmem>>, vector<64x16xf32>
    %c0_172 = arith.constant 0 : index
    %c0_173 = arith.constant 0 : index
    %382 = vector.load %arg22[%c0_172, %c0_173] : memref<1x16xf32, #tpu.memory_space<vmem>>, vector<1x16xf32>
    %c0_174 = arith.constant 0 : index
    %c0_175 = arith.constant 0 : index
    %383 = vector.load %arg23[%c0_174, %c0_175] : memref<64x16xf32, #tpu.memory_space<vmem>>, vector<64x16xf32>
    %c0_176 = arith.constant 0 : index
    %c0_177 = arith.constant 0 : index
    %384 = vector.load %arg24[%c0_176, %c0_177] : memref<1x16xf32, #tpu.memory_space<vmem>>, vector<1x16xf32>
    %cst_178 = arith.constant 0.000000e+00 : f32
    %385 = vector.broadcast %cst_178 : f32 to vector<8x16xf32>
    %c0_i32_179 = arith.constant 0 : i32
    %c8_i32_180 = arith.constant 8 : i32
    %386 = arith.muli %c0_i32_179, %c8_i32_180 : i32
    %387 = tpu.assume_multiple %386, 8 : i32
    %388 = arith.index_cast %387 : i32 to index
    %c0_181 = arith.constant 0 : index
    %389 = vector.load %arg43[%388, %c0_181] : memref<64x16xf32, #tpu.memory_space<vmem>>, vector<8x16xf32>
    tpu.vector_store %arg43[%388, %c0_181], %385 {strides = array<i32>} : memref<64x16xf32, #tpu.memory_space<vmem>>, vector<8x16xf32>,
    %cst_182 = arith.constant dense<0.000000e+00> : vector<8x64xf32>
    %390 = tpu.matmul %385, %376, %cst_182 {dimension_numbers = #tpu.dot_dimension_numbers<[1], [0], [0], [1], [0, 0, 1, 1], [], []>} : vector<8x16xf32>, vector<16x64xf32>, vector<8x64xf32> -> vector<8x64xf32>
    %cst_183 = arith.constant 5.000000e-01 : f32
    %391 = vector.broadcast %cst_183 : f32 to vector<8x64xf32>
    %392 = arith.mulf %391, %390 : vector<8x64xf32>
    %393 = arith.index_cast %387 : i32 to index
    %c0_184 = arith.constant 0 : index
    %394 = vector.load %arg42[%393, %c0_184] : memref<64x64xf32, #tpu.memory_space<vmem>>, vector<8x64xf32>
    %395 = arith.addf %392, %394 : vector<8x64xf32>
    %396 = math.tanh %395 : vector<8x64xf32>
    %cst_185 = arith.constant dense<0.000000e+00> : vector<8x128xf32>
    %397 = tpu.matmul %396, %377, %cst_185 {dimension_numbers = #tpu.dot_dimension_numbers<[1], [0], [0], [1], [0, 0, 1, 1], [], []>} : vector<8x64xf32>, vector<64x128xf32>, vector<8x128xf32> -> vector<8x128xf32>
    %398 = vector.broadcast %378 : vector<1x128xf32> to vector<8x128xf32>
    %399 = arith.addf %397, %398 : vector<8x128xf32>
    %400 = math.tanh %399 : vector<8x128xf32>
    %cst_186 = arith.constant dense<0.000000e+00> : vector<8x64xf32>
    %401 = tpu.matmul %400, %379, %cst_186 {dimension_numbers = #tpu.dot_dimension_numbers<[1], [0], [0], [1], [0, 0, 1, 1], [], []>} : vector<8x128xf32>, vector<128x64xf32>, vector<8x64xf32> -> vector<8x64xf32>
    %402 = vector.broadcast %380 : vector<1x64xf32> to vector<8x64xf32>
    %403 = arith.addf %401, %402 : vector<8x64xf32>
    %404 = math.tanh %403 : vector<8x64xf32>
    %cst_187 = arith.constant dense<0.000000e+00> : vector<8x16xf32>
    %405 = tpu.matmul %404, %381, %cst_187 {dimension_numbers = #tpu.dot_dimension_numbers<[1], [0], [0], [1], [0, 0, 1, 1], [], []>} : vector<8x64xf32>, vector<64x16xf32>, vector<8x16xf32> -> vector<8x16xf32>
    %406 = vector.broadcast %382 : vector<1x16xf32> to vector<8x16xf32>
    %407 = arith.addf %405, %406 : vector<8x16xf32>
    %cst_188 = arith.constant dense<0.000000e+00> : vector<8x16xf32>
    %408 = tpu.matmul %404, %383, %cst_188 {dimension_numbers = #tpu.dot_dimension_numbers<[1], [0], [0], [1], [0, 0, 1, 1], [], []>} : vector<8x64xf32>, vector<64x16xf32>, vector<8x16xf32> -> vector<8x16xf32>
    %409 = vector.broadcast %384 : vector<1x16xf32> to vector<8x16xf32>
    %410 = arith.addf %408, %409 : vector<8x16xf32>
    %411 = arith.index_cast %387 : i32 to index
    %c0_189 = arith.constant 0 : index
    %412 = vector.load %arg33[%411, %c0_189] : memref<64x16xf32, #tpu.memory_space<vmem>>, vector<8x16xf32>
    tpu.vector_store %arg33[%411, %c0_189], %407 {strides = array<i32>} : memref<64x16xf32, #tpu.memory_space<vmem>>, vector<8x16xf32>,
    %413 = arith.index_cast %387 : i32 to index
    %c0_190 = arith.constant 0 : index
    %414 = vector.load %arg34[%413, %c0_190] : memref<64x16xf32, #tpu.memory_space<vmem>>, vector<8x16xf32>
    tpu.vector_store %arg34[%413, %c0_190], %410 {strides = array<i32>} : memref<64x16xf32, #tpu.memory_space<vmem>>, vector<8x16xf32>,
    %415 = arith.index_cast %387 : i32 to index
    %c0_191 = arith.constant 0 : index
    %416 = vector.load %arg1[%415, %c0_191] : memref<64x16xf32, #tpu.memory_space<vmem>>, vector<8x16xf32>
    %cst_192 = arith.constant 5.000000e-01 : f32
    %417 = vector.broadcast %cst_192 : f32 to vector<8x16xf32>
    %418 = arith.mulf %417, %410 : vector<8x16xf32>
    %419 = math.exp %418 : vector<8x16xf32>
    %420 = arith.mulf %416, %419 : vector<8x16xf32>
    %421 = arith.addf %407, %420 : vector<8x16xf32>
    %422 = arith.index_cast %387 : i32 to index
    %c0_193 = arith.constant 0 : index
    %423 = vector.load %arg44[%422, %c0_193] : memref<64x16xf32, #tpu.memory_space<vmem>>, vector<8x16xf32>
    tpu.vector_store %arg44[%422, %c0_193], %421 {strides = array<i32>} : memref<64x16xf32, #tpu.memory_space<vmem>>, vector<8x16xf32>,
    %c1_i32_194 = arith.constant 1 : i32
    %c8_i32_195 = arith.constant 8 : i32
    %424 = arith.muli %c1_i32_194, %c8_i32_195 : i32
    %425 = tpu.assume_multiple %424, 8 : i32
    %426 = arith.index_cast %425 : i32 to index
    %c0_196 = arith.constant 0 : index
    %427 = vector.load %arg43[%426, %c0_196] : memref<64x16xf32, #tpu.memory_space<vmem>>, vector<8x16xf32>
    tpu.vector_store %arg43[%426, %c0_196], %421 {strides = array<i32>} : memref<64x16xf32, #tpu.memory_space<vmem>>, vector<8x16xf32>,
    %cst_197 = arith.constant dense<0.000000e+00> : vector<8x64xf32>
    %428 = tpu.matmul %421, %376, %cst_197 {dimension_numbers = #tpu.dot_dimension_numbers<[1], [0], [0], [1], [0, 0, 1, 1], [], []>} : vector<8x16xf32>, vector<16x64xf32>, vector<8x64xf32> -> vector<8x64xf32>
    %cst_198 = arith.constant 5.000000e-01 : f32
    %429 = vector.broadcast %cst_198 : f32 to vector<8x64xf32>
    %430 = arith.mulf %429, %428 : vector<8x64xf32>
    %431 = arith.index_cast %425 : i32 to index
    %c0_199 = arith.constant 0 : index
    %432 = vector.load %arg42[%431, %c0_199] : memref<64x64xf32, #tpu.memory_space<vmem>>, vector<8x64xf32>
    %433 = arith.addf %430, %432 : vector<8x64xf32>
    %434 = math.tanh %433 : vector<8x64xf32>
    %cst_200 = arith.constant dense<0.000000e+00> : vector<8x128xf32>
    %435 = tpu.matmul %434, %377, %cst_200 {dimension_numbers = #tpu.dot_dimension_numbers<[1], [0], [0], [1], [0, 0, 1, 1], [], []>} : vector<8x64xf32>, vector<64x128xf32>, vector<8x128xf32> -> vector<8x128xf32>
    %436 = vector.broadcast %378 : vector<1x128xf32> to vector<8x128xf32>
    %437 = arith.addf %435, %436 : vector<8x128xf32>
    %438 = math.tanh %437 : vector<8x128xf32>
    %cst_201 = arith.constant dense<0.000000e+00> : vector<8x64xf32>
    %439 = tpu.matmul %438, %379, %cst_201 {dimension_numbers = #tpu.dot_dimension_numbers<[1], [0], [0], [1], [0, 0, 1, 1], [], []>} : vector<8x128xf32>, vector<128x64xf32>, vector<8x64xf32> -> vector<8x64xf32>
    %440 = vector.broadcast %380 : vector<1x64xf32> to vector<8x64xf32>
    %441 = arith.addf %439, %440 : vector<8x64xf32>
    %442 = math.tanh %441 : vector<8x64xf32>
    %cst_202 = arith.constant dense<0.000000e+00> : vector<8x16xf32>
    %443 = tpu.matmul %442, %381, %cst_202 {dimension_numbers = #tpu.dot_dimension_numbers<[1], [0], [0], [1], [0, 0, 1, 1], [], []>} : vector<8x64xf32>, vector<64x16xf32>, vector<8x16xf32> -> vector<8x16xf32>
    %444 = vector.broadcast %382 : vector<1x16xf32> to vector<8x16xf32>
    %445 = arith.addf %443, %444 : vector<8x16xf32>
    %cst_203 = arith.constant dense<0.000000e+00> : vector<8x16xf32>
    %446 = tpu.matmul %442, %383, %cst_203 {dimension_numbers = #tpu.dot_dimension_numbers<[1], [0], [0], [1], [0, 0, 1, 1], [], []>} : vector<8x64xf32>, vector<64x16xf32>, vector<8x16xf32> -> vector<8x16xf32>
    %447 = vector.broadcast %384 : vector<1x16xf32> to vector<8x16xf32>
    %448 = arith.addf %446, %447 : vector<8x16xf32>
    %449 = arith.index_cast %425 : i32 to index
    %c0_204 = arith.constant 0 : index
    %450 = vector.load %arg33[%449, %c0_204] : memref<64x16xf32, #tpu.memory_space<vmem>>, vector<8x16xf32>
    tpu.vector_store %arg33[%449, %c0_204], %445 {strides = array<i32>} : memref<64x16xf32, #tpu.memory_space<vmem>>, vector<8x16xf32>,
    %451 = arith.index_cast %425 : i32 to index
    %c0_205 = arith.constant 0 : index
    %452 = vector.load %arg34[%451, %c0_205] : memref<64x16xf32, #tpu.memory_space<vmem>>, vector<8x16xf32>
    tpu.vector_store %arg34[%451, %c0_205], %448 {strides = array<i32>} : memref<64x16xf32, #tpu.memory_space<vmem>>, vector<8x16xf32>,
    %453 = arith.index_cast %425 : i32 to index
    %c0_206 = arith.constant 0 : index
    %454 = vector.load %arg1[%453, %c0_206] : memref<64x16xf32, #tpu.memory_space<vmem>>, vector<8x16xf32>
    %cst_207 = arith.constant 5.000000e-01 : f32
    %455 = vector.broadcast %cst_207 : f32 to vector<8x16xf32>
    %456 = arith.mulf %455, %448 : vector<8x16xf32>
    %457 = math.exp %456 : vector<8x16xf32>
    %458 = arith.mulf %454, %457 : vector<8x16xf32>
    %459 = arith.addf %445, %458 : vector<8x16xf32>
    %460 = arith.index_cast %425 : i32 to index
    %c0_208 = arith.constant 0 : index
    %461 = vector.load %arg44[%460, %c0_208] : memref<64x16xf32, #tpu.memory_space<vmem>>, vector<8x16xf32>
    tpu.vector_store %arg44[%460, %c0_208], %459 {strides = array<i32>} : memref<64x16xf32, #tpu.memory_space<vmem>>, vector<8x16xf32>,
    %c2_i32_209 = arith.constant 2 : i32
    %c8_i32_210 = arith.constant 8 : i32
    %462 = arith.muli %c2_i32_209, %c8_i32_210 : i32
    %463 = tpu.assume_multiple %462, 8 : i32
    %464 = arith.index_cast %463 : i32 to index
    %c0_211 = arith.constant 0 : index
    %465 = vector.load %arg43[%464, %c0_211] : memref<64x16xf32, #tpu.memory_space<vmem>>, vector<8x16xf32>
    tpu.vector_store %arg43[%464, %c0_211], %459 {strides = array<i32>} : memref<64x16xf32, #tpu.memory_space<vmem>>, vector<8x16xf32>,
    %cst_212 = arith.constant dense<0.000000e+00> : vector<8x64xf32>
    %466 = tpu.matmul %459, %376, %cst_212 {dimension_numbers = #tpu.dot_dimension_numbers<[1], [0], [0], [1], [0, 0, 1, 1], [], []>} : vector<8x16xf32>, vector<16x64xf32>, vector<8x64xf32> -> vector<8x64xf32>
    %cst_213 = arith.constant 5.000000e-01 : f32
    %467 = vector.broadcast %cst_213 : f32 to vector<8x64xf32>
    %468 = arith.mulf %467, %466 : vector<8x64xf32>
    %469 = arith.index_cast %463 : i32 to index
    %c0_214 = arith.constant 0 : index
    %470 = vector.load %arg42[%469, %c0_214] : memref<64x64xf32, #tpu.memory_space<vmem>>, vector<8x64xf32>
    %471 = arith.addf %468, %470 : vector<8x64xf32>
    %472 = math.tanh %471 : vector<8x64xf32>
    %cst_215 = arith.constant dense<0.000000e+00> : vector<8x128xf32>
    %473 = tpu.matmul %472, %377, %cst_215 {dimension_numbers = #tpu.dot_dimension_numbers<[1], [0], [0], [1], [0, 0, 1, 1], [], []>} : vector<8x64xf32>, vector<64x128xf32>, vector<8x128xf32> -> vector<8x128xf32>
    %474 = vector.broadcast %378 : vector<1x128xf32> to vector<8x128xf32>
    %475 = arith.addf %473, %474 : vector<8x128xf32>
    %476 = math.tanh %475 : vector<8x128xf32>
    %cst_216 = arith.constant dense<0.000000e+00> : vector<8x64xf32>
    %477 = tpu.matmul %476, %379, %cst_216 {dimension_numbers = #tpu.dot_dimension_numbers<[1], [0], [0], [1], [0, 0, 1, 1], [], []>} : vector<8x128xf32>, vector<128x64xf32>, vector<8x64xf32> -> vector<8x64xf32>
    %478 = vector.broadcast %380 : vector<1x64xf32> to vector<8x64xf32>
    %479 = arith.addf %477, %478 : vector<8x64xf32>
    %480 = math.tanh %479 : vector<8x64xf32>
    %cst_217 = arith.constant dense<0.000000e+00> : vector<8x16xf32>
    %481 = tpu.matmul %480, %381, %cst_217 {dimension_numbers = #tpu.dot_dimension_numbers<[1], [0], [0], [1], [0, 0, 1, 1], [], []>} : vector<8x64xf32>, vector<64x16xf32>, vector<8x16xf32> -> vector<8x16xf32>
    %482 = vector.broadcast %382 : vector<1x16xf32> to vector<8x16xf32>
    %483 = arith.addf %481, %482 : vector<8x16xf32>
    %cst_218 = arith.constant dense<0.000000e+00> : vector<8x16xf32>
    %484 = tpu.matmul %480, %383, %cst_218 {dimension_numbers = #tpu.dot_dimension_numbers<[1], [0], [0], [1], [0, 0, 1, 1], [], []>} : vector<8x64xf32>, vector<64x16xf32>, vector<8x16xf32> -> vector<8x16xf32>
    %485 = vector.broadcast %384 : vector<1x16xf32> to vector<8x16xf32>
    %486 = arith.addf %484, %485 : vector<8x16xf32>
    %487 = arith.index_cast %463 : i32 to index
    %c0_219 = arith.constant 0 : index
    %488 = vector.load %arg33[%487, %c0_219] : memref<64x16xf32, #tpu.memory_space<vmem>>, vector<8x16xf32>
    tpu.vector_store %arg33[%487, %c0_219], %483 {strides = array<i32>} : memref<64x16xf32, #tpu.memory_space<vmem>>, vector<8x16xf32>,
    %489 = arith.index_cast %463 : i32 to index
    %c0_220 = arith.constant 0 : index
    %490 = vector.load %arg34[%489, %c0_220] : memref<64x16xf32, #tpu.memory_space<vmem>>, vector<8x16xf32>
    tpu.vector_store %arg34[%489, %c0_220], %486 {strides = array<i32>} : memref<64x16xf32, #tpu.memory_space<vmem>>, vector<8x16xf32>,
    %491 = arith.index_cast %463 : i32 to index
    %c0_221 = arith.constant 0 : index
    %492 = vector.load %arg1[%491, %c0_221] : memref<64x16xf32, #tpu.memory_space<vmem>>, vector<8x16xf32>
    %cst_222 = arith.constant 5.000000e-01 : f32
    %493 = vector.broadcast %cst_222 : f32 to vector<8x16xf32>
    %494 = arith.mulf %493, %486 : vector<8x16xf32>
    %495 = math.exp %494 : vector<8x16xf32>
    %496 = arith.mulf %492, %495 : vector<8x16xf32>
    %497 = arith.addf %483, %496 : vector<8x16xf32>
    %498 = arith.index_cast %463 : i32 to index
    %c0_223 = arith.constant 0 : index
    %499 = vector.load %arg44[%498, %c0_223] : memref<64x16xf32, #tpu.memory_space<vmem>>, vector<8x16xf32>
    tpu.vector_store %arg44[%498, %c0_223], %497 {strides = array<i32>} : memref<64x16xf32, #tpu.memory_space<vmem>>, vector<8x16xf32>,
    %c3_i32_224 = arith.constant 3 : i32
    %c8_i32_225 = arith.constant 8 : i32
    %500 = arith.muli %c3_i32_224, %c8_i32_225 : i32
    %501 = tpu.assume_multiple %500, 8 : i32
    %502 = arith.index_cast %501 : i32 to index
    %c0_226 = arith.constant 0 : index
    %503 = vector.load %arg43[%502, %c0_226] : memref<64x16xf32, #tpu.memory_space<vmem>>, vector<8x16xf32>
    tpu.vector_store %arg43[%502, %c0_226], %497 {strides = array<i32>} : memref<64x16xf32, #tpu.memory_space<vmem>>, vector<8x16xf32>,
    %cst_227 = arith.constant dense<0.000000e+00> : vector<8x64xf32>
    %504 = tpu.matmul %497, %376, %cst_227 {dimension_numbers = #tpu.dot_dimension_numbers<[1], [0], [0], [1], [0, 0, 1, 1], [], []>} : vector<8x16xf32>, vector<16x64xf32>, vector<8x64xf32> -> vector<8x64xf32>
    %cst_228 = arith.constant 5.000000e-01 : f32
    %505 = vector.broadcast %cst_228 : f32 to vector<8x64xf32>
    %506 = arith.mulf %505, %504 : vector<8x64xf32>
    %507 = arith.index_cast %501 : i32 to index
    %c0_229 = arith.constant 0 : index
    %508 = vector.load %arg42[%507, %c0_229] : memref<64x64xf32, #tpu.memory_space<vmem>>, vector<8x64xf32>
    %509 = arith.addf %506, %508 : vector<8x64xf32>
    %510 = math.tanh %509 : vector<8x64xf32>
    %cst_230 = arith.constant dense<0.000000e+00> : vector<8x128xf32>
    %511 = tpu.matmul %510, %377, %cst_230 {dimension_numbers = #tpu.dot_dimension_numbers<[1], [0], [0], [1], [0, 0, 1, 1], [], []>} : vector<8x64xf32>, vector<64x128xf32>, vector<8x128xf32> -> vector<8x128xf32>
    %512 = vector.broadcast %378 : vector<1x128xf32> to vector<8x128xf32>
    %513 = arith.addf %511, %512 : vector<8x128xf32>
    %514 = math.tanh %513 : vector<8x128xf32>
    %cst_231 = arith.constant dense<0.000000e+00> : vector<8x64xf32>
    %515 = tpu.matmul %514, %379, %cst_231 {dimension_numbers = #tpu.dot_dimension_numbers<[1], [0], [0], [1], [0, 0, 1, 1], [], []>} : vector<8x128xf32>, vector<128x64xf32>, vector<8x64xf32> -> vector<8x64xf32>
    %516 = vector.broadcast %380 : vector<1x64xf32> to vector<8x64xf32>
    %517 = arith.addf %515, %516 : vector<8x64xf32>
    %518 = math.tanh %517 : vector<8x64xf32>
    %cst_232 = arith.constant dense<0.000000e+00> : vector<8x16xf32>
    %519 = tpu.matmul %518, %381, %cst_232 {dimension_numbers = #tpu.dot_dimension_numbers<[1], [0], [0], [1], [0, 0, 1, 1], [], []>} : vector<8x64xf32>, vector<64x16xf32>, vector<8x16xf32> -> vector<8x16xf32>
    %520 = vector.broadcast %382 : vector<1x16xf32> to vector<8x16xf32>
    %521 = arith.addf %519, %520 : vector<8x16xf32>
    %cst_233 = arith.constant dense<0.000000e+00> : vector<8x16xf32>
    %522 = tpu.matmul %518, %383, %cst_233 {dimension_numbers = #tpu.dot_dimension_numbers<[1], [0], [0], [1], [0, 0, 1, 1], [], []>} : vector<8x64xf32>, vector<64x16xf32>, vector<8x16xf32> -> vector<8x16xf32>
    %523 = vector.broadcast %384 : vector<1x16xf32> to vector<8x16xf32>
    %524 = arith.addf %522, %523 : vector<8x16xf32>
    %525 = arith.index_cast %501 : i32 to index
    %c0_234 = arith.constant 0 : index
    %526 = vector.load %arg33[%525, %c0_234] : memref<64x16xf32, #tpu.memory_space<vmem>>, vector<8x16xf32>
    tpu.vector_store %arg33[%525, %c0_234], %521 {strides = array<i32>} : memref<64x16xf32, #tpu.memory_space<vmem>>, vector<8x16xf32>,
    %527 = arith.index_cast %501 : i32 to index
    %c0_235 = arith.constant 0 : index
    %528 = vector.load %arg34[%527, %c0_235] : memref<64x16xf32, #tpu.memory_space<vmem>>, vector<8x16xf32>
    tpu.vector_store %arg34[%527, %c0_235], %524 {strides = array<i32>} : memref<64x16xf32, #tpu.memory_space<vmem>>, vector<8x16xf32>,
    %529 = arith.index_cast %501 : i32 to index
    %c0_236 = arith.constant 0 : index
    %530 = vector.load %arg1[%529, %c0_236] : memref<64x16xf32, #tpu.memory_space<vmem>>, vector<8x16xf32>
    %cst_237 = arith.constant 5.000000e-01 : f32
    %531 = vector.broadcast %cst_237 : f32 to vector<8x16xf32>
    %532 = arith.mulf %531, %524 : vector<8x16xf32>
    %533 = math.exp %532 : vector<8x16xf32>
    %534 = arith.mulf %530, %533 : vector<8x16xf32>
    %535 = arith.addf %521, %534 : vector<8x16xf32>
    %536 = arith.index_cast %501 : i32 to index
    %c0_238 = arith.constant 0 : index
    %537 = vector.load %arg44[%536, %c0_238] : memref<64x16xf32, #tpu.memory_space<vmem>>, vector<8x16xf32>
    tpu.vector_store %arg44[%536, %c0_238], %535 {strides = array<i32>} : memref<64x16xf32, #tpu.memory_space<vmem>>, vector<8x16xf32>,
    %c4_i32_239 = arith.constant 4 : i32
    %c8_i32_240 = arith.constant 8 : i32
    %538 = arith.muli %c4_i32_239, %c8_i32_240 : i32
    %539 = tpu.assume_multiple %538, 8 : i32
    %540 = arith.index_cast %539 : i32 to index
    %c0_241 = arith.constant 0 : index
    %541 = vector.load %arg43[%540, %c0_241] : memref<64x16xf32, #tpu.memory_space<vmem>>, vector<8x16xf32>
    tpu.vector_store %arg43[%540, %c0_241], %535 {strides = array<i32>} : memref<64x16xf32, #tpu.memory_space<vmem>>, vector<8x16xf32>,
    %cst_242 = arith.constant dense<0.000000e+00> : vector<8x64xf32>
    %542 = tpu.matmul %535, %376, %cst_242 {dimension_numbers = #tpu.dot_dimension_numbers<[1], [0], [0], [1], [0, 0, 1, 1], [], []>} : vector<8x16xf32>, vector<16x64xf32>, vector<8x64xf32> -> vector<8x64xf32>
    %cst_243 = arith.constant 5.000000e-01 : f32
    %543 = vector.broadcast %cst_243 : f32 to vector<8x64xf32>
    %544 = arith.mulf %543, %542 : vector<8x64xf32>
    %545 = arith.index_cast %539 : i32 to index
    %c0_244 = arith.constant 0 : index
    %546 = vector.load %arg42[%545, %c0_244] : memref<64x64xf32, #tpu.memory_space<vmem>>, vector<8x64xf32>
    %547 = arith.addf %544, %546 : vector<8x64xf32>
    %548 = math.tanh %547 : vector<8x64xf32>
    %cst_245 = arith.constant dense<0.000000e+00> : vector<8x128xf32>
    %549 = tpu.matmul %548, %377, %cst_245 {dimension_numbers = #tpu.dot_dimension_numbers<[1], [0], [0], [1], [0, 0, 1, 1], [], []>} : vector<8x64xf32>, vector<64x128xf32>, vector<8x128xf32> -> vector<8x128xf32>
    %550 = vector.broadcast %378 : vector<1x128xf32> to vector<8x128xf32>
    %551 = arith.addf %549, %550 : vector<8x128xf32>
    %552 = math.tanh %551 : vector<8x128xf32>
    %cst_246 = arith.constant dense<0.000000e+00> : vector<8x64xf32>
    %553 = tpu.matmul %552, %379, %cst_246 {dimension_numbers = #tpu.dot_dimension_numbers<[1], [0], [0], [1], [0, 0, 1, 1], [], []>} : vector<8x128xf32>, vector<128x64xf32>, vector<8x64xf32> -> vector<8x64xf32>
    %554 = vector.broadcast %380 : vector<1x64xf32> to vector<8x64xf32>
    %555 = arith.addf %553, %554 : vector<8x64xf32>
    %556 = math.tanh %555 : vector<8x64xf32>
    %cst_247 = arith.constant dense<0.000000e+00> : vector<8x16xf32>
    %557 = tpu.matmul %556, %381, %cst_247 {dimension_numbers = #tpu.dot_dimension_numbers<[1], [0], [0], [1], [0, 0, 1, 1], [], []>} : vector<8x64xf32>, vector<64x16xf32>, vector<8x16xf32> -> vector<8x16xf32>
    %558 = vector.broadcast %382 : vector<1x16xf32> to vector<8x16xf32>
    %559 = arith.addf %557, %558 : vector<8x16xf32>
    %cst_248 = arith.constant dense<0.000000e+00> : vector<8x16xf32>
    %560 = tpu.matmul %556, %383, %cst_248 {dimension_numbers = #tpu.dot_dimension_numbers<[1], [0], [0], [1], [0, 0, 1, 1], [], []>} : vector<8x64xf32>, vector<64x16xf32>, vector<8x16xf32> -> vector<8x16xf32>
    %561 = vector.broadcast %384 : vector<1x16xf32> to vector<8x16xf32>
    %562 = arith.addf %560, %561 : vector<8x16xf32>
    %563 = arith.index_cast %539 : i32 to index
    %c0_249 = arith.constant 0 : index
    %564 = vector.load %arg33[%563, %c0_249] : memref<64x16xf32, #tpu.memory_space<vmem>>, vector<8x16xf32>
    tpu.vector_store %arg33[%563, %c0_249], %559 {strides = array<i32>} : memref<64x16xf32, #tpu.memory_space<vmem>>, vector<8x16xf32>,
    %565 = arith.index_cast %539 : i32 to index
    %c0_250 = arith.constant 0 : index
    %566 = vector.load %arg34[%565, %c0_250] : memref<64x16xf32, #tpu.memory_space<vmem>>, vector<8x16xf32>
    tpu.vector_store %arg34[%565, %c0_250], %562 {strides = array<i32>} : memref<64x16xf32, #tpu.memory_space<vmem>>, vector<8x16xf32>,
    %567 = arith.index_cast %539 : i32 to index
    %c0_251 = arith.constant 0 : index
    %568 = vector.load %arg1[%567, %c0_251] : memref<64x16xf32, #tpu.memory_space<vmem>>, vector<8x16xf32>
    %cst_252 = arith.constant 5.000000e-01 : f32
    %569 = vector.broadcast %cst_252 : f32 to vector<8x16xf32>
    %570 = arith.mulf %569, %562 : vector<8x16xf32>
    %571 = math.exp %570 : vector<8x16xf32>
    %572 = arith.mulf %568, %571 : vector<8x16xf32>
    %573 = arith.addf %559, %572 : vector<8x16xf32>
    %574 = arith.index_cast %539 : i32 to index
    %c0_253 = arith.constant 0 : index
    %575 = vector.load %arg44[%574, %c0_253] : memref<64x16xf32, #tpu.memory_space<vmem>>, vector<8x16xf32>
    tpu.vector_store %arg44[%574, %c0_253], %573 {strides = array<i32>} : memref<64x16xf32, #tpu.memory_space<vmem>>, vector<8x16xf32>,
    %c5_i32_254 = arith.constant 5 : i32
    %c8_i32_255 = arith.constant 8 : i32
    %576 = arith.muli %c5_i32_254, %c8_i32_255 : i32
    %577 = tpu.assume_multiple %576, 8 : i32
    %578 = arith.index_cast %577 : i32 to index
    %c0_256 = arith.constant 0 : index
    %579 = vector.load %arg43[%578, %c0_256] : memref<64x16xf32, #tpu.memory_space<vmem>>, vector<8x16xf32>
    tpu.vector_store %arg43[%578, %c0_256], %573 {strides = array<i32>} : memref<64x16xf32, #tpu.memory_space<vmem>>, vector<8x16xf32>,
    %cst_257 = arith.constant dense<0.000000e+00> : vector<8x64xf32>
    %580 = tpu.matmul %573, %376, %cst_257 {dimension_numbers = #tpu.dot_dimension_numbers<[1], [0], [0], [1], [0, 0, 1, 1], [], []>} : vector<8x16xf32>, vector<16x64xf32>, vector<8x64xf32> -> vector<8x64xf32>
    %cst_258 = arith.constant 5.000000e-01 : f32
    %581 = vector.broadcast %cst_258 : f32 to vector<8x64xf32>
    %582 = arith.mulf %581, %580 : vector<8x64xf32>
    %583 = arith.index_cast %577 : i32 to index
    %c0_259 = arith.constant 0 : index
    %584 = vector.load %arg42[%583, %c0_259] : memref<64x64xf32, #tpu.memory_space<vmem>>, vector<8x64xf32>
    %585 = arith.addf %582, %584 : vector<8x64xf32>
    %586 = math.tanh %585 : vector<8x64xf32>
    %cst_260 = arith.constant dense<0.000000e+00> : vector<8x128xf32>
    %587 = tpu.matmul %586, %377, %cst_260 {dimension_numbers = #tpu.dot_dimension_numbers<[1], [0], [0], [1], [0, 0, 1, 1], [], []>} : vector<8x64xf32>, vector<64x128xf32>, vector<8x128xf32> -> vector<8x128xf32>
    %588 = vector.broadcast %378 : vector<1x128xf32> to vector<8x128xf32>
    %589 = arith.addf %587, %588 : vector<8x128xf32>
    %590 = math.tanh %589 : vector<8x128xf32>
    %cst_261 = arith.constant dense<0.000000e+00> : vector<8x64xf32>
    %591 = tpu.matmul %590, %379, %cst_261 {dimension_numbers = #tpu.dot_dimension_numbers<[1], [0], [0], [1], [0, 0, 1, 1], [], []>} : vector<8x128xf32>, vector<128x64xf32>, vector<8x64xf32> -> vector<8x64xf32>
    %592 = vector.broadcast %380 : vector<1x64xf32> to vector<8x64xf32>
    %593 = arith.addf %591, %592 : vector<8x64xf32>
    %594 = math.tanh %593 : vector<8x64xf32>
    %cst_262 = arith.constant dense<0.000000e+00> : vector<8x16xf32>
    %595 = tpu.matmul %594, %381, %cst_262 {dimension_numbers = #tpu.dot_dimension_numbers<[1], [0], [0], [1], [0, 0, 1, 1], [], []>} : vector<8x64xf32>, vector<64x16xf32>, vector<8x16xf32> -> vector<8x16xf32>
    %596 = vector.broadcast %382 : vector<1x16xf32> to vector<8x16xf32>
    %597 = arith.addf %595, %596 : vector<8x16xf32>
    %cst_263 = arith.constant dense<0.000000e+00> : vector<8x16xf32>
    %598 = tpu.matmul %594, %383, %cst_263 {dimension_numbers = #tpu.dot_dimension_numbers<[1], [0], [0], [1], [0, 0, 1, 1], [], []>} : vector<8x64xf32>, vector<64x16xf32>, vector<8x16xf32> -> vector<8x16xf32>
    %599 = vector.broadcast %384 : vector<1x16xf32> to vector<8x16xf32>
    %600 = arith.addf %598, %599 : vector<8x16xf32>
    %601 = arith.index_cast %577 : i32 to index
    %c0_264 = arith.constant 0 : index
    %602 = vector.load %arg33[%601, %c0_264] : memref<64x16xf32, #tpu.memory_space<vmem>>, vector<8x16xf32>
    tpu.vector_store %arg33[%601, %c0_264], %597 {strides = array<i32>} : memref<64x16xf32, #tpu.memory_space<vmem>>, vector<8x16xf32>,
    %603 = arith.index_cast %577 : i32 to index
    %c0_265 = arith.constant 0 : index
    %604 = vector.load %arg34[%603, %c0_265] : memref<64x16xf32, #tpu.memory_space<vmem>>, vector<8x16xf32>
    tpu.vector_store %arg34[%603, %c0_265], %600 {strides = array<i32>} : memref<64x16xf32, #tpu.memory_space<vmem>>, vector<8x16xf32>,
    %605 = arith.index_cast %577 : i32 to index
    %c0_266 = arith.constant 0 : index
    %606 = vector.load %arg1[%605, %c0_266] : memref<64x16xf32, #tpu.memory_space<vmem>>, vector<8x16xf32>
    %cst_267 = arith.constant 5.000000e-01 : f32
    %607 = vector.broadcast %cst_267 : f32 to vector<8x16xf32>
    %608 = arith.mulf %607, %600 : vector<8x16xf32>
    %609 = math.exp %608 : vector<8x16xf32>
    %610 = arith.mulf %606, %609 : vector<8x16xf32>
    %611 = arith.addf %597, %610 : vector<8x16xf32>
    %612 = arith.index_cast %577 : i32 to index
    %c0_268 = arith.constant 0 : index
    %613 = vector.load %arg44[%612, %c0_268] : memref<64x16xf32, #tpu.memory_space<vmem>>, vector<8x16xf32>
    tpu.vector_store %arg44[%612, %c0_268], %611 {strides = array<i32>} : memref<64x16xf32, #tpu.memory_space<vmem>>, vector<8x16xf32>,
    %c6_i32_269 = arith.constant 6 : i32
    %c8_i32_270 = arith.constant 8 : i32
    %614 = arith.muli %c6_i32_269, %c8_i32_270 : i32
    %615 = tpu.assume_multiple %614, 8 : i32
    %616 = arith.index_cast %615 : i32 to index
    %c0_271 = arith.constant 0 : index
    %617 = vector.load %arg43[%616, %c0_271] : memref<64x16xf32, #tpu.memory_space<vmem>>, vector<8x16xf32>
    tpu.vector_store %arg43[%616, %c0_271], %611 {strides = array<i32>} : memref<64x16xf32, #tpu.memory_space<vmem>>, vector<8x16xf32>,
    %cst_272 = arith.constant dense<0.000000e+00> : vector<8x64xf32>
    %618 = tpu.matmul %611, %376, %cst_272 {dimension_numbers = #tpu.dot_dimension_numbers<[1], [0], [0], [1], [0, 0, 1, 1], [], []>} : vector<8x16xf32>, vector<16x64xf32>, vector<8x64xf32> -> vector<8x64xf32>
    %cst_273 = arith.constant 5.000000e-01 : f32
    %619 = vector.broadcast %cst_273 : f32 to vector<8x64xf32>
    %620 = arith.mulf %619, %618 : vector<8x64xf32>
    %621 = arith.index_cast %615 : i32 to index
    %c0_274 = arith.constant 0 : index
    %622 = vector.load %arg42[%621, %c0_274] : memref<64x64xf32, #tpu.memory_space<vmem>>, vector<8x64xf32>
    %623 = arith.addf %620, %622 : vector<8x64xf32>
    %624 = math.tanh %623 : vector<8x64xf32>
    %cst_275 = arith.constant dense<0.000000e+00> : vector<8x128xf32>
    %625 = tpu.matmul %624, %377, %cst_275 {dimension_numbers = #tpu.dot_dimension_numbers<[1], [0], [0], [1], [0, 0, 1, 1], [], []>} : vector<8x64xf32>, vector<64x128xf32>, vector<8x128xf32> -> vector<8x128xf32>
    %626 = vector.broadcast %378 : vector<1x128xf32> to vector<8x128xf32>
    %627 = arith.addf %625, %626 : vector<8x128xf32>
    %628 = math.tanh %627 : vector<8x128xf32>
    %cst_276 = arith.constant dense<0.000000e+00> : vector<8x64xf32>
    %629 = tpu.matmul %628, %379, %cst_276 {dimension_numbers = #tpu.dot_dimension_numbers<[1], [0], [0], [1], [0, 0, 1, 1], [], []>} : vector<8x128xf32>, vector<128x64xf32>, vector<8x64xf32> -> vector<8x64xf32>
    %630 = vector.broadcast %380 : vector<1x64xf32> to vector<8x64xf32>
    %631 = arith.addf %629, %630 : vector<8x64xf32>
    %632 = math.tanh %631 : vector<8x64xf32>
    %cst_277 = arith.constant dense<0.000000e+00> : vector<8x16xf32>
    %633 = tpu.matmul %632, %381, %cst_277 {dimension_numbers = #tpu.dot_dimension_numbers<[1], [0], [0], [1], [0, 0, 1, 1], [], []>} : vector<8x64xf32>, vector<64x16xf32>, vector<8x16xf32> -> vector<8x16xf32>
    %634 = vector.broadcast %382 : vector<1x16xf32> to vector<8x16xf32>
    %635 = arith.addf %633, %634 : vector<8x16xf32>
    %cst_278 = arith.constant dense<0.000000e+00> : vector<8x16xf32>
    %636 = tpu.matmul %632, %383, %cst_278 {dimension_numbers = #tpu.dot_dimension_numbers<[1], [0], [0], [1], [0, 0, 1, 1], [], []>} : vector<8x64xf32>, vector<64x16xf32>, vector<8x16xf32> -> vector<8x16xf32>
    %637 = vector.broadcast %384 : vector<1x16xf32> to vector<8x16xf32>
    %638 = arith.addf %636, %637 : vector<8x16xf32>
    %639 = arith.index_cast %615 : i32 to index
    %c0_279 = arith.constant 0 : index
    %640 = vector.load %arg33[%639, %c0_279] : memref<64x16xf32, #tpu.memory_space<vmem>>, vector<8x16xf32>
    tpu.vector_store %arg33[%639, %c0_279], %635 {strides = array<i32>} : memref<64x16xf32, #tpu.memory_space<vmem>>, vector<8x16xf32>,
    %641 = arith.index_cast %615 : i32 to index
    %c0_280 = arith.constant 0 : index
    %642 = vector.load %arg34[%641, %c0_280] : memref<64x16xf32, #tpu.memory_space<vmem>>, vector<8x16xf32>
    tpu.vector_store %arg34[%641, %c0_280], %638 {strides = array<i32>} : memref<64x16xf32, #tpu.memory_space<vmem>>, vector<8x16xf32>,
    %643 = arith.index_cast %615 : i32 to index
    %c0_281 = arith.constant 0 : index
    %644 = vector.load %arg1[%643, %c0_281] : memref<64x16xf32, #tpu.memory_space<vmem>>, vector<8x16xf32>
    %cst_282 = arith.constant 5.000000e-01 : f32
    %645 = vector.broadcast %cst_282 : f32 to vector<8x16xf32>
    %646 = arith.mulf %645, %638 : vector<8x16xf32>
    %647 = math.exp %646 : vector<8x16xf32>
    %648 = arith.mulf %644, %647 : vector<8x16xf32>
    %649 = arith.addf %635, %648 : vector<8x16xf32>
    %650 = arith.index_cast %615 : i32 to index
    %c0_283 = arith.constant 0 : index
    %651 = vector.load %arg44[%650, %c0_283] : memref<64x16xf32, #tpu.memory_space<vmem>>, vector<8x16xf32>
    tpu.vector_store %arg44[%650, %c0_283], %649 {strides = array<i32>} : memref<64x16xf32, #tpu.memory_space<vmem>>, vector<8x16xf32>,
    %c7_i32_284 = arith.constant 7 : i32
    %c8_i32_285 = arith.constant 8 : i32
    %652 = arith.muli %c7_i32_284, %c8_i32_285 : i32
    %653 = tpu.assume_multiple %652, 8 : i32
    %654 = arith.index_cast %653 : i32 to index
    %c0_286 = arith.constant 0 : index
    %655 = vector.load %arg43[%654, %c0_286] : memref<64x16xf32, #tpu.memory_space<vmem>>, vector<8x16xf32>
    tpu.vector_store %arg43[%654, %c0_286], %649 {strides = array<i32>} : memref<64x16xf32, #tpu.memory_space<vmem>>, vector<8x16xf32>,
    %cst_287 = arith.constant dense<0.000000e+00> : vector<8x64xf32>
    %656 = tpu.matmul %649, %376, %cst_287 {dimension_numbers = #tpu.dot_dimension_numbers<[1], [0], [0], [1], [0, 0, 1, 1], [], []>} : vector<8x16xf32>, vector<16x64xf32>, vector<8x64xf32> -> vector<8x64xf32>
    %cst_288 = arith.constant 5.000000e-01 : f32
    %657 = vector.broadcast %cst_288 : f32 to vector<8x64xf32>
    %658 = arith.mulf %657, %656 : vector<8x64xf32>
    %659 = arith.index_cast %653 : i32 to index
    %c0_289 = arith.constant 0 : index
    %660 = vector.load %arg42[%659, %c0_289] : memref<64x64xf32, #tpu.memory_space<vmem>>, vector<8x64xf32>
    %661 = arith.addf %658, %660 : vector<8x64xf32>
    %662 = math.tanh %661 : vector<8x64xf32>
    %cst_290 = arith.constant dense<0.000000e+00> : vector<8x128xf32>
    %663 = tpu.matmul %662, %377, %cst_290 {dimension_numbers = #tpu.dot_dimension_numbers<[1], [0], [0], [1], [0, 0, 1, 1], [], []>} : vector<8x64xf32>, vector<64x128xf32>, vector<8x128xf32> -> vector<8x128xf32>
    %664 = vector.broadcast %378 : vector<1x128xf32> to vector<8x128xf32>
    %665 = arith.addf %663, %664 : vector<8x128xf32>
    %666 = math.tanh %665 : vector<8x128xf32>
    %cst_291 = arith.constant dense<0.000000e+00> : vector<8x64xf32>
    %667 = tpu.matmul %666, %379, %cst_291 {dimension_numbers = #tpu.dot_dimension_numbers<[1], [0], [0], [1], [0, 0, 1, 1], [], []>} : vector<8x128xf32>, vector<128x64xf32>, vector<8x64xf32> -> vector<8x64xf32>
    %668 = vector.broadcast %380 : vector<1x64xf32> to vector<8x64xf32>
    %669 = arith.addf %667, %668 : vector<8x64xf32>
    %670 = math.tanh %669 : vector<8x64xf32>
    %cst_292 = arith.constant dense<0.000000e+00> : vector<8x16xf32>
    %671 = tpu.matmul %670, %381, %cst_292 {dimension_numbers = #tpu.dot_dimension_numbers<[1], [0], [0], [1], [0, 0, 1, 1], [], []>} : vector<8x64xf32>, vector<64x16xf32>, vector<8x16xf32> -> vector<8x16xf32>
    %672 = vector.broadcast %382 : vector<1x16xf32> to vector<8x16xf32>
    %673 = arith.addf %671, %672 : vector<8x16xf32>
    %cst_293 = arith.constant dense<0.000000e+00> : vector<8x16xf32>
    %674 = tpu.matmul %670, %383, %cst_293 {dimension_numbers = #tpu.dot_dimension_numbers<[1], [0], [0], [1], [0, 0, 1, 1], [], []>} : vector<8x64xf32>, vector<64x16xf32>, vector<8x16xf32> -> vector<8x16xf32>
    %675 = vector.broadcast %384 : vector<1x16xf32> to vector<8x16xf32>
    %676 = arith.addf %674, %675 : vector<8x16xf32>
    %677 = arith.index_cast %653 : i32 to index
    %c0_294 = arith.constant 0 : index
    %678 = vector.load %arg33[%677, %c0_294] : memref<64x16xf32, #tpu.memory_space<vmem>>, vector<8x16xf32>
    tpu.vector_store %arg33[%677, %c0_294], %673 {strides = array<i32>} : memref<64x16xf32, #tpu.memory_space<vmem>>, vector<8x16xf32>,
    %679 = arith.index_cast %653 : i32 to index
    %c0_295 = arith.constant 0 : index
    %680 = vector.load %arg34[%679, %c0_295] : memref<64x16xf32, #tpu.memory_space<vmem>>, vector<8x16xf32>
    tpu.vector_store %arg34[%679, %c0_295], %676 {strides = array<i32>} : memref<64x16xf32, #tpu.memory_space<vmem>>, vector<8x16xf32>,
    %681 = arith.index_cast %653 : i32 to index
    %c0_296 = arith.constant 0 : index
    %682 = vector.load %arg1[%681, %c0_296] : memref<64x16xf32, #tpu.memory_space<vmem>>, vector<8x16xf32>
    %cst_297 = arith.constant 5.000000e-01 : f32
    %683 = vector.broadcast %cst_297 : f32 to vector<8x16xf32>
    %684 = arith.mulf %683, %676 : vector<8x16xf32>
    %685 = math.exp %684 : vector<8x16xf32>
    %686 = arith.mulf %682, %685 : vector<8x16xf32>
    %687 = arith.addf %673, %686 : vector<8x16xf32>
    %688 = arith.index_cast %653 : i32 to index
    %c0_298 = arith.constant 0 : index
    %689 = vector.load %arg44[%688, %c0_298] : memref<64x16xf32, #tpu.memory_space<vmem>>, vector<8x16xf32>
    tpu.vector_store %arg44[%688, %c0_298], %687 {strides = array<i32>} : memref<64x16xf32, #tpu.memory_space<vmem>>, vector<8x16xf32>,
    %c8_i32_299 = arith.constant 8 : i32
    %c0_300 = arith.constant 0 : index
    %c0_301 = arith.constant 0 : index
    %690 = vector.load %arg43[%c0_300, %c0_301] : memref<64x16xf32, #tpu.memory_space<vmem>>, vector<64x16xf32>
    %c0_302 = arith.constant 0 : index
    %c0_303 = arith.constant 0 : index
    %691 = vector.load %arg25[%c0_302, %c0_303] : memref<16x32xf32, #tpu.memory_space<vmem>>, vector<16x32xf32>
    %cst_304 = arith.constant dense<0.000000e+00> : vector<64x32xf32>
    %692 = tpu.matmul %690, %691, %cst_304 {dimension_numbers = #tpu.dot_dimension_numbers<[1], [0], [0], [1], [0, 0, 1, 1], [], []>} : vector<64x16xf32>, vector<16x32xf32>, vector<64x32xf32> -> vector<64x32xf32>
    %c0_305 = arith.constant 0 : index
    %c0_306 = arith.constant 0 : index
    %693 = vector.load %arg26[%c0_305, %c0_306] : memref<1x32xf32, #tpu.memory_space<vmem>>, vector<1x32xf32>
    %694 = vector.broadcast %693 : vector<1x32xf32> to vector<64x32xf32>
    %695 = arith.addf %692, %694 : vector<64x32xf32>
    %c0_307 = arith.constant 0 : index
    %c0_308 = arith.constant 0 : index
    %696 = vector.load %arg35[%c0_307, %c0_308] : memref<64x32xf32, #tpu.memory_space<vmem>>, vector<64x32xf32>
    tpu.vector_store %arg35[%c0_307, %c0_308], %695 {strides = array<i32>} : memref<64x32xf32, #tpu.memory_space<vmem>>, vector<64x32xf32>,
    %c0_309 = arith.constant 0 : index
    %c0_310 = arith.constant 0 : index
    %697 = vector.load %arg44[%c0_309, %c0_310] : memref<64x16xf32, #tpu.memory_space<vmem>>, vector<64x16xf32>
    %c0_311 = arith.constant 0 : index
    %c0_312 = arith.constant 0 : index
    %698 = vector.load %arg27[%c0_311, %c0_312] : memref<16x64xf32, #tpu.memory_space<vmem>>, vector<16x64xf32>
    %cst_313 = arith.constant dense<0.000000e+00> : vector<64x64xf32>
    %699 = tpu.matmul %697, %698, %cst_313 {dimension_numbers = #tpu.dot_dimension_numbers<[1], [0], [0], [1], [0, 0, 1, 1], [], []>} : vector<64x16xf32>, vector<16x64xf32>, vector<64x64xf32> -> vector<64x64xf32>
    %c0_314 = arith.constant 0 : index
    %c0_315 = arith.constant 0 : index
    %700 = vector.load %arg28[%c0_314, %c0_315] : memref<1x64xf32, #tpu.memory_space<vmem>>, vector<1x64xf32>
    %701 = vector.broadcast %700 : vector<1x64xf32> to vector<64x64xf32>
    %702 = arith.addf %699, %701 : vector<64x64xf32>
    %703 = math.tanh %702 : vector<64x64xf32>
    %c0_316 = arith.constant 0 : index
    %c0_317 = arith.constant 0 : index
    %704 = vector.load %arg29[%c0_316, %c0_317] : memref<64x64xf32, #tpu.memory_space<vmem>>, vector<64x64xf32>
    %cst_318 = arith.constant dense<0.000000e+00> : vector<64x64xf32>
    %705 = tpu.matmul %703, %704, %cst_318 {dimension_numbers = #tpu.dot_dimension_numbers<[1], [0], [0], [1], [0, 0, 1, 1], [], []>} : vector<64x64xf32>, vector<64x64xf32>, vector<64x64xf32> -> vector<64x64xf32>
    %c0_319 = arith.constant 0 : index
    %c0_320 = arith.constant 0 : index
    %706 = vector.load %arg30[%c0_319, %c0_320] : memref<1x64xf32, #tpu.memory_space<vmem>>, vector<1x64xf32>
    %707 = vector.broadcast %706 : vector<1x64xf32> to vector<64x64xf32>
    %708 = arith.addf %705, %707 : vector<64x64xf32>
    %709 = math.tanh %708 : vector<64x64xf32>
    %c0_321 = arith.constant 0 : index
    %c0_322 = arith.constant 0 : index
    %710 = vector.load %arg31[%c0_321, %c0_322] : memref<64x32xf32, #tpu.memory_space<vmem>>, vector<64x32xf32>
    %cst_323 = arith.constant dense<0.000000e+00> : vector<64x32xf32>
    %711 = tpu.matmul %709, %710, %cst_323 {dimension_numbers = #tpu.dot_dimension_numbers<[1], [0], [0], [1], [0, 0, 1, 1], [], []>} : vector<64x64xf32>, vector<64x32xf32>, vector<64x32xf32> -> vector<64x32xf32>
    %c0_324 = arith.constant 0 : index
    %c0_325 = arith.constant 0 : index
    %712 = vector.load %arg32[%c0_324, %c0_325] : memref<1x32xf32, #tpu.memory_space<vmem>>, vector<1x32xf32>
    %713 = vector.broadcast %712 : vector<1x32xf32> to vector<64x32xf32>
    %714 = arith.addf %711, %713 : vector<64x32xf32>
    %c0_326 = arith.constant 0 : index
    %c0_327 = arith.constant 0 : index
    %715 = vector.load %arg36[%c0_326, %c0_327] : memref<64x32xf32, #tpu.memory_space<vmem>>, vector<64x32xf32>
    tpu.vector_store %arg36[%c0_326, %c0_327], %714 {strides = array<i32>} : memref<64x32xf32, #tpu.memory_space<vmem>>, vector<64x32xf32>,
    return
  }
}

</mosaic_0001>

<llo_original>
// kernel: tpu_custom_call.1
$region0: #{tpu_custom_call.1}
  #allocation0 [shape = 'u32[]', space=smem, size = 0x4, offset = 0x4, fixed_abs, tag = 'smem constant byte address 0x4 - core index']
  #allocation1 [shape = 'u32[72,128]{1,0:T(1,128)}', space=vmem, size = 0x9000, scoped, tag = 'internal scratch']
  #allocation2 [shape = 'f32[64,64]{1,0:T(8,128)}', space=vmem, size = 0x8000, scoped, tag = 'scratch operand']
  #allocation3 [shape = 'f32[64,64]{1,0:T(8,128)}', space=vmem, size = 0x8000, scoped, tag = 'scratch operand']
  #allocation4 [shape = 'f32[64,64]{1,0:T(8,128)}', space=vmem, size = 0x8000, scoped, tag = 'scratch operand']
  #allocation5 [shape = 'f32[64,64]{1,0:T(8,128)}', space=vmem, size = 0x8000, scoped, tag = 'scratch operand']
  #allocation6 [shape = 'f32[64,64]{1,0:T(8,128)}', space=vmem, size = 0x8000, scoped, tag = 'scratch operand']
  #allocation7 [shape = 'f32[64,64]{1,0:T(8,128)}', space=vmem, size = 0x8000, scoped, tag = 'scratch operand']
  #allocation8 [shape = 'f32[64,16]{1,0:T(8,128)}', space=vmem, size = 0x8000, scoped, tag = 'scratch operand']
  #allocation9 [shape = 'f32[64,16]{1,0:T(8,128)}', space=vmem, size = 0x8000, scoped, tag = 'scratch operand']
  %s0 = inlined_call_operand.smem [shape: u32[37], index: -1, kind: input, shape index: {}]
  %s1 = sld [smem:[%s0]]
  %s2 = scalar_lea.smem %s0, 1
  %s3 = sld [smem:[%s2]]
  %s4 = scalar_lea.smem %s0, 2
  %s5 = sld [smem:[%s4]]
  %s6 = scalar_lea.smem %s0, 3
  %s7 = sld [smem:[%s6]]
  %s8 = scalar_lea.smem %s0, 4
  %s9 = sld [smem:[%s8]]
  %s10 = scalar_lea.smem %s0, 5
  %s11 = sld [smem:[%s10]]
  %s12 = scalar_lea.smem %s0, 6
  %s13 = sld [smem:[%s12]]
  %s14 = scalar_lea.smem %s0, 7
  %s15 = sld [smem:[%s14]]
  %s16 = scalar_lea.smem %s0, 8
  %s17 = sld [smem:[%s16]]
  %s18 = scalar_lea.smem %s0, 9
  %s19 = sld [smem:[%s18]]
  %s20 = scalar_lea.smem %s0, 10
  %s21 = sld [smem:[%s20]]
  %s22 = scalar_lea.smem %s0, 11
  %s23 = sld [smem:[%s22]]
  %s24 = scalar_lea.smem %s0, 12
  %s25 = sld [smem:[%s24]]
  %s26 = scalar_lea.smem %s0, 13
  %s27 = sld [smem:[%s26]]
  %s28 = scalar_lea.smem %s0, 14
  %s29 = sld [smem:[%s28]]
  %s30 = scalar_lea.smem %s0, 15
  %s31 = sld [smem:[%s30]]
  %s32 = scalar_lea.smem %s0, 16
  %s33 = sld [smem:[%s32]]
  %s34 = scalar_lea.smem %s0, 17
  %s35 = sld [smem:[%s34]]
  %s36 = scalar_lea.smem %s0, 18
  %s37 = sld [smem:[%s36]]
  %s38 = scalar_lea.smem %s0, 19
  %s39 = sld [smem:[%s38]]
  %s40 = scalar_lea.smem %s0, 20
  %s41 = sld [smem:[%s40]]
  %s42 = scalar_lea.smem %s0, 21
  %s43 = sld [smem:[%s42]]
  %s44 = scalar_lea.smem %s0, 22
  %s45 = sld [smem:[%s44]]
  %s46 = scalar_lea.smem %s0, 23
  %s47 = sld [smem:[%s46]]
  %s48 = scalar_lea.smem %s0, 24
  %s49 = sld [smem:[%s48]]
  %s50 = scalar_lea.smem %s0, 25
  %s51 = sld [smem:[%s50]]
  %s52 = scalar_lea.smem %s0, 26
  %s53 = sld [smem:[%s52]]
  %s54 = scalar_lea.smem %s0, 27
  %s55 = sld [smem:[%s54]]
  %s56 = scalar_lea.smem %s0, 28
  %s57 = sld [smem:[%s56]]
  %s58 = scalar_lea.smem %s0, 29
  %s59 = sld [smem:[%s58]]
  %s60 = scalar_lea.smem %s0, 30
  %s61 = sld [smem:[%s60]]
  %s62 = scalar_lea.smem %s0, 31
  %s63 = sld [smem:[%s62]]
  %s64 = scalar_lea.smem %s0, 32
  %s65 = sld [smem:[%s64]]
  %s66 = scalar_lea.smem %s0, 33
  %s67 = sld [smem:[%s66]]
  %s68 = scalar_lea.smem %s0, 34
  %s69 = sld [smem:[%s68]]
  %s70 = scalar_lea.smem %s0, 35
  %s71 = sld [smem:[%s70]]
  %s72 = scalar_lea.smem %s0, 36
  %s73 = sld [smem:[%s72]]
  %74 = xla_tuple %s67, %s69, %s71, %s73
  %s75 = sld [smem:[#allocation0]]
  $region210: #{tpu_custom_call.1} parent=0
    _
  %s77 = ssub.s32 1, %s75
  %s78 = scalar_select 0, %s77, %s75
  $region1: #{tpu_custom_call.1} parent=0
    #allocation10 [shape = 'u8[8192]{0}', space=vmem, size = 0x2000, scoped, tag = 'input window, operand 3, single buffered']
    #allocation11 [shape = 's32[1]{0}', space=sflag, size = 0x4, scoped, tag = 'scoped memory for tpu_custom_call.1']
    #allocation12 [shape = 'u8[8192]{0}', space=vmem, size = 0x2000, scoped, tag = 'input window, operand 4, single buffered']
    #allocation13 [shape = 's32[1]{0}', space=sflag, size = 0x4, scoped, tag = 'scoped memory for tpu_custom_call.1']
    #allocation14 [shape = 'u8[8192]{0}', space=vmem, size = 0x2000, scoped, tag = 'input window, operand 5, single buffered']
    #allocation15 [shape = 'u8[8192]{0}', space=vmem, size = 0x2000, scoped, tag = 'input window, operand 14, single buffered']
    #allocation16 [shape = 's32[1]{0}', space=sflag, size = 0x4, scoped, tag = 'scoped memory for tpu_custom_call.1']
    #allocation17 [shape = 'u8[512]{0}', space=vmem, size = 0x400, scoped, tag = 'input window, operand 16, single buffered']
    #allocation18 [shape = 'u8[512]{0}', space=vmem, size = 0x400, scoped, tag = 'input window, operand 18, single buffered']
    #allocation19 [shape = 's32[1]{0}', space=sflag, size = 0x4, scoped, tag = 'scoped memory for tpu_custom_call.1']
    #allocation20 [shape = 'u8[512]{0}', space=vmem, size = 0x400, scoped, tag = 'input window, operand 20, single buffered']
    #allocation21 [shape = 'u8[512]{0}', space=vmem, size = 0x400, scoped, tag = 'input window, operand 22, single buffered']
    #allocation22 [shape = 's32[1]{0}', space=sflag, size = 0x4, scoped, tag = 'scoped memory for tpu_custom_call.1']
    #allocation23 [shape = 'u8[512]{0}', space=vmem, size = 0x400, scoped, tag = 'input window, operand 24, single buffered']
    #allocation24 [shape = 'u8[512]{0}', space=vmem, size = 0x400, scoped, tag = 'input window, operand 26, single buffered']
    #allocation25 [shape = 's32[1]{0}', space=sflag, size = 0x4, scoped, tag = 'scoped memory for tpu_custom_call.1']
    #allocation26 [shape = 'u8[8192]{0}', space=vmem, size = 0x2000, scoped, tag = 'input window, operand 27, single buffered']
    %79 = vsyncpa [#allocation11], 0
    %80 = vsyncpa [#allocation13], 0
    %81 = vsyncpa [#allocation16], 0
    %82 = vsyncpa [#allocation19], 0
    %83 = vsyncpa [#allocation22], 0
    %84 = vsyncpa [#allocation25], 0
    // Predicated region
    $region2: #{tpu_custom_call.1} parent=1 // pred_check
      _
    $region3: #{tpu_custom_call.1} parent=1 // pred_check_branch
      %86 = sbr.rel (0) target = $region5
    $region4: #{tpu_custom_call.1} parent=1 // pred_region
      _
    $region5: #{tpu_custom_call.1} parent=1 // pred_fallthru
      _
    // Predicated region
    $region6: #{tpu_custom_call.1} parent=1 // pred_check
      _
    $region7: #{tpu_custom_call.1} parent=1 // pred_check_branch
      %88 = sbr.rel (0) target = $region9
    $region8: #{tpu_custom_call.1} parent=1 // pred_region
      _
    $region9: #{tpu_custom_call.1} parent=1 // pred_fallthru
      _
    // Predicated region
    $region10: #{tpu_custom_call.1} parent=1 // pred_check
      _
    $region11: #{tpu_custom_call.1} parent=1 // pred_check_branch
      %90 = sbr.rel (0) target = $region13
    $region12: #{tpu_custom_call.1} parent=1 // pred_region
      _
    $region13: #{tpu_custom_call.1} parent=1 // pred_fallthru
      _
    // Predicated region
    $region14: #{tpu_custom_call.1} parent=1 // pred_check
      _
    $region15: #{tpu_custom_call.1} parent=1 // pred_check_branch
      %92 = sbr.rel (0) target = $region17
    $region16: #{tpu_custom_call.1} parent=1 // pred_region
      %94 = vsyncadd [#allocation11], 0
      %s95 = sshll.u32 %s7, 4
      %s96 = int_to_ptr.hbm [resolvable:$true] %s95
      %s97 = sshll.u32 [#allocation10], 4
      %s98 = int_to_ptr.vmem [resolvable:$true] %s97
      %103 = dma.hbm_to_vmem [thread:$0]  %s96, 256, %s98, [#allocation11], 128, 128, 8
    $region17: #{tpu_custom_call.1} parent=1 // pred_fallthru
      _
    // Predicated region
    $region18: #{tpu_custom_call.1} parent=1 // pred_check
      _
    $region19: #{tpu_custom_call.1} parent=1 // pred_check_branch
      %105 = sbr.rel (0) target = $region21
    $region20: #{tpu_custom_call.1} parent=1 // pred_region
      %107 = vsyncadd [#allocation13], 0
      %s108 = sshll.u32 %s9, 4
      %s109 = int_to_ptr.hbm [resolvable:$true] %s108
      %s110 = sshll.u32 [#allocation12], 4
      %s111 = int_to_ptr.vmem [resolvable:$true] %s110
      %116 = dma.hbm_to_vmem [thread:$0]  %s109, 256, %s111, [#allocation13], 128, 128, 8
    $region21: #{tpu_custom_call.1} parent=1 // pred_fallthru
      _
    // Predicated region
    $region22: #{tpu_custom_call.1} parent=1 // pred_check
      _
    $region23: #{tpu_custom_call.1} parent=1 // pred_check_branch
      %118 = sbr.rel (0) target = $region25
    $region24: #{tpu_custom_call.1} parent=1 // pred_region
      %120 = vsyncadd [#allocation13], 0
      %s121 = sshll.u32 %s11, 4
      %s122 = int_to_ptr.hbm [resolvable:$true] %s121
      %s123 = sshll.u32 [#allocation14], 4
      %s124 = int_to_ptr.vmem [resolvable:$true] %s123
      %129 = dma.hbm_to_vmem [thread:$0]  %s122, 256, %s124, [#allocation13], 128, 128, 8
    $region25: #{tpu_custom_call.1} parent=1 // pred_fallthru
      _
    // Predicated region
    $region26: #{tpu_custom_call.1} parent=1 // pred_check
      _
    $region27: #{tpu_custom_call.1} parent=1 // pred_check_branch
      %131 = sbr.rel (0) target = $region29
    $region28: #{tpu_custom_call.1} parent=1 // pred_region
      _
    $region29: #{tpu_custom_call.1} parent=1 // pred_fallthru
      _
    // Predicated region
    $region30: #{tpu_custom_call.1} parent=1 // pred_check
      _
    $region31: #{tpu_custom_call.1} parent=1 // pred_check_branch
      %133 = sbr.rel (0) target = $region33
    $region32: #{tpu_custom_call.1} parent=1 // pred_region
      _
    $region33: #{tpu_custom_call.1} parent=1 // pred_fallthru
      _
    // Predicated region
    $region34: #{tpu_custom_call.1} parent=1 // pred_check
      _
    $region35: #{tpu_custom_call.1} parent=1 // pred_check_branch
      %135 = sbr.rel (0) target = $region37
    $region36: #{tpu_custom_call.1} parent=1 // pred_region
      _
    $region37: #{tpu_custom_call.1} parent=1 // pred_fallthru
      _
    // Predicated region
    $region38: #{tpu_custom_call.1} parent=1 // pred_check
      _
    $region39: #{tpu_custom_call.1} parent=1 // pred_check_branch
      %137 = sbr.rel (0) target = $region41
    $region40: #{tpu_custom_call.1} parent=1 // pred_region
      _
    $region41: #{tpu_custom_call.1} parent=1 // pred_fallthru
      _
    // Predicated region
    $region42: #{tpu_custom_call.1} parent=1 // pred_check
      _
    $region43: #{tpu_custom_call.1} parent=1 // pred_check_branch
      %139 = sbr.rel (0) target = $region45
    $region44: #{tpu_custom_call.1} parent=1 // pred_region
      _
    $region45: #{tpu_custom_call.1} parent=1 // pred_fallthru
      _
    // Predicated region
    $region46: #{tpu_custom_call.1} parent=1 // pred_check
      _
    $region47: #{tpu_custom_call.1} parent=1 // pred_check_branch
      %141 = sbr.rel (0) target = $region49
    $region48: #{tpu_custom_call.1} parent=1 // pred_region
      _
    $region49: #{tpu_custom_call.1} parent=1 // pred_fallthru
      _
    // Predicated region
    $region50: #{tpu_custom_call.1} parent=1 // pred_check
      _
    $region51: #{tpu_custom_call.1} parent=1 // pred_check_branch
      %143 = sbr.rel (0) target = $region53
    $region52: #{tpu_custom_call.1} parent=1 // pred_region
      _
    $region53: #{tpu_custom_call.1} parent=1 // pred_fallthru
      _
    // Predicated region
    $region54: #{tpu_custom_call.1} parent=1 // pred_check
      _
    $region55: #{tpu_custom_call.1} parent=1 // pred_check_branch
      %145 = sbr.rel (0) target = $region57
    $region56: #{tpu_custom_call.1} parent=1 // pred_region
      _
    $region57: #{tpu_custom_call.1} parent=1 // pred_fallthru
      _
    // Predicated region
    $region58: #{tpu_custom_call.1} parent=1 // pred_check
      _
    $region59: #{tpu_custom_call.1} parent=1 // pred_check_branch
      %147 = sbr.rel (0) target = $region61
    $region60: #{tpu_custom_call.1} parent=1 // pred_region
      %149 = vsyncadd [#allocation16], 0
      %s150 = sshll.u32 %s29, 4
      %s151 = int_to_ptr.hbm [resolvable:$true] %s150
      %s152 = sshll.u32 [#allocation15], 4
      %s153 = int_to_ptr.vmem [resolvable:$true] %s152
      %158 = dma.hbm_to_vmem [thread:$0]  %s151, 256, %s153, [#allocation16], 128, 128, 8
    $region61: #{tpu_custom_call.1} parent=1 // pred_fallthru
      _
    // Predicated region
    $region62: #{tpu_custom_call.1} parent=1 // pred_check
      _
    $region63: #{tpu_custom_call.1} parent=1 // pred_check_branch
      %160 = sbr.rel (0) target = $region65
    $region64: #{tpu_custom_call.1} parent=1 // pred_region
      _
    $region65: #{tpu_custom_call.1} parent=1 // pred_fallthru
      _
    // Predicated region
    $region66: #{tpu_custom_call.1} parent=1 // pred_check
      _
    $region67: #{tpu_custom_call.1} parent=1 // pred_check_branch
      %162 = sbr.rel (0) target = $region69
    $region68: #{tpu_custom_call.1} parent=1 // pred_region
      %164 = vsyncadd [#allocation16], 0
      %s166 = sshll.u32 %s33, 4
      %s167 = int_to_ptr.hbm [resolvable:$true] %s166
      %s168 = sshll.u32 [#allocation17], 4
      %s169 = int_to_ptr.vmem [resolvable:$true] %s168
      %171 = dma.hbm_to_vmem [thread:$0]  %s167, 16, %s169, [#allocation16]
    $region69: #{tpu_custom_call.1} parent=1 // pred_fallthru
      _
    // Predicated region
    $region70: #{tpu_custom_call.1} parent=1 // pred_check
      _
    $region71: #{tpu_custom_call.1} parent=1 // pred_check_branch
      %173 = sbr.rel (0) target = $region73
    $region72: #{tpu_custom_call.1} parent=1 // pred_region
      _
    $region73: #{tpu_custom_call.1} parent=1 // pred_fallthru
      _
    // Predicated region
    $region74: #{tpu_custom_call.1} parent=1 // pred_check
      _
    $region75: #{tpu_custom_call.1} parent=1 // pred_check_branch
      %175 = sbr.rel (0) target = $region77
    $region76: #{tpu_custom_call.1} parent=1 // pred_region
      %177 = vsyncadd [#allocation19], 0
      %s179 = sshll.u32 %s37, 4
      %s180 = int_to_ptr.hbm [resolvable:$true] %s179
      %s181 = sshll.u32 [#allocation18], 4
      %s182 = int_to_ptr.vmem [resolvable:$true] %s181
      %184 = dma.hbm_to_vmem [thread:$0]  %s180, 16, %s182, [#allocation19]
    $region77: #{tpu_custom_call.1} parent=1 // pred_fallthru
      _
    // Predicated region
    $region78: #{tpu_custom_call.1} parent=1 // pred_check
      _
    $region79: #{tpu_custom_call.1} parent=1 // pred_check_branch
      %186 = sbr.rel (0) target = $region81
    $region80: #{tpu_custom_call.1} parent=1 // pred_region
      _
    $region81: #{tpu_custom_call.1} parent=1 // pred_fallthru
      _
    // Predicated region
    $region82: #{tpu_custom_call.1} parent=1 // pred_check
      _
    $region83: #{tpu_custom_call.1} parent=1 // pred_check_branch
      %188 = sbr.rel (0) target = $region85
    $region84: #{tpu_custom_call.1} parent=1 // pred_region
      %190 = vsyncadd [#allocation19], 0
      %s192 = sshll.u32 %s41, 4
      %s193 = int_to_ptr.hbm [resolvable:$true] %s192
      %s194 = sshll.u32 [#allocation20], 4
      %s195 = int_to_ptr.vmem [resolvable:$true] %s194
      %197 = dma.hbm_to_vmem [thread:$0]  %s193, 16, %s195, [#allocation19]
    $region85: #{tpu_custom_call.1} parent=1 // pred_fallthru
      _
    // Predicated region
    $region86: #{tpu_custom_call.1} parent=1 // pred_check
      _
    $region87: #{tpu_custom_call.1} parent=1 // pred_check_branch
      %199 = sbr.rel (0) target = $region89
    $region88: #{tpu_custom_call.1} parent=1 // pred_region
      _
    $region89: #{tpu_custom_call.1} parent=1 // pred_fallthru
      _
    // Predicated region
    $region90: #{tpu_custom_call.1} parent=1 // pred_check
      _
    $region91: #{tpu_custom_call.1} parent=1 // pred_check_branch
      %201 = sbr.rel (0) target = $region93
    $region92: #{tpu_custom_call.1} parent=1 // pred_region
      %203 = vsyncadd [#allocation22], 0
      %s205 = sshll.u32 %s45, 4
      %s206 = int_to_ptr.hbm [resolvable:$true] %s205
      %s207 = sshll.u32 [#allocation21], 4
      %s208 = int_to_ptr.vmem [resolvable:$true] %s207
      %210 = dma.hbm_to_vmem [thread:$0]  %s206, 16, %s208, [#allocation22]
    $region93: #{tpu_custom_call.1} parent=1 // pred_fallthru
      _
    // Predicated region
    $region94: #{tpu_custom_call.1} parent=1 // pred_check
      _
    $region95: #{tpu_custom_call.1} parent=1 // pred_check_branch
      %212 = sbr.rel (0) target = $region97
    $region96: #{tpu_custom_call.1} parent=1 // pred_region
      _
    $region97: #{tpu_custom_call.1} parent=1 // pred_fallthru
      _
    // Predicated region
    $region98: #{tpu_custom_call.1} parent=1 // pred_check
      _
    $region99: #{tpu_custom_call.1} parent=1 // pred_check_branch
      %214 = sbr.rel (0) target = $region101
    $region100: #{tpu_custom_call.1} parent=1 // pred_region
      %216 = vsyncadd [#allocation22], 0
      %s218 = sshll.u32 %s49, 4
      %s219 = int_to_ptr.hbm [resolvable:$true] %s218
      %s220 = sshll.u32 [#allocation23], 4
      %s221 = int_to_ptr.vmem [resolvable:$true] %s220
      %223 = dma.hbm_to_vmem [thread:$0]  %s219, 16, %s221, [#allocation22]
    $region101: #{tpu_custom_call.1} parent=1 // pred_fallthru
      _
    // Predicated region
    $region102: #{tpu_custom_call.1} parent=1 // pred_check
      _
    $region103: #{tpu_custom_call.1} parent=1 // pred_check_branch
      %225 = sbr.rel (0) target = $region105
    $region104: #{tpu_custom_call.1} parent=1 // pred_region
      _
    $region105: #{tpu_custom_call.1} parent=1 // pred_fallthru
      _
    // Predicated region
    $region106: #{tpu_custom_call.1} parent=1 // pred_check
      _
    $region107: #{tpu_custom_call.1} parent=1 // pred_check_branch
      %227 = sbr.rel (0) target = $region109
    $region108: #{tpu_custom_call.1} parent=1 // pred_region
      %229 = vsyncadd [#allocation25], 0
      %s231 = sshll.u32 %s53, 4
      %s232 = int_to_ptr.hbm [resolvable:$true] %s231
      %s233 = sshll.u32 [#allocation24], 4
      %s234 = int_to_ptr.vmem [resolvable:$true] %s233
      %236 = dma.hbm_to_vmem [thread:$0]  %s232, 16, %s234, [#allocation25]
    $region109: #{tpu_custom_call.1} parent=1 // pred_fallthru
      _
    // Predicated region
    $region110: #{tpu_custom_call.1} parent=1 // pred_check
      _
    $region111: #{tpu_custom_call.1} parent=1 // pred_check_branch
      %238 = sbr.rel (0) target = $region113
    $region112: #{tpu_custom_call.1} parent=1 // pred_region
      %240 = vsyncadd [#allocation25], 0
      %s241 = sshll.u32 %s55, 4
      %s242 = int_to_ptr.hbm [resolvable:$true] %s241
      %s243 = sshll.u32 [#allocation26], 4
      %s244 = int_to_ptr.vmem [resolvable:$true] %s243
      %249 = dma.hbm_to_vmem [thread:$0]  %s242, 256, %s244, [#allocation25], 128, 128, 8
    $region113: #{tpu_custom_call.1} parent=1 // pred_fallthru
      _
    // Predicated region
    $region114: #{tpu_custom_call.1} parent=1 // pred_check
      _
    $region115: #{tpu_custom_call.1} parent=1 // pred_check_branch
      %251 = sbr.rel (0) target = $region117
    $region116: #{tpu_custom_call.1} parent=1 // pred_region
      _
    $region117: #{tpu_custom_call.1} parent=1 // pred_fallthru
      _
    // Predicated region
    $region118: #{tpu_custom_call.1} parent=1 // pred_check
      _
    $region119: #{tpu_custom_call.1} parent=1 // pred_check_branch
      %253 = sbr.rel (0) target = $region121
    $region120: #{tpu_custom_call.1} parent=1 // pred_region
      _
    $region121: #{tpu_custom_call.1} parent=1 // pred_fallthru
      _
    // Predicated region
    $region122: #{tpu_custom_call.1} parent=1 // pred_check
      _
    $region123: #{tpu_custom_call.1} parent=1 // pred_check_branch
      %255 = sbr.rel (0) target = $region125
    $region124: #{tpu_custom_call.1} parent=1 // pred_region
      _
    $region125: #{tpu_custom_call.1} parent=1 // pred_fallthru
      _
    // Predicated region
    $region126: #{tpu_custom_call.1} parent=1 // pred_check
      _
    $region127: #{tpu_custom_call.1} parent=1 // pred_check_branch
      %257 = sbr.rel (0) target = $region129
    $region128: #{tpu_custom_call.1} parent=1 // pred_region
      _
    $region129: #{tpu_custom_call.1} parent=1 // pred_fallthru
      _
    // Predicated region
    $region130: #{tpu_custom_call.1} parent=1 // pred_check
      _
    $region131: #{tpu_custom_call.1} parent=1 // pred_check_branch
      %259 = sbr.rel (0) target = $region133
    $region132: #{tpu_custom_call.1} parent=1 // pred_region
      _
    $region133: #{tpu_custom_call.1} parent=1 // pred_fallthru
      _
    // Predicated region
    $region134: #{tpu_custom_call.1} parent=1 // pred_check
      _
    $region135: #{tpu_custom_call.1} parent=1 // pred_check_branch
      %261 = sbr.rel (0) target = $region137
    $region136: #{tpu_custom_call.1} parent=1 // pred_region
      %263 = dma.done [#allocation11], 256
    $region137: #{tpu_custom_call.1} parent=1 // pred_fallthru
      _
    // Predicated region
    $region138: #{tpu_custom_call.1} parent=1 // pred_check
      _
    $region139: #{tpu_custom_call.1} parent=1 // pred_check_branch
      %265 = sbr.rel (0) target = $region141
    $region140: #{tpu_custom_call.1} parent=1 // pred_region
      %267 = dma.done [#allocation13], 256
    $region141: #{tpu_custom_call.1} parent=1 // pred_fallthru
      _
    // Predicated region
    $region142: #{tpu_custom_call.1} parent=1 // pred_check
      _
    $region143: #{tpu_custom_call.1} parent=1 // pred_check_branch
      %269 = sbr.rel (0) target = $region145
    $region144: #{tpu_custom_call.1} parent=1 // pred_region
      %271 = dma.done [#allocation13], 256
    $region145: #{tpu_custom_call.1} parent=1 // pred_fallthru
      _
    // Predicated region
    $region146: #{tpu_custom_call.1} parent=1 // pred_check
      _
    $region147: #{tpu_custom_call.1} parent=1 // pred_check_branch
      %273 = sbr.rel (0) target = $region149
    $region148: #{tpu_custom_call.1} parent=1 // pred_region
      %275 = dma.done [#allocation16], 256
    $region149: #{tpu_custom_call.1} parent=1 // pred_fallthru
      _
    // Predicated region
    $region150: #{tpu_custom_call.1} parent=1 // pred_check
      _
    $region151: #{tpu_custom_call.1} parent=1 // pred_check_branch
      %277 = sbr.rel (0) target = $region153
    $region152: #{tpu_custom_call.1} parent=1 // pred_region
      %279 = dma.done [#allocation16], 16
    $region153: #{tpu_custom_call.1} parent=1 // pred_fallthru
      _
    // Predicated region
    $region154: #{tpu_custom_call.1} parent=1 // pred_check
      _
    $region155: #{tpu_custom_call.1} parent=1 // pred_check_branch
      %281 = sbr.rel (0) target = $region157
    $region156: #{tpu_custom_call.1} parent=1 // pred_region
      %283 = dma.done [#allocation19], 16
    $region157: #{tpu_custom_call.1} parent=1 // pred_fallthru
      _
    // Predicated region
    $region158: #{tpu_custom_call.1} parent=1 // pred_check
      _
    $region159: #{tpu_custom_call.1} parent=1 // pred_check_branch
      %285 = sbr.rel (0) target = $region161
    $region160: #{tpu_custom_call.1} parent=1 // pred_region
      %287 = dma.done [#allocation19], 16
    $region161: #{tpu_custom_call.1} parent=1 // pred_fallthru
      _
    // Predicated region
    $region162: #{tpu_custom_call.1} parent=1 // pred_check
      _
    $region163: #{tpu_custom_call.1} parent=1 // pred_check_branch
      %289 = sbr.rel (0) target = $region165
    $region164: #{tpu_custom_call.1} parent=1 // pred_region
      %291 = dma.done [#allocation22], 16
    $region165: #{tpu_custom_call.1} parent=1 // pred_fallthru
      _
    // Predicated region
    $region166: #{tpu_custom_call.1} parent=1 // pred_check
      _
    $region167: #{tpu_custom_call.1} parent=1 // pred_check_branch
      %293 = sbr.rel (0) target = $region169
    $region168: #{tpu_custom_call.1} parent=1 // pred_region
      %295 = dma.done [#allocation22], 16
    $region169: #{tpu_custom_call.1} parent=1 // pred_fallthru
      _
    // Predicated region
    $region170: #{tpu_custom_call.1} parent=1 // pred_check
      _
    $region171: #{tpu_custom_call.1} parent=1 // pred_check_branch
      %297 = sbr.rel (0) target = $region173
    $region172: #{tpu_custom_call.1} parent=1 // pred_region
      %299 = dma.done [#allocation25], 16
    $region173: #{tpu_custom_call.1} parent=1 // pred_fallthru
      _
    // Predicated region
    $region174: #{tpu_custom_call.1} parent=1 // pred_check
      _
    $region175: #{tpu_custom_call.1} parent=1 // pred_check_branch
      %301 = sbr.rel (0) target = $region177
    $region176: #{tpu_custom_call.1} parent=1 // pred_region
      %303 = dma.done [#allocation25], 256
    $region177: #{tpu_custom_call.1} parent=1 // pred_fallthru
      _
    %v304 = vld [vmem:[%s1] sm:$0xff]
    %v305 = vld [vmem:[%s1 + $0x8] sm:$0xff]
    %v306 = vld [vmem:[%s1 + $0x10] sm:$0xff]
    %v307 = vld [vmem:[%s1 + $0x18] sm:$0xff]
    %v308 = vld [vmem:[%s1 + $0x20] sm:$0xff]
    %v309 = vld [vmem:[%s1 + $0x28] sm:$0xff]
    %v310 = vld [vmem:[%s1 + $0x30] sm:$0xff]
    %v311 = vld [vmem:[%s1 + $0x38] sm:$0xff]
    %v312 = vld [vmem:[%s5] sm:$0xff]
    %v313 = vld [vmem:[%s5 + $0x8] sm:$0xff]
    %v314 = vld [vmem:[%s21] sm:$0x1]
    %v316 = vperm.slane %v314, 0
    %vm318 = vcmask 130048
    %v320 = vsel %vm318, %v304, 0
    %v323 = vsel %vm318, %v305, 0
    %v326 = vsel %vm318, %v306, 0
    %v329 = vsel %vm318, %v307, 0
    %v332 = vsel %vm318, %v308, 0
    %v335 = vsel %vm318, %v309, 0
    %v338 = vsel %vm318, %v310, 0
    %v341 = vsel %vm318, %v311, 0
    %343 = vmatpush.msra.mxu0 0.0
    %344 = vmatpush.msra.mxu0 0.0
    %345 = vmatpush.msra.mxu0 0.0
    %346 = vmatpush.msra.mxu0 0.0
    %347 = vmatpush.msra.mxu0 0.0
    %348 = vmatpush.msra.mxu0 0.0
    %349 = vmatpush.msra.mxu0 0.0
    %350 = vmatpush.msra.mxu0 0.0
    %351 = vmatpush.msra.mxu0 0.0
    %352 = vmatpush.msra.mxu0 0.0
    %353 = vmatpush.msra.mxu0 0.0
    %354 = vmatpush.msra.mxu0 0.0
    %355 = vmatpush.msra.mxu0 0.0
    %356 = vmatpush.msra.mxu0 0.0
    %357 = vmatpush.msra.mxu0 %v313
    %358 = vmatpush.msra.mxu0 %v312
    %359 = vmatmul.f32.gmra.mxu0 %v320
    %v360 = vpop.f32.mrf.mxu0
    %v361 = vadd.f32 %v316, %v360
    %362 = vmatmul.f32.gmra.mxu0 %v323
    %v363 = vpop.f32.mrf.mxu0
    %v364 = vadd.f32 %v316, %v363
    %365 = vmatmul.f32.gmra.mxu0 %v326
    %v366 = vpop.f32.mrf.mxu0
    %v367 = vadd.f32 %v316, %v366
    %368 = vmatmul.f32.gmra.mxu0 %v329
    %v369 = vpop.f32.mrf.mxu0
    %v370 = vadd.f32 %v316, %v369
    %371 = vmatmul.f32.gmra.mxu0 %v332
    %v372 = vpop.f32.mrf.mxu0
    %v373 = vadd.f32 %v316, %v372
    %374 = vmatmul.f32.gmra.mxu0 %v335
    %v375 = vpop.f32.mrf.mxu0
    %v376 = vadd.f32 %v316, %v375
    %377 = vmatmul.f32.gmra.mxu0 %v338
    %v378 = vpop.f32.mrf.mxu0
    %v379 = vadd.f32 %v316, %v378
    %380 = vmatmul.f32.gmra.mxu0 %v341
    %v381 = vpop.f32.mrf.mxu0
    %v382 = vadd.f32 %v316, %v381
    %383 = vdwg.mxu0
    %vm384 = vcmask 523264
    %385 = vst.msk [vmem:[#allocation2] sm:$0xff] %vm384, %v361
    %386 = vst.msk [vmem:[#allocation2 + $0x8] sm:$0xff] %vm384, %v364
    %387 = vst.msk [vmem:[#allocation2 + $0x10] sm:$0xff] %vm384, %v367
    %388 = vst.msk [vmem:[#allocation2 + $0x18] sm:$0xff] %vm384, %v370
    %389 = vst.msk [vmem:[#allocation2 + $0x20] sm:$0xff] %vm384, %v373
    %390 = vst.msk [vmem:[#allocation2 + $0x28] sm:$0xff] %vm384, %v376
    %391 = vst.msk [vmem:[#allocation2 + $0x30] sm:$0xff] %vm384, %v379
    %392 = vst.msk [vmem:[#allocation2 + $0x38] sm:$0xff] %vm384, %v382
    %v393 = vld [vmem:[#allocation10] sm:$0xff]
    %v394 = vld [vmem:[#allocation10 + $0x8] sm:$0xff]
    %v395 = vld [vmem:[%s23] sm:$0x1]
    %v397 = vperm.slane %v395, 0
    %399 = vmatpush.msra.mxu0 0.0
    %400 = vmatpush.msra.mxu0 0.0
    %401 = vmatpush.msra.mxu0 0.0
    %402 = vmatpush.msra.mxu0 0.0
    %403 = vmatpush.msra.mxu0 0.0
    %404 = vmatpush.msra.mxu0 0.0
    %405 = vmatpush.msra.mxu0 0.0
    %406 = vmatpush.msra.mxu0 0.0
    %407 = vmatpush.msra.mxu0 0.0
    %408 = vmatpush.msra.mxu0 0.0
    %409 = vmatpush.msra.mxu0 0.0
    %410 = vmatpush.msra.mxu0 0.0
    %411 = vmatpush.msra.mxu0 0.0
    %412 = vmatpush.msra.mxu0 0.0
    %413 = vmatpush.msra.mxu0 %v394
    %414 = vmatpush.msra.mxu0 %v393
    %415 = vmatmul.f32.gmra.mxu0 %v320
    %v416 = vpop.f32.mrf.mxu0
    %v417 = vadd.f32 %v397, %v416
    %418 = vmatmul.f32.gmra.mxu0 %v323
    %v419 = vpop.f32.mrf.mxu0
    %v420 = vadd.f32 %v397, %v419
    %421 = vmatmul.f32.gmra.mxu0 %v326
    %v422 = vpop.f32.mrf.mxu0
    %v423 = vadd.f32 %v397, %v422
    %424 = vmatmul.f32.gmra.mxu0 %v329
    %v425 = vpop.f32.mrf.mxu0
    %v426 = vadd.f32 %v397, %v425
    %427 = vmatmul.f32.gmra.mxu0 %v332
    %v428 = vpop.f32.mrf.mxu0
    %v429 = vadd.f32 %v397, %v428
    %430 = vmatmul.f32.gmra.mxu0 %v335
    %v431 = vpop.f32.mrf.mxu0
    %v432 = vadd.f32 %v397, %v431
    %433 = vmatmul.f32.gmra.mxu0 %v338
    %v434 = vpop.f32.mrf.mxu0
    %v435 = vadd.f32 %v397, %v434
    %436 = vmatmul.f32.gmra.mxu0 %v341
    %v437 = vpop.f32.mrf.mxu0
    %v438 = vadd.f32 %v397, %v437
    %439 = vdwg.mxu0
    %440 = vst.msk [vmem:[#allocation3] sm:$0xff] %vm384, %v417
    %441 = vst.msk [vmem:[#allocation3 + $0x8] sm:$0xff] %vm384, %v420
    %442 = vst.msk [vmem:[#allocation3 + $0x10] sm:$0xff] %vm384, %v423
    %443 = vst.msk [vmem:[#allocation3 + $0x18] sm:$0xff] %vm384, %v426
    %444 = vst.msk [vmem:[#allocation3 + $0x20] sm:$0xff] %vm384, %v429
    %445 = vst.msk [vmem:[#allocation3 + $0x28] sm:$0xff] %vm384, %v432
    %446 = vst.msk [vmem:[#allocation3 + $0x30] sm:$0xff] %vm384, %v435
    %447 = vst.msk [vmem:[#allocation3 + $0x38] sm:$0xff] %vm384, %v438
    %v448 = vld [vmem:[#allocation12] sm:$0xff]
    %v449 = vld [vmem:[#allocation12 + $0x8] sm:$0xff]
    %v450 = vld [vmem:[%s25] sm:$0x1]
    %v452 = vperm.slane %v450, 0
    %454 = vmatpush.msra.mxu0 0.0
    %455 = vmatpush.msra.mxu0 0.0
    %456 = vmatpush.msra.mxu0 0.0
    %457 = vmatpush.msra.mxu0 0.0
    %458 = vmatpush.msra.mxu0 0.0
    %459 = vmatpush.msra.mxu0 0.0
    %460 = vmatpush.msra.mxu0 0.0
    %461 = vmatpush.msra.mxu0 0.0
    %462 = vmatpush.msra.mxu0 0.0
    %463 = vmatpush.msra.mxu0 0.0
    %464 = vmatpush.msra.mxu0 0.0
    %465 = vmatpush.msra.mxu0 0.0
    %466 = vmatpush.msra.mxu0 0.0
    %467 = vmatpush.msra.mxu0 0.0
    %468 = vmatpush.msra.mxu0 %v449
    %469 = vmatpush.msra.mxu0 %v448
    %470 = vmatmul.f32.gmra.mxu0 %v320
    %v471 = vpop.f32.mrf.mxu0
    %v472 = vadd.f32 %v452, %v471
    %473 = vmatmul.f32.gmra.mxu0 %v323
    %v474 = vpop.f32.mrf.mxu0
    %v475 = vadd.f32 %v452, %v474
    %476 = vmatmul.f32.gmra.mxu0 %v326
    %v477 = vpop.f32.mrf.mxu0
    %v478 = vadd.f32 %v452, %v477
    %479 = vmatmul.f32.gmra.mxu0 %v329
    %v480 = vpop.f32.mrf.mxu0
    %v481 = vadd.f32 %v452, %v480
    %482 = vmatmul.f32.gmra.mxu0 %v332
    %v483 = vpop.f32.mrf.mxu0
    %v484 = vadd.f32 %v452, %v483
    %485 = vmatmul.f32.gmra.mxu0 %v335
    %v486 = vpop.f32.mrf.mxu0
    %v487 = vadd.f32 %v452, %v486
    %488 = vmatmul.f32.gmra.mxu0 %v338
    %v489 = vpop.f32.mrf.mxu0
    %v490 = vadd.f32 %v452, %v489
    %491 = vmatmul.f32.gmra.mxu0 %v341
    %v492 = vpop.f32.mrf.mxu0
    %v493 = vadd.f32 %v452, %v492
    %494 = vdwg.mxu0
    %495 = vst.msk [vmem:[#allocation4] sm:$0xff] %vm384, %v472
    %496 = vst.msk [vmem:[#allocation4 + $0x8] sm:$0xff] %vm384, %v475
    %497 = vst.msk [vmem:[#allocation4 + $0x10] sm:$0xff] %vm384, %v478
    %498 = vst.msk [vmem:[#allocation4 + $0x18] sm:$0xff] %vm384, %v481
    %499 = vst.msk [vmem:[#allocation4 + $0x20] sm:$0xff] %vm384, %v484
    %500 = vst.msk [vmem:[#allocation4 + $0x28] sm:$0xff] %vm384, %v487
    %501 = vst.msk [vmem:[#allocation4 + $0x30] sm:$0xff] %vm384, %v490
    %502 = vst.msk [vmem:[#allocation4 + $0x38] sm:$0xff] %vm384, %v493
    %v503 = vld [vmem:[#allocation14] sm:$0xff]
    %v504 = vld [vmem:[#allocation14 + $0x8] sm:$0xff]
    %v505 = vld [vmem:[%s27] sm:$0x1]
    %v507 = vperm.slane %v505, 0
    %509 = vmatpush.msra.mxu0 0.0
    %510 = vmatpush.msra.mxu0 0.0
    %511 = vmatpush.msra.mxu0 0.0
    %512 = vmatpush.msra.mxu0 0.0
    %513 = vmatpush.msra.mxu0 0.0
    %514 = vmatpush.msra.mxu0 0.0
    %515 = vmatpush.msra.mxu0 0.0
    %516 = vmatpush.msra.mxu0 0.0
    %517 = vmatpush.msra.mxu0 0.0
    %518 = vmatpush.msra.mxu0 0.0
    %519 = vmatpush.msra.mxu0 0.0
    %520 = vmatpush.msra.mxu0 0.0
    %521 = vmatpush.msra.mxu0 0.0
    %522 = vmatpush.msra.mxu0 0.0
    %523 = vmatpush.msra.mxu0 %v504
    %524 = vmatpush.msra.mxu0 %v503
    %525 = vmatmul.f32.gmra.mxu0 %v320
    %v526 = vpop.f32.mrf.mxu0
    %v527 = vadd.f32 %v507, %v526
    %528 = vmatmul.f32.gmra.mxu0 %v323
    %v529 = vpop.f32.mrf.mxu0
    %v530 = vadd.f32 %v507, %v529
    %531 = vmatmul.f32.gmra.mxu0 %v326
    %v532 = vpop.f32.mrf.mxu0
    %v533 = vadd.f32 %v507, %v532
    %534 = vmatmul.f32.gmra.mxu0 %v329
    %v535 = vpop.f32.mrf.mxu0
    %v536 = vadd.f32 %v507, %v535
    %537 = vmatmul.f32.gmra.mxu0 %v332
    %v538 = vpop.f32.mrf.mxu0
    %v539 = vadd.f32 %v507, %v538
    %540 = vmatmul.f32.gmra.mxu0 %v335
    %v541 = vpop.f32.mrf.mxu0
    %v542 = vadd.f32 %v507, %v541
    %543 = vmatmul.f32.gmra.mxu0 %v338
    %v544 = vpop.f32.mrf.mxu0
    %v545 = vadd.f32 %v507, %v544
    %546 = vmatmul.f32.gmra.mxu0 %v341
    %v547 = vpop.f32.mrf.mxu0
    %v548 = vadd.f32 %v507, %v547
    %549 = vdwg.mxu0
    %550 = vst.msk [vmem:[#allocation5] sm:$0xff] %vm384, %v527
    %551 = vst.msk [vmem:[#allocation5 + $0x8] sm:$0xff] %vm384, %v530
    %552 = vst.msk [vmem:[#allocation5 + $0x10] sm:$0xff] %vm384, %v533
    %553 = vst.msk [vmem:[#allocation5 + $0x18] sm:$0xff] %vm384, %v536
    %554 = vst.msk [vmem:[#allocation5 + $0x20] sm:$0xff] %vm384, %v539
    %555 = vst.msk [vmem:[#allocation5 + $0x28] sm:$0xff] %vm384, %v542
    %556 = vst.msk [vmem:[#allocation5 + $0x30] sm:$0xff] %vm384, %v545
    %557 = vst.msk [vmem:[#allocation5 + $0x38] sm:$0xff] %vm384, %v548
    %v558 = vld [vmem:[%s13] sm:$0xff]
    %v559 = vld [vmem:[%s13 + $0x8] sm:$0xff]
    %v560 = vld [vmem:[%s13 + $0x10] sm:$0xff]
    %v561 = vld [vmem:[%s13 + $0x18] sm:$0xff]
    %v562 = vld [vmem:[%s13 + $0x20] sm:$0xff]
    %v563 = vld [vmem:[%s13 + $0x28] sm:$0xff]
    %v564 = vld [vmem:[%s13 + $0x30] sm:$0xff]
    %v565 = vld [vmem:[%s13 + $0x38] sm:$0xff]
    %v566 = vld [vmem:[%s15] sm:$0xff]
    %v567 = vld [vmem:[%s15 + $0x8] sm:$0xff]
    %v568 = vld [vmem:[%s15 + $0x10] sm:$0xff]
    %v569 = vld [vmem:[%s15 + $0x18] sm:$0xff]
    %v570 = vld [vmem:[%s15 + $0x20] sm:$0xff]
    %v571 = vld [vmem:[%s15 + $0x28] sm:$0xff]
    %v572 = vld [vmem:[%s15 + $0x30] sm:$0xff]
    %v573 = vld [vmem:[%s15 + $0x38] sm:$0xff]
    %v574 = vld [vmem:[%s17] sm:$0xff]
    %v575 = vld [vmem:[%s17 + $0x8] sm:$0xff]
    %v576 = vld [vmem:[%s17 + $0x10] sm:$0xff]
    %v577 = vld [vmem:[%s17 + $0x18] sm:$0xff]
    %v578 = vld [vmem:[%s17 + $0x20] sm:$0xff]
    %v579 = vld [vmem:[%s17 + $0x28] sm:$0xff]
    %v580 = vld [vmem:[%s17 + $0x30] sm:$0xff]
    %v581 = vld [vmem:[%s17 + $0x38] sm:$0xff]
    %v582 = vld [vmem:[%s19] sm:$0xff]
    %v583 = vld [vmem:[%s19 + $0x8] sm:$0xff]
    %v584 = vld [vmem:[%s19 + $0x10] sm:$0xff]
    %v585 = vld [vmem:[%s19 + $0x18] sm:$0xff]
    %v586 = vld [vmem:[%s19 + $0x20] sm:$0xff]
    %v587 = vld [vmem:[%s19 + $0x28] sm:$0xff]
    %v588 = vld [vmem:[%s19 + $0x30] sm:$0xff]
    %v589 = vld [vmem:[%s19 + $0x38] sm:$0xff]
    %s590 = scalar_lea.vmem [#allocation2], 56
    %v591 = vld [vmem:[%s590] sm:$0xff]
    %v593 = vsel %vm384, 0.0, 0
    %595 = vmatpush.msra.mxu0 0.0
    %596 = vmatpush.msra.mxu0 0.0
    %597 = vmatpush.msra.mxu0 0.0
    %598 = vmatpush.msra.mxu0 0.0
    %599 = vmatpush.msra.mxu0 0.0
    %600 = vmatpush.msra.mxu0 0.0
    %601 = vmatpush.msra.mxu0 0.0
    %602 = vmatpush.msra.mxu0 0.0
    %603 = vmatpush.msra.mxu0 %v565
    %604 = vmatpush.msra.mxu0 %v564
    %605 = vmatpush.msra.mxu0 %v563
    %606 = vmatpush.msra.mxu0 %v562
    %607 = vmatpush.msra.mxu0 %v561
    %608 = vmatpush.msra.mxu0 %v560
    %609 = vmatpush.msra.mxu0 %v559
    %610 = vmatpush.msra.mxu0 %v558
    %611 = vmatmul.f32.gmra.mxu0 %v593
    %v612 = vpop.f32.mrf.mxu0
    %v613 = vadd.f32 0.0, %v612
    %614 = vdwg.mxu0
    %v615 = vadd.f32 %v591, %v613
    %v616 = vxor.u32 %v615, 2147483648
    %v617 = vmul.f32 %v616, 1.442695
    %v618 = vpow.pop %v617
    %v619 = vadd.f32 %v618, 1.0
    %v620 = vrcp.pop %v619
    %v621 = vmul.f32 %v619, %v620
    %v622 = vsub.f32 1.0, %v621
    %v623 = vmul.f32 %v620, %v622
    %v624 = vadd.f32 %v620, %v623
    %vm625 = vweird.f32 %v619
    %vm626 = vweird.f32 %v620
    %vm627 = vmor %vm625, %vm626
    %v628 = vsel %vm627, %v620, %v624
    %v629 = vand.u32 2147483647, %v619
    %vm630 = vcmp.eq.f32.partialorder %v629, 8.507059e+37
    %v631 = vand.u32 %v619, 2147483648
    %v632 = vor.u32 1.1754944e-38, %v631
    %v633 = vsel %vm630, %v632, %v628
    %v634 = vmul.f32 1.0, %v633
    %s635 = scalar_lea.vmem [#allocation3], 56
    %v636 = vld [vmem:[%s635] sm:$0xff]
    %637 = vmatpush.msra.mxu0 0.0
    %638 = vmatpush.msra.mxu0 0.0
    %639 = vmatpush.msra.mxu0 0.0
    %640 = vmatpush.msra.mxu0 0.0
    %641 = vmatpush.msra.mxu0 0.0
    %642 = vmatpush.msra.mxu0 0.0
    %643 = vmatpush.msra.mxu0 0.0
    %644 = vmatpush.msra.mxu0 0.0
    %645 = vmatpush.msra.mxu0 %v573
    %646 = vmatpush.msra.mxu0 %v572
    %647 = vmatpush.msra.mxu0 %v571
    %648 = vmatpush.msra.mxu0 %v570
    %649 = vmatpush.msra.mxu0 %v569
    %650 = vmatpush.msra.mxu0 %v568
    %651 = vmatpush.msra.mxu0 %v567
    %652 = vmatpush.msra.mxu0 %v566
    %653 = vmatmul.f32.gmra.mxu0 %v593
    %v654 = vpop.f32.mrf.mxu0
    %v655 = vadd.f32 0.0, %v654
    %656 = vdwg.mxu0
    %v657 = vadd.f32 %v636, %v655
    %v658 = vxor.u32 %v657, 2147483648
    %v659 = vmul.f32 %v658, 1.442695
    %v660 = vpow.pop %v659
    %v661 = vadd.f32 %v660, 1.0
    %v662 = vrcp.pop %v661
    %v663 = vmul.f32 %v661, %v662
    %v664 = vsub.f32 1.0, %v663
    %v665 = vmul.f32 %v662, %v664
    %v666 = vadd.f32 %v662, %v665
    %vm667 = vweird.f32 %v661
    %vm668 = vweird.f32 %v662
    %vm669 = vmor %vm667, %vm668
    %v670 = vsel %vm669, %v662, %v666
    %v671 = vand.u32 2147483647, %v661
    %vm672 = vcmp.eq.f32.partialorder %v671, 8.507059e+37
    %v673 = vand.u32 %v661, 2147483648
    %v674 = vor.u32 1.1754944e-38, %v673
    %v675 = vsel %vm672, %v674, %v670
    %v676 = vmul.f32 1.0, %v675
    %s677 = scalar_lea.vmem [#allocation4], 56
    %v678 = vld [vmem:[%s677] sm:$0xff]
    %679 = vmatpush.msra.mxu0 0.0
    %680 = vmatpush.msra.mxu0 0.0
    %681 = vmatpush.msra.mxu0 0.0
    %682 = vmatpush.msra.mxu0 0.0
    %683 = vmatpush.msra.mxu0 0.0
    %684 = vmatpush.msra.mxu0 0.0
    %685 = vmatpush.msra.mxu0 0.0
    %686 = vmatpush.msra.mxu0 0.0
    %687 = vmatpush.msra.mxu0 %v581
    %688 = vmatpush.msra.mxu0 %v580
    %689 = vmatpush.msra.mxu0 %v579
    %690 = vmatpush.msra.mxu0 %v578
    %691 = vmatpush.msra.mxu0 %v577
    %692 = vmatpush.msra.mxu0 %v576
    %693 = vmatpush.msra.mxu0 %v575
    %694 = vmatpush.msra.mxu0 %v574
    %695 = vmatmul.f32.gmra.mxu0 %v593
    %v696 = vpop.f32.mrf.mxu0
    %v697 = vadd.f32 0.0, %v696
    %698 = vdwg.mxu0
    %v699 = vadd.f32 %v678, %v697
    %v700 = vtanh.pop %v699
    %s701 = scalar_lea.vmem [#allocation5], 56
    %v702 = vld [vmem:[%s701] sm:$0xff]
    %703 = vmatpush.msra.mxu0 0.0
    %704 = vmatpush.msra.mxu0 0.0
    %705 = vmatpush.msra.mxu0 0.0
    %706 = vmatpush.msra.mxu0 0.0
    %707 = vmatpush.msra.mxu0 0.0
    %708 = vmatpush.msra.mxu0 0.0
    %709 = vmatpush.msra.mxu0 0.0
    %710 = vmatpush.msra.mxu0 0.0
    %711 = vmatpush.msra.mxu0 %v589
    %712 = vmatpush.msra.mxu0 %v588
    %713 = vmatpush.msra.mxu0 %v587
    %714 = vmatpush.msra.mxu0 %v586
    %715 = vmatpush.msra.mxu0 %v585
    %716 = vmatpush.msra.mxu0 %v584
    %717 = vmatpush.msra.mxu0 %v583
    %718 = vmatpush.msra.mxu0 %v582
    %719 = vmatmul.f32.gmra.mxu0 %v593
    %v720 = vpop.f32.mrf.mxu0
    %v721 = vadd.f32 0.0, %v720
    %722 = vdwg.mxu0
    %v723 = vadd.f32 %v702, %v721
    %v724 = vxor.u32 %v723, 2147483648
    %v725 = vmul.f32 %v724, 1.442695
    %v726 = vpow.pop %v725
    %v727 = vadd.f32 %v726, 1.0
    %v728 = vrcp.pop %v727
    %v729 = vmul.f32 %v727, %v728
    %v730 = vsub.f32 1.0, %v729
    %v731 = vmul.f32 %v728, %v730
    %v732 = vadd.f32 %v728, %v731
    %vm733 = vweird.f32 %v727
    %vm734 = vweird.f32 %v728
    %vm735 = vmor %vm733, %vm734
    %v736 = vsel %vm735, %v728, %v732
    %v737 = vand.u32 2147483647, %v727
    %vm738 = vcmp.eq.f32.partialorder %v737, 8.507059e+37
    %v739 = vand.u32 %v727, 2147483648
    %v740 = vor.u32 1.1754944e-38, %v739
    %v741 = vsel %vm738, %v740, %v736
    %v742 = vmul.f32 1.0, %v741
    %v743 = vmul.f32 %v676, 0.0
    %v744 = vmul.f32 %v634, %v700
    %v745 = vadd.f32 %v743, %v744
    %v746 = vtanh.pop %v745
    %v747 = vmul.f32 %v742, %v746
    %s748 = scalar_lea.vmem [#allocation6], 56
    %749 = vst.msk [vmem:[%s748] sm:$0xff] %vm384, %v747
    %s750 = scalar_lea.vmem [#allocation2], 48
    %v751 = vld [vmem:[%s750] sm:$0xff]
    %v753 = vsel %vm384, %v747, 0
    %755 = vmatpush.msra.mxu0 0.0
    %756 = vmatpush.msra.mxu0 0.0
    %757 = vmatpush.msra.mxu0 0.0
    %758 = vmatpush.msra.mxu0 0.0
    %759 = vmatpush.msra.mxu0 0.0
    %760 = vmatpush.msra.mxu0 0.0
    %761 = vmatpush.msra.mxu0 0.0
    %762 = vmatpush.msra.mxu0 0.0
    %763 = vmatpush.msra.mxu0 %v565
    %764 = vmatpush.msra.mxu0 %v564
    %765 = vmatpush.msra.mxu0 %v563
    %766 = vmatpush.msra.mxu0 %v562
    %767 = vmatpush.msra.mxu0 %v561
    %768 = vmatpush.msra.mxu0 %v560
    %769 = vmatpush.msra.mxu0 %v559
    %770 = vmatpush.msra.mxu0 %v558
    %771 = vmatmul.f32.gmra.mxu0 %v753
    %v772 = vpop.f32.mrf.mxu0
    %v773 = vadd.f32 0.0, %v772
    %774 = vdwg.mxu0
    %v775 = vadd.f32 %v751, %v773
    %v776 = vxor.u32 %v775, 2147483648
    %v777 = vmul.f32 %v776, 1.442695
    %v778 = vpow.pop %v777
    %v779 = vadd.f32 %v778, 1.0
    %v780 = vrcp.pop %v779
    %v781 = vmul.f32 %v779, %v780
    %v782 = vsub.f32 1.0, %v781
    %v783 = vmul.f32 %v780, %v782
    %v784 = vadd.f32 %v780, %v783
    %vm785 = vweird.f32 %v779
    %vm786 = vweird.f32 %v780
    %vm787 = vmor %vm785, %vm786
    %v788 = vsel %vm787, %v780, %v784
    %v789 = vand.u32 2147483647, %v779
    %vm790 = vcmp.eq.f32.partialorder %v789, 8.507059e+37
    %v791 = vand.u32 %v779, 2147483648
    %v792 = vor.u32 1.1754944e-38, %v791
    %v793 = vsel %vm790, %v792, %v788
    %v794 = vmul.f32 1.0, %v793
    %s795 = scalar_lea.vmem [#allocation3], 48
    %v796 = vld [vmem:[%s795] sm:$0xff]
    %797 = vmatpush.msra.mxu0 0.0
    %798 = vmatpush.msra.mxu0 0.0
    %799 = vmatpush.msra.mxu0 0.0
    %800 = vmatpush.msra.mxu0 0.0
    %801 = vmatpush.msra.mxu0 0.0
    %802 = vmatpush.msra.mxu0 0.0
    %803 = vmatpush.msra.mxu0 0.0
    %804 = vmatpush.msra.mxu0 0.0
    %805 = vmatpush.msra.mxu0 %v573
    %806 = vmatpush.msra.mxu0 %v572
    %807 = vmatpush.msra.mxu0 %v571
    %808 = vmatpush.msra.mxu0 %v570
    %809 = vmatpush.msra.mxu0 %v569
    %810 = vmatpush.msra.mxu0 %v568
    %811 = vmatpush.msra.mxu0 %v567
    %812 = vmatpush.msra.mxu0 %v566
    %813 = vmatmul.f32.gmra.mxu0 %v753
    %v814 = vpop.f32.mrf.mxu0
    %v815 = vadd.f32 0.0, %v814
    %816 = vdwg.mxu0
    %v817 = vadd.f32 %v796, %v815
    %v818 = vxor.u32 %v817, 2147483648
    %v819 = vmul.f32 %v818, 1.442695
    %v820 = vpow.pop %v819
    %v821 = vadd.f32 %v820, 1.0
    %v822 = vrcp.pop %v821
    %v823 = vmul.f32 %v821, %v822
    %v824 = vsub.f32 1.0, %v823
    %v825 = vmul.f32 %v822, %v824
    %v826 = vadd.f32 %v822, %v825
    %vm827 = vweird.f32 %v821
    %vm828 = vweird.f32 %v822
    %vm829 = vmor %vm827, %vm828
    %v830 = vsel %vm829, %v822, %v826
    %v831 = vand.u32 2147483647, %v821
    %vm832 = vcmp.eq.f32.partialorder %v831, 8.507059e+37
    %v833 = vand.u32 %v821, 2147483648
    %v834 = vor.u32 1.1754944e-38, %v833
    %v835 = vsel %vm832, %v834, %v830
    %v836 = vmul.f32 1.0, %v835
    %s837 = scalar_lea.vmem [#allocation4], 48
    %v838 = vld [vmem:[%s837] sm:$0xff]
    %839 = vmatpush.msra.mxu0 0.0
    %840 = vmatpush.msra.mxu0 0.0
    %841 = vmatpush.msra.mxu0 0.0
    %842 = vmatpush.msra.mxu0 0.0
    %843 = vmatpush.msra.mxu0 0.0
    %844 = vmatpush.msra.mxu0 0.0
    %845 = vmatpush.msra.mxu0 0.0
    %846 = vmatpush.msra.mxu0 0.0
    %847 = vmatpush.msra.mxu0 %v581
    %848 = vmatpush.msra.mxu0 %v580
    %849 = vmatpush.msra.mxu0 %v579
    %850 = vmatpush.msra.mxu0 %v578
    %851 = vmatpush.msra.mxu0 %v577
    %852 = vmatpush.msra.mxu0 %v576
    %853 = vmatpush.msra.mxu0 %v575
    %854 = vmatpush.msra.mxu0 %v574
    %855 = vmatmul.f32.gmra.mxu0 %v753
    %v856 = vpop.f32.mrf.mxu0
    %v857 = vadd.f32 0.0, %v856
    %858 = vdwg.mxu0
    %v859 = vadd.f32 %v838, %v857
    %v860 = vtanh.pop %v859
    %s861 = scalar_lea.vmem [#allocation5], 48
    %v862 = vld [vmem:[%s861] sm:$0xff]
    %863 = vmatpush.msra.mxu0 0.0
    %864 = vmatpush.msra.mxu0 0.0
    %865 = vmatpush.msra.mxu0 0.0
    %866 = vmatpush.msra.mxu0 0.0
    %867 = vmatpush.msra.mxu0 0.0
    %868 = vmatpush.msra.mxu0 0.0
    %869 = vmatpush.msra.mxu0 0.0
    %870 = vmatpush.msra.mxu0 0.0
    %871 = vmatpush.msra.mxu0 %v589
    %872 = vmatpush.msra.mxu0 %v588
    %873 = vmatpush.msra.mxu0 %v587
    %874 = vmatpush.msra.mxu0 %v586
    %875 = vmatpush.msra.mxu0 %v585
    %876 = vmatpush.msra.mxu0 %v584
    %877 = vmatpush.msra.mxu0 %v583
    %878 = vmatpush.msra.mxu0 %v582
    %879 = vmatmul.f32.gmra.mxu0 %v753
    %v880 = vpop.f32.mrf.mxu0
    %v881 = vadd.f32 0.0, %v880
    %882 = vdwg.mxu0
    %v883 = vadd.f32 %v862, %v881
    %v884 = vxor.u32 %v883, 2147483648
    %v885 = vmul.f32 %v884, 1.442695
    %v886 = vpow.pop %v885
    %v887 = vadd.f32 %v886, 1.0
    %v888 = vrcp.pop %v887
    %v889 = vmul.f32 %v887, %v888
    %v890 = vsub.f32 1.0, %v889
    %v891 = vmul.f32 %v888, %v890
    %v892 = vadd.f32 %v888, %v891
    %vm893 = vweird.f32 %v887
    %vm894 = vweird.f32 %v888
    %vm895 = vmor %vm893, %vm894
    %v896 = vsel %vm895, %v888, %v892
    %v897 = vand.u32 2147483647, %v887
    %vm898 = vcmp.eq.f32.partialorder %v897, 8.507059e+37
    %v899 = vand.u32 %v887, 2147483648
    %v900 = vor.u32 1.1754944e-38, %v899
    %v901 = vsel %vm898, %v900, %v896
    %v902 = vmul.f32 1.0, %v901
    %v903 = vmul.f32 %v836, %v745
    %v904 = vmul.f32 %v794, %v860
    %v905 = vadd.f32 %v903, %v904
    %v906 = vtanh.pop %v905
    %v907 = vmul.f32 %v902, %v906
    %s908 = scalar_lea.vmem [#allocation6], 48
    %909 = vst.msk [vmem:[%s908] sm:$0xff] %vm384, %v907
    %s910 = scalar_lea.vmem [#allocation2], 40
    %v911 = vld [vmem:[%s910] sm:$0xff]
    %v913 = vsel %vm384, %v907, 0
    %915 = vmatpush.msra.mxu0 0.0
    %916 = vmatpush.msra.mxu0 0.0
    %917 = vmatpush.msra.mxu0 0.0
    %918 = vmatpush.msra.mxu0 0.0
    %919 = vmatpush.msra.mxu0 0.0
    %920 = vmatpush.msra.mxu0 0.0
    %921 = vmatpush.msra.mxu0 0.0
    %922 = vmatpush.msra.mxu0 0.0
    %923 = vmatpush.msra.mxu0 %v565
    %924 = vmatpush.msra.mxu0 %v564
    %925 = vmatpush.msra.mxu0 %v563
    %926 = vmatpush.msra.mxu0 %v562
    %927 = vmatpush.msra.mxu0 %v561
    %928 = vmatpush.msra.mxu0 %v560
    %929 = vmatpush.msra.mxu0 %v559
    %930 = vmatpush.msra.mxu0 %v558
    %931 = vmatmul.f32.gmra.mxu0 %v913
    %v932 = vpop.f32.mrf.mxu0
    %v933 = vadd.f32 0.0, %v932
    %934 = vdwg.mxu0
    %v935 = vadd.f32 %v911, %v933
    %v936 = vxor.u32 %v935, 2147483648
    %v937 = vmul.f32 %v936, 1.442695
    %v938 = vpow.pop %v937
    %v939 = vadd.f32 %v938, 1.0
    %v940 = vrcp.pop %v939
    %v941 = vmul.f32 %v939, %v940
    %v942 = vsub.f32 1.0, %v941
    %v943 = vmul.f32 %v940, %v942
    %v944 = vadd.f32 %v940, %v943
    %vm945 = vweird.f32 %v939
    %vm946 = vweird.f32 %v940
    %vm947 = vmor %vm945, %vm946
    %v948 = vsel %vm947, %v940, %v944
    %v949 = vand.u32 2147483647, %v939
    %vm950 = vcmp.eq.f32.partialorder %v949, 8.507059e+37
    %v951 = vand.u32 %v939, 2147483648
    %v952 = vor.u32 1.1754944e-38, %v951
    %v953 = vsel %vm950, %v952, %v948
    %v954 = vmul.f32 1.0, %v953
    %s955 = scalar_lea.vmem [#allocation3], 40
    %v956 = vld [vmem:[%s955] sm:$0xff]
    %957 = vmatpush.msra.mxu0 0.0
    %958 = vmatpush.msra.mxu0 0.0
    %959 = vmatpush.msra.mxu0 0.0
    %960 = vmatpush.msra.mxu0 0.0
    %961 = vmatpush.msra.mxu0 0.0
    %962 = vmatpush.msra.mxu0 0.0
    %963 = vmatpush.msra.mxu0 0.0
    %964 = vmatpush.msra.mxu0 0.0
    %965 = vmatpush.msra.mxu0 %v573
    %966 = vmatpush.msra.mxu0 %v572
    %967 = vmatpush.msra.mxu0 %v571
    %968 = vmatpush.msra.mxu0 %v570
    %969 = vmatpush.msra.mxu0 %v569
    %970 = vmatpush.msra.mxu0 %v568
    %971 = vmatpush.msra.mxu0 %v567
    %972 = vmatpush.msra.mxu0 %v566
    %973 = vmatmul.f32.gmra.mxu0 %v913
    %v974 = vpop.f32.mrf.mxu0
    %v975 = vadd.f32 0.0, %v974
    %976 = vdwg.mxu0
    %v977 = vadd.f32 %v956, %v975
    %v978 = vxor.u32 %v977, 2147483648
    %v979 = vmul.f32 %v978, 1.442695
    %v980 = vpow.pop %v979
    %v981 = vadd.f32 %v980, 1.0
    %v982 = vrcp.pop %v981
    %v983 = vmul.f32 %v981, %v982
    %v984 = vsub.f32 1.0, %v983
    %v985 = vmul.f32 %v982, %v984
    %v986 = vadd.f32 %v982, %v985
    %vm987 = vweird.f32 %v981
    %vm988 = vweird.f32 %v982
    %vm989 = vmor %vm987, %vm988
    %v990 = vsel %vm989, %v982, %v986
    %v991 = vand.u32 2147483647, %v981
    %vm992 = vcmp.eq.f32.partialorder %v991, 8.507059e+37
    %v993 = vand.u32 %v981, 2147483648
    %v994 = vor.u32 1.1754944e-38, %v993
    %v995 = vsel %vm992, %v994, %v990
    %v996 = vmul.f32 1.0, %v995
    %s997 = scalar_lea.vmem [#allocation4], 40
    %v998 = vld [vmem:[%s997] sm:$0xff]
    %999 = vmatpush.msra.mxu0 0.0
    %1000 = vmatpush.msra.mxu0 0.0
    %1001 = vmatpush.msra.mxu0 0.0
    %1002 = vmatpush.msra.mxu0 0.0
    %1003 = vmatpush.msra.mxu0 0.0
    %1004 = vmatpush.msra.mxu0 0.0
    %1005 = vmatpush.msra.mxu0 0.0
    %1006 = vmatpush.msra.mxu0 0.0
    %1007 = vmatpush.msra.mxu0 %v581
    %1008 = vmatpush.msra.mxu0 %v580
    %1009 = vmatpush.msra.mxu0 %v579
    %1010 = vmatpush.msra.mxu0 %v578
    %1011 = vmatpush.msra.mxu0 %v577
    %1012 = vmatpush.msra.mxu0 %v576
    %1013 = vmatpush.msra.mxu0 %v575
    %1014 = vmatpush.msra.mxu0 %v574
    %1015 = vmatmul.f32.gmra.mxu0 %v913
    %v1016 = vpop.f32.mrf.mxu0
    %v1017 = vadd.f32 0.0, %v1016
    %1018 = vdwg.mxu0
    %v1019 = vadd.f32 %v998, %v1017
    %v1020 = vtanh.pop %v1019
    %s1021 = scalar_lea.vmem [#allocation5], 40
    %v1022 = vld [vmem:[%s1021] sm:$0xff]
    %1023 = vmatpush.msra.mxu0 0.0
    %1024 = vmatpush.msra.mxu0 0.0
    %1025 = vmatpush.msra.mxu0 0.0
    %1026 = vmatpush.msra.mxu0 0.0
    %1027 = vmatpush.msra.mxu0 0.0
    %1028 = vmatpush.msra.mxu0 0.0
    %1029 = vmatpush.msra.mxu0 0.0
    %1030 = vmatpush.msra.mxu0 0.0
    %1031 = vmatpush.msra.mxu0 %v589
    %1032 = vmatpush.msra.mxu0 %v588
    %1033 = vmatpush.msra.mxu0 %v587
    %1034 = vmatpush.msra.mxu0 %v586
    %1035 = vmatpush.msra.mxu0 %v585
    %1036 = vmatpush.msra.mxu0 %v584
    %1037 = vmatpush.msra.mxu0 %v583
    %1038 = vmatpush.msra.mxu0 %v582
    %1039 = vmatmul.f32.gmra.mxu0 %v913
    %v1040 = vpop.f32.mrf.mxu0
    %v1041 = vadd.f32 0.0, %v1040
    %1042 = vdwg.mxu0
    %v1043 = vadd.f32 %v1022, %v1041
    %v1044 = vxor.u32 %v1043, 2147483648
    %v1045 = vmul.f32 %v1044, 1.442695
    %v1046 = vpow.pop %v1045
    %v1047 = vadd.f32 %v1046, 1.0
    %v1048 = vrcp.pop %v1047
    %v1049 = vmul.f32 %v1047, %v1048
    %v1050 = vsub.f32 1.0, %v1049
    %v1051 = vmul.f32 %v1048, %v1050
    %v1052 = vadd.f32 %v1048, %v1051
    %vm1053 = vweird.f32 %v1047
    %vm1054 = vweird.f32 %v1048
    %vm1055 = vmor %vm1053, %vm1054
    %v1056 = vsel %vm1055, %v1048, %v1052
    %v1057 = vand.u32 2147483647, %v1047
    %vm1058 = vcmp.eq.f32.partialorder %v1057, 8.507059e+37
    %v1059 = vand.u32 %v1047, 2147483648
    %v1060 = vor.u32 1.1754944e-38, %v1059
    %v1061 = vsel %vm1058, %v1060, %v1056
    %v1062 = vmul.f32 1.0, %v1061
    %v1063 = vmul.f32 %v996, %v905
    %v1064 = vmul.f32 %v954, %v1020
    %v1065 = vadd.f32 %v1063, %v1064
    %v1066 = vtanh.pop %v1065
    %v1067 = vmul.f32 %v1062, %v1066
    %s1068 = scalar_lea.vmem [#allocation6], 40
    %1069 = vst.msk [vmem:[%s1068] sm:$0xff] %vm384, %v1067
    %s1070 = scalar_lea.vmem [#allocation2], 32
    %v1071 = vld [vmem:[%s1070] sm:$0xff]
    %v1073 = vsel %vm384, %v1067, 0
    %1075 = vmatpush.msra.mxu0 0.0
    %1076 = vmatpush.msra.mxu0 0.0
    %1077 = vmatpush.msra.mxu0 0.0
    %1078 = vmatpush.msra.mxu0 0.0
    %1079 = vmatpush.msra.mxu0 0.0
    %1080 = vmatpush.msra.mxu0 0.0
    %1081 = vmatpush.msra.mxu0 0.0
    %1082 = vmatpush.msra.mxu0 0.0
    %1083 = vmatpush.msra.mxu0 %v565
    %1084 = vmatpush.msra.mxu0 %v564
    %1085 = vmatpush.msra.mxu0 %v563
    %1086 = vmatpush.msra.mxu0 %v562
    %1087 = vmatpush.msra.mxu0 %v561
    %1088 = vmatpush.msra.mxu0 %v560
    %1089 = vmatpush.msra.mxu0 %v559
    %1090 = vmatpush.msra.mxu0 %v558
    %1091 = vmatmul.f32.gmra.mxu0 %v1073
    %v1092 = vpop.f32.mrf.mxu0
    %v1093 = vadd.f32 0.0, %v1092
    %1094 = vdwg.mxu0
    %v1095 = vadd.f32 %v1071, %v1093
    %v1096 = vxor.u32 %v1095, 2147483648
    %v1097 = vmul.f32 %v1096, 1.442695
    %v1098 = vpow.pop %v1097
    %v1099 = vadd.f32 %v1098, 1.0
    %v1100 = vrcp.pop %v1099
    %v1101 = vmul.f32 %v1099, %v1100
    %v1102 = vsub.f32 1.0, %v1101
    %v1103 = vmul.f32 %v1100, %v1102
    %v1104 = vadd.f32 %v1100, %v1103
    %vm1105 = vweird.f32 %v1099
    %vm1106 = vweird.f32 %v1100
    %vm1107 = vmor %vm1105, %vm1106
    %v1108 = vsel %vm1107, %v1100, %v1104
    %v1109 = vand.u32 2147483647, %v1099
    %vm1110 = vcmp.eq.f32.partialorder %v1109, 8.507059e+37
    %v1111 = vand.u32 %v1099, 2147483648
    %v1112 = vor.u32 1.1754944e-38, %v1111
    %v1113 = vsel %vm1110, %v1112, %v1108
    %v1114 = vmul.f32 1.0, %v1113
    %s1115 = scalar_lea.vmem [#allocation3], 32
    %v1116 = vld [vmem:[%s1115] sm:$0xff]
    %1117 = vmatpush.msra.mxu0 0.0
    %1118 = vmatpush.msra.mxu0 0.0
    %1119 = vmatpush.msra.mxu0 0.0
    %1120 = vmatpush.msra.mxu0 0.0
    %1121 = vmatpush.msra.mxu0 0.0
    %1122 = vmatpush.msra.mxu0 0.0
    %1123 = vmatpush.msra.mxu0 0.0
    %1124 = vmatpush.msra.mxu0 0.0
    %1125 = vmatpush.msra.mxu0 %v573
    %1126 = vmatpush.msra.mxu0 %v572
    %1127 = vmatpush.msra.mxu0 %v571
    %1128 = vmatpush.msra.mxu0 %v570
    %1129 = vmatpush.msra.mxu0 %v569
    %1130 = vmatpush.msra.mxu0 %v568
    %1131 = vmatpush.msra.mxu0 %v567
    %1132 = vmatpush.msra.mxu0 %v566
    %1133 = vmatmul.f32.gmra.mxu0 %v1073
    %v1134 = vpop.f32.mrf.mxu0
    %v1135 = vadd.f32 0.0, %v1134
    %1136 = vdwg.mxu0
    %v1137 = vadd.f32 %v1116, %v1135
    %v1138 = vxor.u32 %v1137, 2147483648
    %v1139 = vmul.f32 %v1138, 1.442695
    %v1140 = vpow.pop %v1139
    %v1141 = vadd.f32 %v1140, 1.0
    %v1142 = vrcp.pop %v1141
    %v1143 = vmul.f32 %v1141, %v1142
    %v1144 = vsub.f32 1.0, %v1143
    %v1145 = vmul.f32 %v1142, %v1144
    %v1146 = vadd.f32 %v1142, %v1145
    %vm1147 = vweird.f32 %v1141
    %vm1148 = vweird.f32 %v1142
    %vm1149 = vmor %vm1147, %vm1148
    %v1150 = vsel %vm1149, %v1142, %v1146
    %v1151 = vand.u32 2147483647, %v1141
    %vm1152 = vcmp.eq.f32.partialorder %v1151, 8.507059e+37
    %v1153 = vand.u32 %v1141, 2147483648
    %v1154 = vor.u32 1.1754944e-38, %v1153
    %v1155 = vsel %vm1152, %v1154, %v1150
    %v1156 = vmul.f32 1.0, %v1155
    %s1157 = scalar_lea.vmem [#allocation4], 32
    %v1158 = vld [vmem:[%s1157] sm:$0xff]
    %1159 = vmatpush.msra.mxu0 0.0
    %1160 = vmatpush.msra.mxu0 0.0
    %1161 = vmatpush.msra.mxu0 0.0
    %1162 = vmatpush.msra.mxu0 0.0
    %1163 = vmatpush.msra.mxu0 0.0
    %1164 = vmatpush.msra.mxu0 0.0
    %1165 = vmatpush.msra.mxu0 0.0
    %1166 = vmatpush.msra.mxu0 0.0
    %1167 = vmatpush.msra.mxu0 %v581
    %1168 = vmatpush.msra.mxu0 %v580
    %1169 = vmatpush.msra.mxu0 %v579
    %1170 = vmatpush.msra.mxu0 %v578
    %1171 = vmatpush.msra.mxu0 %v577
    %1172 = vmatpush.msra.mxu0 %v576
    %1173 = vmatpush.msra.mxu0 %v575
    %1174 = vmatpush.msra.mxu0 %v574
    %1175 = vmatmul.f32.gmra.mxu0 %v1073
    %v1176 = vpop.f32.mrf.mxu0
    %v1177 = vadd.f32 0.0, %v1176
    %1178 = vdwg.mxu0
    %v1179 = vadd.f32 %v1158, %v1177
    %v1180 = vtanh.pop %v1179
    %s1181 = scalar_lea.vmem [#allocation5], 32
    %v1182 = vld [vmem:[%s1181] sm:$0xff]
    %1183 = vmatpush.msra.mxu0 0.0
    %1184 = vmatpush.msra.mxu0 0.0
    %1185 = vmatpush.msra.mxu0 0.0
    %1186 = vmatpush.msra.mxu0 0.0
    %1187 = vmatpush.msra.mxu0 0.0
    %1188 = vmatpush.msra.mxu0 0.0
    %1189 = vmatpush.msra.mxu0 0.0
    %1190 = vmatpush.msra.mxu0 0.0
    %1191 = vmatpush.msra.mxu0 %v589
    %1192 = vmatpush.msra.mxu0 %v588
    %1193 = vmatpush.msra.mxu0 %v587
    %1194 = vmatpush.msra.mxu0 %v586
    %1195 = vmatpush.msra.mxu0 %v585
    %1196 = vmatpush.msra.mxu0 %v584
    %1197 = vmatpush.msra.mxu0 %v583
    %1198 = vmatpush.msra.mxu0 %v582
    %1199 = vmatmul.f32.gmra.mxu0 %v1073
    %v1200 = vpop.f32.mrf.mxu0
    %v1201 = vadd.f32 0.0, %v1200
    %1202 = vdwg.mxu0
    %v1203 = vadd.f32 %v1182, %v1201
    %v1204 = vxor.u32 %v1203, 2147483648
    %v1205 = vmul.f32 %v1204, 1.442695
    %v1206 = vpow.pop %v1205
    %v1207 = vadd.f32 %v1206, 1.0
    %v1208 = vrcp.pop %v1207
    %v1209 = vmul.f32 %v1207, %v1208
    %v1210 = vsub.f32 1.0, %v1209
    %v1211 = vmul.f32 %v1208, %v1210
    %v1212 = vadd.f32 %v1208, %v1211
    %vm1213 = vweird.f32 %v1207
    %vm1214 = vweird.f32 %v1208
    %vm1215 = vmor %vm1213, %vm1214
    %v1216 = vsel %vm1215, %v1208, %v1212
    %v1217 = vand.u32 2147483647, %v1207
    %vm1218 = vcmp.eq.f32.partialorder %v1217, 8.507059e+37
    %v1219 = vand.u32 %v1207, 2147483648
    %v1220 = vor.u32 1.1754944e-38, %v1219
    %v1221 = vsel %vm1218, %v1220, %v1216
    %v1222 = vmul.f32 1.0, %v1221
    %v1223 = vmul.f32 %v1156, %v1065
    %v1224 = vmul.f32 %v1114, %v1180
    %v1225 = vadd.f32 %v1223, %v1224
    %v1226 = vtanh.pop %v1225
    %v1227 = vmul.f32 %v1222, %v1226
    %s1228 = scalar_lea.vmem [#allocation6], 32
    %1229 = vst.msk [vmem:[%s1228] sm:$0xff] %vm384, %v1227
    %s1230 = scalar_lea.vmem [#allocation2], 24
    %v1231 = vld [vmem:[%s1230] sm:$0xff]
    %v1233 = vsel %vm384, %v1227, 0
    %1235 = vmatpush.msra.mxu0 0.0
    %1236 = vmatpush.msra.mxu0 0.0
    %1237 = vmatpush.msra.mxu0 0.0
    %1238 = vmatpush.msra.mxu0 0.0
    %1239 = vmatpush.msra.mxu0 0.0
    %1240 = vmatpush.msra.mxu0 0.0
    %1241 = vmatpush.msra.mxu0 0.0
    %1242 = vmatpush.msra.mxu0 0.0
    %1243 = vmatpush.msra.mxu0 %v565
    %1244 = vmatpush.msra.mxu0 %v564
    %1245 = vmatpush.msra.mxu0 %v563
    %1246 = vmatpush.msra.mxu0 %v562
    %1247 = vmatpush.msra.mxu0 %v561
    %1248 = vmatpush.msra.mxu0 %v560
    %1249 = vmatpush.msra.mxu0 %v559
    %1250 = vmatpush.msra.mxu0 %v558
    %1251 = vmatmul.f32.gmra.mxu0 %v1233
    %v1252 = vpop.f32.mrf.mxu0
    %v1253 = vadd.f32 0.0, %v1252
    %1254 = vdwg.mxu0
    %v1255 = vadd.f32 %v1231, %v1253
    %v1256 = vxor.u32 %v1255, 2147483648
    %v1257 = vmul.f32 %v1256, 1.442695
    %v1258 = vpow.pop %v1257
    %v1259 = vadd.f32 %v1258, 1.0
    %v1260 = vrcp.pop %v1259
    %v1261 = vmul.f32 %v1259, %v1260
    %v1262 = vsub.f32 1.0, %v1261
    %v1263 = vmul.f32 %v1260, %v1262
    %v1264 = vadd.f32 %v1260, %v1263
    %vm1265 = vweird.f32 %v1259
    %vm1266 = vweird.f32 %v1260
    %vm1267 = vmor %vm1265, %vm1266
    %v1268 = vsel %vm1267, %v1260, %v1264
    %v1269 = vand.u32 2147483647, %v1259
    %vm1270 = vcmp.eq.f32.partialorder %v1269, 8.507059e+37
    %v1271 = vand.u32 %v1259, 2147483648
    %v1272 = vor.u32 1.1754944e-38, %v1271
    %v1273 = vsel %vm1270, %v1272, %v1268
    %v1274 = vmul.f32 1.0, %v1273
    %s1275 = scalar_lea.vmem [#allocation3], 24
    %v1276 = vld [vmem:[%s1275] sm:$0xff]
    %1277 = vmatpush.msra.mxu0 0.0
    %1278 = vmatpush.msra.mxu0 0.0
    %1279 = vmatpush.msra.mxu0 0.0
    %1280 = vmatpush.msra.mxu0 0.0
    %1281 = vmatpush.msra.mxu0 0.0
    %1282 = vmatpush.msra.mxu0 0.0
    %1283 = vmatpush.msra.mxu0 0.0
    %1284 = vmatpush.msra.mxu0 0.0
    %1285 = vmatpush.msra.mxu0 %v573
    %1286 = vmatpush.msra.mxu0 %v572
    %1287 = vmatpush.msra.mxu0 %v571
    %1288 = vmatpush.msra.mxu0 %v570
    %1289 = vmatpush.msra.mxu0 %v569
    %1290 = vmatpush.msra.mxu0 %v568
    %1291 = vmatpush.msra.mxu0 %v567
    %1292 = vmatpush.msra.mxu0 %v566
    %1293 = vmatmul.f32.gmra.mxu0 %v1233
    %v1294 = vpop.f32.mrf.mxu0
    %v1295 = vadd.f32 0.0, %v1294
    %1296 = vdwg.mxu0
    %v1297 = vadd.f32 %v1276, %v1295
    %v1298 = vxor.u32 %v1297, 2147483648
    %v1299 = vmul.f32 %v1298, 1.442695
    %v1300 = vpow.pop %v1299
    %v1301 = vadd.f32 %v1300, 1.0
    %v1302 = vrcp.pop %v1301
    %v1303 = vmul.f32 %v1301, %v1302
    %v1304 = vsub.f32 1.0, %v1303
    %v1305 = vmul.f32 %v1302, %v1304
    %v1306 = vadd.f32 %v1302, %v1305
    %vm1307 = vweird.f32 %v1301
    %vm1308 = vweird.f32 %v1302
    %vm1309 = vmor %vm1307, %vm1308
    %v1310 = vsel %vm1309, %v1302, %v1306
    %v1311 = vand.u32 2147483647, %v1301
    %vm1312 = vcmp.eq.f32.partialorder %v1311, 8.507059e+37
    %v1313 = vand.u32 %v1301, 2147483648
    %v1314 = vor.u32 1.1754944e-38, %v1313
    %v1315 = vsel %vm1312, %v1314, %v1310
    %v1316 = vmul.f32 1.0, %v1315
    %s1317 = scalar_lea.vmem [#allocation4], 24
    %v1318 = vld [vmem:[%s1317] sm:$0xff]
    %1319 = vmatpush.msra.mxu0 0.0
    %1320 = vmatpush.msra.mxu0 0.0
    %1321 = vmatpush.msra.mxu0 0.0
    %1322 = vmatpush.msra.mxu0 0.0
    %1323 = vmatpush.msra.mxu0 0.0
    %1324 = vmatpush.msra.mxu0 0.0
    %1325 = vmatpush.msra.mxu0 0.0
    %1326 = vmatpush.msra.mxu0 0.0
    %1327 = vmatpush.msra.mxu0 %v581
    %1328 = vmatpush.msra.mxu0 %v580
    %1329 = vmatpush.msra.mxu0 %v579
    %1330 = vmatpush.msra.mxu0 %v578
    %1331 = vmatpush.msra.mxu0 %v577
    %1332 = vmatpush.msra.mxu0 %v576
    %1333 = vmatpush.msra.mxu0 %v575
    %1334 = vmatpush.msra.mxu0 %v574
    %1335 = vmatmul.f32.gmra.mxu0 %v1233
    %v1336 = vpop.f32.mrf.mxu0
    %v1337 = vadd.f32 0.0, %v1336
    %1338 = vdwg.mxu0
    %v1339 = vadd.f32 %v1318, %v1337
    %v1340 = vtanh.pop %v1339
    %s1341 = scalar_lea.vmem [#allocation5], 24
    %v1342 = vld [vmem:[%s1341] sm:$0xff]
    %1343 = vmatpush.msra.mxu0 0.0
    %1344 = vmatpush.msra.mxu0 0.0
    %1345 = vmatpush.msra.mxu0 0.0
    %1346 = vmatpush.msra.mxu0 0.0
    %1347 = vmatpush.msra.mxu0 0.0
    %1348 = vmatpush.msra.mxu0 0.0
    %1349 = vmatpush.msra.mxu0 0.0
    %1350 = vmatpush.msra.mxu0 0.0
    %1351 = vmatpush.msra.mxu0 %v589
    %1352 = vmatpush.msra.mxu0 %v588
    %1353 = vmatpush.msra.mxu0 %v587
    %1354 = vmatpush.msra.mxu0 %v586
    %1355 = vmatpush.msra.mxu0 %v585
    %1356 = vmatpush.msra.mxu0 %v584
    %1357 = vmatpush.msra.mxu0 %v583
    %1358 = vmatpush.msra.mxu0 %v582
    %1359 = vmatmul.f32.gmra.mxu0 %v1233
    %v1360 = vpop.f32.mrf.mxu0
    %v1361 = vadd.f32 0.0, %v1360
    %1362 = vdwg.mxu0
    %v1363 = vadd.f32 %v1342, %v1361
    %v1364 = vxor.u32 %v1363, 2147483648
    %v1365 = vmul.f32 %v1364, 1.442695
    %v1366 = vpow.pop %v1365
    %v1367 = vadd.f32 %v1366, 1.0
    %v1368 = vrcp.pop %v1367
    %v1369 = vmul.f32 %v1367, %v1368
    %v1370 = vsub.f32 1.0, %v1369
    %v1371 = vmul.f32 %v1368, %v1370
    %v1372 = vadd.f32 %v1368, %v1371
    %vm1373 = vweird.f32 %v1367
    %vm1374 = vweird.f32 %v1368
    %vm1375 = vmor %vm1373, %vm1374
    %v1376 = vsel %vm1375, %v1368, %v1372
    %v1377 = vand.u32 2147483647, %v1367
    %vm1378 = vcmp.eq.f32.partialorder %v1377, 8.507059e+37
    %v1379 = vand.u32 %v1367, 2147483648
    %v1380 = vor.u32 1.1754944e-38, %v1379
    %v1381 = vsel %vm1378, %v1380, %v1376
    %v1382 = vmul.f32 1.0, %v1381
    %v1383 = vmul.f32 %v1316, %v1225
    %v1384 = vmul.f32 %v1274, %v1340
    %v1385 = vadd.f32 %v1383, %v1384
    %v1386 = vtanh.pop %v1385
    %v1387 = vmul.f32 %v1382, %v1386
    %s1388 = scalar_lea.vmem [#allocation6], 24
    %1389 = vst.msk [vmem:[%s1388] sm:$0xff] %vm384, %v1387
    %s1390 = scalar_lea.vmem [#allocation2], 16
    %v1391 = vld [vmem:[%s1390] sm:$0xff]
    %v1393 = vsel %vm384, %v1387, 0
    %1395 = vmatpush.msra.mxu0 0.0
    %1396 = vmatpush.msra.mxu0 0.0
    %1397 = vmatpush.msra.mxu0 0.0
    %1398 = vmatpush.msra.mxu0 0.0
    %1399 = vmatpush.msra.mxu0 0.0
    %1400 = vmatpush.msra.mxu0 0.0
    %1401 = vmatpush.msra.mxu0 0.0
    %1402 = vmatpush.msra.mxu0 0.0
    %1403 = vmatpush.msra.mxu0 %v565
    %1404 = vmatpush.msra.mxu0 %v564
    %1405 = vmatpush.msra.mxu0 %v563
    %1406 = vmatpush.msra.mxu0 %v562
    %1407 = vmatpush.msra.mxu0 %v561
    %1408 = vmatpush.msra.mxu0 %v560
    %1409 = vmatpush.msra.mxu0 %v559
    %1410 = vmatpush.msra.mxu0 %v558
    %1411 = vmatmul.f32.gmra.mxu0 %v1393
    %v1412 = vpop.f32.mrf.mxu0
    %v1413 = vadd.f32 0.0, %v1412
    %1414 = vdwg.mxu0
    %v1415 = vadd.f32 %v1391, %v1413
    %v1416 = vxor.u32 %v1415, 2147483648
    %v1417 = vmul.f32 %v1416, 1.442695
    %v1418 = vpow.pop %v1417
    %v1419 = vadd.f32 %v1418, 1.0
    %v1420 = vrcp.pop %v1419
    %v1421 = vmul.f32 %v1419, %v1420
    %v1422 = vsub.f32 1.0, %v1421
    %v1423 = vmul.f32 %v1420, %v1422
    %v1424 = vadd.f32 %v1420, %v1423
    %vm1425 = vweird.f32 %v1419
    %vm1426 = vweird.f32 %v1420
    %vm1427 = vmor %vm1425, %vm1426
    %v1428 = vsel %vm1427, %v1420, %v1424
    %v1429 = vand.u32 2147483647, %v1419
    %vm1430 = vcmp.eq.f32.partialorder %v1429, 8.507059e+37
    %v1431 = vand.u32 %v1419, 2147483648
    %v1432 = vor.u32 1.1754944e-38, %v1431
    %v1433 = vsel %vm1430, %v1432, %v1428
    %v1434 = vmul.f32 1.0, %v1433
    %s1435 = scalar_lea.vmem [#allocation3], 16
    %v1436 = vld [vmem:[%s1435] sm:$0xff]
    %1437 = vmatpush.msra.mxu0 0.0
    %1438 = vmatpush.msra.mxu0 0.0
    %1439 = vmatpush.msra.mxu0 0.0
    %1440 = vmatpush.msra.mxu0 0.0
    %1441 = vmatpush.msra.mxu0 0.0
    %1442 = vmatpush.msra.mxu0 0.0
    %1443 = vmatpush.msra.mxu0 0.0
    %1444 = vmatpush.msra.mxu0 0.0
    %1445 = vmatpush.msra.mxu0 %v573
    %1446 = vmatpush.msra.mxu0 %v572
    %1447 = vmatpush.msra.mxu0 %v571
    %1448 = vmatpush.msra.mxu0 %v570
    %1449 = vmatpush.msra.mxu0 %v569
    %1450 = vmatpush.msra.mxu0 %v568
    %1451 = vmatpush.msra.mxu0 %v567
    %1452 = vmatpush.msra.mxu0 %v566
    %1453 = vmatmul.f32.gmra.mxu0 %v1393
    %v1454 = vpop.f32.mrf.mxu0
    %v1455 = vadd.f32 0.0, %v1454
    %1456 = vdwg.mxu0
    %v1457 = vadd.f32 %v1436, %v1455
    %v1458 = vxor.u32 %v1457, 2147483648
    %v1459 = vmul.f32 %v1458, 1.442695
    %v1460 = vpow.pop %v1459
    %v1461 = vadd.f32 %v1460, 1.0
    %v1462 = vrcp.pop %v1461
    %v1463 = vmul.f32 %v1461, %v1462
    %v1464 = vsub.f32 1.0, %v1463
    %v1465 = vmul.f32 %v1462, %v1464
    %v1466 = vadd.f32 %v1462, %v1465
    %vm1467 = vweird.f32 %v1461
    %vm1468 = vweird.f32 %v1462
    %vm1469 = vmor %vm1467, %vm1468
    %v1470 = vsel %vm1469, %v1462, %v1466
    %v1471 = vand.u32 2147483647, %v1461
    %vm1472 = vcmp.eq.f32.partialorder %v1471, 8.507059e+37
    %v1473 = vand.u32 %v1461, 2147483648
    %v1474 = vor.u32 1.1754944e-38, %v1473
    %v1475 = vsel %vm1472, %v1474, %v1470
    %v1476 = vmul.f32 1.0, %v1475
    %s1477 = scalar_lea.vmem [#allocation4], 16
    %v1478 = vld [vmem:[%s1477] sm:$0xff]
    %1479 = vmatpush.msra.mxu0 0.0
    %1480 = vmatpush.msra.mxu0 0.0
    %1481 = vmatpush.msra.mxu0 0.0
    %1482 = vmatpush.msra.mxu0 0.0
    %1483 = vmatpush.msra.mxu0 0.0
    %1484 = vmatpush.msra.mxu0 0.0
    %1485 = vmatpush.msra.mxu0 0.0
    %1486 = vmatpush.msra.mxu0 0.0
    %1487 = vmatpush.msra.mxu0 %v581
    %1488 = vmatpush.msra.mxu0 %v580
    %1489 = vmatpush.msra.mxu0 %v579
    %1490 = vmatpush.msra.mxu0 %v578
    %1491 = vmatpush.msra.mxu0 %v577
    %1492 = vmatpush.msra.mxu0 %v576
    %1493 = vmatpush.msra.mxu0 %v575
    %1494 = vmatpush.msra.mxu0 %v574
    %1495 = vmatmul.f32.gmra.mxu0 %v1393
    %v1496 = vpop.f32.mrf.mxu0
    %v1497 = vadd.f32 0.0, %v1496
    %1498 = vdwg.mxu0
    %v1499 = vadd.f32 %v1478, %v1497
    %v1500 = vtanh.pop %v1499
    %s1501 = scalar_lea.vmem [#allocation5], 16
    %v1502 = vld [vmem:[%s1501] sm:$0xff]
    %1503 = vmatpush.msra.mxu0 0.0
    %1504 = vmatpush.msra.mxu0 0.0
    %1505 = vmatpush.msra.mxu0 0.0
    %1506 = vmatpush.msra.mxu0 0.0
    %1507 = vmatpush.msra.mxu0 0.0
    %1508 = vmatpush.msra.mxu0 0.0
    %1509 = vmatpush.msra.mxu0 0.0
    %1510 = vmatpush.msra.mxu0 0.0
    %1511 = vmatpush.msra.mxu0 %v589
    %1512 = vmatpush.msra.mxu0 %v588
    %1513 = vmatpush.msra.mxu0 %v587
    %1514 = vmatpush.msra.mxu0 %v586
    %1515 = vmatpush.msra.mxu0 %v585
    %1516 = vmatpush.msra.mxu0 %v584
    %1517 = vmatpush.msra.mxu0 %v583
    %1518 = vmatpush.msra.mxu0 %v582
    %1519 = vmatmul.f32.gmra.mxu0 %v1393
    %v1520 = vpop.f32.mrf.mxu0
    %v1521 = vadd.f32 0.0, %v1520
    %1522 = vdwg.mxu0
    %v1523 = vadd.f32 %v1502, %v1521
    %v1524 = vxor.u32 %v1523, 2147483648
    %v1525 = vmul.f32 %v1524, 1.442695
    %v1526 = vpow.pop %v1525
    %v1527 = vadd.f32 %v1526, 1.0
    %v1528 = vrcp.pop %v1527
    %v1529 = vmul.f32 %v1527, %v1528
    %v1530 = vsub.f32 1.0, %v1529
    %v1531 = vmul.f32 %v1528, %v1530
    %v1532 = vadd.f32 %v1528, %v1531
    %vm1533 = vweird.f32 %v1527
    %vm1534 = vweird.f32 %v1528
    %vm1535 = vmor %vm1533, %vm1534
    %v1536 = vsel %vm1535, %v1528, %v1532
    %v1537 = vand.u32 2147483647, %v1527
    %vm1538 = vcmp.eq.f32.partialorder %v1537, 8.507059e+37
    %v1539 = vand.u32 %v1527, 2147483648
    %v1540 = vor.u32 1.1754944e-38, %v1539
    %v1541 = vsel %vm1538, %v1540, %v1536
    %v1542 = vmul.f32 1.0, %v1541
    %v1543 = vmul.f32 %v1476, %v1385
    %v1544 = vmul.f32 %v1434, %v1500
    %v1545 = vadd.f32 %v1543, %v1544
    %v1546 = vtanh.pop %v1545
    %v1547 = vmul.f32 %v1542, %v1546
    %s1548 = scalar_lea.vmem [#allocation6], 16
    %1549 = vst.msk [vmem:[%s1548] sm:$0xff] %vm384, %v1547
    %s1550 = scalar_lea.vmem [#allocation2], 8
    %v1551 = vld [vmem:[%s1550] sm:$0xff]
    %v1553 = vsel %vm384, %v1547, 0
    %1555 = vmatpush.msra.mxu0 0.0
    %1556 = vmatpush.msra.mxu0 0.0
    %1557 = vmatpush.msra.mxu0 0.0
    %1558 = vmatpush.msra.mxu0 0.0
    %1559 = vmatpush.msra.mxu0 0.0
    %1560 = vmatpush.msra.mxu0 0.0
    %1561 = vmatpush.msra.mxu0 0.0
    %1562 = vmatpush.msra.mxu0 0.0
    %1563 = vmatpush.msra.mxu0 %v565
    %1564 = vmatpush.msra.mxu0 %v564
    %1565 = vmatpush.msra.mxu0 %v563
    %1566 = vmatpush.msra.mxu0 %v562
    %1567 = vmatpush.msra.mxu0 %v561
    %1568 = vmatpush.msra.mxu0 %v560
    %1569 = vmatpush.msra.mxu0 %v559
    %1570 = vmatpush.msra.mxu0 %v558
    %1571 = vmatmul.f32.gmra.mxu0 %v1553
    %v1572 = vpop.f32.mrf.mxu0
    %v1573 = vadd.f32 0.0, %v1572
    %1574 = vdwg.mxu0
    %v1575 = vadd.f32 %v1551, %v1573
    %v1576 = vxor.u32 %v1575, 2147483648
    %v1577 = vmul.f32 %v1576, 1.442695
    %v1578 = vpow.pop %v1577
    %v1579 = vadd.f32 %v1578, 1.0
    %v1580 = vrcp.pop %v1579
    %v1581 = vmul.f32 %v1579, %v1580
    %v1582 = vsub.f32 1.0, %v1581
    %v1583 = vmul.f32 %v1580, %v1582
    %v1584 = vadd.f32 %v1580, %v1583
    %vm1585 = vweird.f32 %v1579
    %vm1586 = vweird.f32 %v1580
    %vm1587 = vmor %vm1585, %vm1586
    %v1588 = vsel %vm1587, %v1580, %v1584
    %v1589 = vand.u32 2147483647, %v1579
    %vm1590 = vcmp.eq.f32.partialorder %v1589, 8.507059e+37
    %v1591 = vand.u32 %v1579, 2147483648
    %v1592 = vor.u32 1.1754944e-38, %v1591
    %v1593 = vsel %vm1590, %v1592, %v1588
    %v1594 = vmul.f32 1.0, %v1593
    %s1595 = scalar_lea.vmem [#allocation3], 8
    %v1596 = vld [vmem:[%s1595] sm:$0xff]
    %1597 = vmatpush.msra.mxu0 0.0
    %1598 = vmatpush.msra.mxu0 0.0
    %1599 = vmatpush.msra.mxu0 0.0
    %1600 = vmatpush.msra.mxu0 0.0
    %1601 = vmatpush.msra.mxu0 0.0
    %1602 = vmatpush.msra.mxu0 0.0
    %1603 = vmatpush.msra.mxu0 0.0
    %1604 = vmatpush.msra.mxu0 0.0
    %1605 = vmatpush.msra.mxu0 %v573
    %1606 = vmatpush.msra.mxu0 %v572
    %1607 = vmatpush.msra.mxu0 %v571
    %1608 = vmatpush.msra.mxu0 %v570
    %1609 = vmatpush.msra.mxu0 %v569
    %1610 = vmatpush.msra.mxu0 %v568
    %1611 = vmatpush.msra.mxu0 %v567
    %1612 = vmatpush.msra.mxu0 %v566
    %1613 = vmatmul.f32.gmra.mxu0 %v1553
    %v1614 = vpop.f32.mrf.mxu0
    %v1615 = vadd.f32 0.0, %v1614
    %1616 = vdwg.mxu0
    %v1617 = vadd.f32 %v1596, %v1615
    %v1618 = vxor.u32 %v1617, 2147483648
    %v1619 = vmul.f32 %v1618, 1.442695
    %v1620 = vpow.pop %v1619
    %v1621 = vadd.f32 %v1620, 1.0
    %v1622 = vrcp.pop %v1621
    %v1623 = vmul.f32 %v1621, %v1622
    %v1624 = vsub.f32 1.0, %v1623
    %v1625 = vmul.f32 %v1622, %v1624
    %v1626 = vadd.f32 %v1622, %v1625
    %vm1627 = vweird.f32 %v1621
    %vm1628 = vweird.f32 %v1622
    %vm1629 = vmor %vm1627, %vm1628
    %v1630 = vsel %vm1629, %v1622, %v1626
    %v1631 = vand.u32 2147483647, %v1621
    %vm1632 = vcmp.eq.f32.partialorder %v1631, 8.507059e+37
    %v1633 = vand.u32 %v1621, 2147483648
    %v1634 = vor.u32 1.1754944e-38, %v1633
    %v1635 = vsel %vm1632, %v1634, %v1630
    %v1636 = vmul.f32 1.0, %v1635
    %s1637 = scalar_lea.vmem [#allocation4], 8
    %v1638 = vld [vmem:[%s1637] sm:$0xff]
    %1639 = vmatpush.msra.mxu0 0.0
    %1640 = vmatpush.msra.mxu0 0.0
    %1641 = vmatpush.msra.mxu0 0.0
    %1642 = vmatpush.msra.mxu0 0.0
    %1643 = vmatpush.msra.mxu0 0.0
    %1644 = vmatpush.msra.mxu0 0.0
    %1645 = vmatpush.msra.mxu0 0.0
    %1646 = vmatpush.msra.mxu0 0.0
    %1647 = vmatpush.msra.mxu0 %v581
    %1648 = vmatpush.msra.mxu0 %v580
    %1649 = vmatpush.msra.mxu0 %v579
    %1650 = vmatpush.msra.mxu0 %v578
    %1651 = vmatpush.msra.mxu0 %v577
    %1652 = vmatpush.msra.mxu0 %v576
    %1653 = vmatpush.msra.mxu0 %v575
    %1654 = vmatpush.msra.mxu0 %v574
    %1655 = vmatmul.f32.gmra.mxu0 %v1553
    %v1656 = vpop.f32.mrf.mxu0
    %v1657 = vadd.f32 0.0, %v1656
    %1658 = vdwg.mxu0
    %v1659 = vadd.f32 %v1638, %v1657
    %v1660 = vtanh.pop %v1659
    %s1661 = scalar_lea.vmem [#allocation5], 8
    %v1662 = vld [vmem:[%s1661] sm:$0xff]
    %1663 = vmatpush.msra.mxu0 0.0
    %1664 = vmatpush.msra.mxu0 0.0
    %1665 = vmatpush.msra.mxu0 0.0
    %1666 = vmatpush.msra.mxu0 0.0
    %1667 = vmatpush.msra.mxu0 0.0
    %1668 = vmatpush.msra.mxu0 0.0
    %1669 = vmatpush.msra.mxu0 0.0
    %1670 = vmatpush.msra.mxu0 0.0
    %1671 = vmatpush.msra.mxu0 %v589
    %1672 = vmatpush.msra.mxu0 %v588
    %1673 = vmatpush.msra.mxu0 %v587
    %1674 = vmatpush.msra.mxu0 %v586
    %1675 = vmatpush.msra.mxu0 %v585
    %1676 = vmatpush.msra.mxu0 %v584
    %1677 = vmatpush.msra.mxu0 %v583
    %1678 = vmatpush.msra.mxu0 %v582
    %1679 = vmatmul.f32.gmra.mxu0 %v1553
    %v1680 = vpop.f32.mrf.mxu0
    %v1681 = vadd.f32 0.0, %v1680
    %1682 = vdwg.mxu0
    %v1683 = vadd.f32 %v1662, %v1681
    %v1684 = vxor.u32 %v1683, 2147483648
    %v1685 = vmul.f32 %v1684, 1.442695
    %v1686 = vpow.pop %v1685
    %v1687 = vadd.f32 %v1686, 1.0
    %v1688 = vrcp.pop %v1687
    %v1689 = vmul.f32 %v1687, %v1688
    %v1690 = vsub.f32 1.0, %v1689
    %v1691 = vmul.f32 %v1688, %v1690
    %v1692 = vadd.f32 %v1688, %v1691
    %vm1693 = vweird.f32 %v1687
    %vm1694 = vweird.f32 %v1688
    %vm1695 = vmor %vm1693, %vm1694
    %v1696 = vsel %vm1695, %v1688, %v1692
    %v1697 = vand.u32 2147483647, %v1687
    %vm1698 = vcmp.eq.f32.partialorder %v1697, 8.507059e+37
    %v1699 = vand.u32 %v1687, 2147483648
    %v1700 = vor.u32 1.1754944e-38, %v1699
    %v1701 = vsel %vm1698, %v1700, %v1696
    %v1702 = vmul.f32 1.0, %v1701
    %v1703 = vmul.f32 %v1636, %v1545
    %v1704 = vmul.f32 %v1594, %v1660
    %v1705 = vadd.f32 %v1703, %v1704
    %v1706 = vtanh.pop %v1705
    %v1707 = vmul.f32 %v1702, %v1706
    %s1708 = scalar_lea.vmem [#allocation6], 8
    %1709 = vst.msk [vmem:[%s1708] sm:$0xff] %vm384, %v1707
    %v1710 = vld [vmem:[#allocation2] sm:$0xff]
    %v1712 = vsel %vm384, %v1707, 0
    %1714 = vmatpush.msra.mxu0 0.0
    %1715 = vmatpush.msra.mxu0 0.0
    %1716 = vmatpush.msra.mxu0 0.0
    %1717 = vmatpush.msra.mxu0 0.0
    %1718 = vmatpush.msra.mxu0 0.0
    %1719 = vmatpush.msra.mxu0 0.0
    %1720 = vmatpush.msra.mxu0 0.0
    %1721 = vmatpush.msra.mxu0 0.0
    %1722 = vmatpush.msra.mxu0 %v565
    %1723 = vmatpush.msra.mxu0 %v564
    %1724 = vmatpush.msra.mxu0 %v563
    %1725 = vmatpush.msra.mxu0 %v562
    %1726 = vmatpush.msra.mxu0 %v561
    %1727 = vmatpush.msra.mxu0 %v560
    %1728 = vmatpush.msra.mxu0 %v559
    %1729 = vmatpush.msra.mxu0 %v558
    %1730 = vmatmul.f32.gmra.mxu0 %v1712
    %v1731 = vpop.f32.mrf.mxu0
    %v1732 = vadd.f32 0.0, %v1731
    %1733 = vdwg.mxu0
    %v1734 = vadd.f32 %v1710, %v1732
    %v1735 = vxor.u32 %v1734, 2147483648
    %v1736 = vmul.f32 %v1735, 1.442695
    %v1737 = vpow.pop %v1736
    %v1738 = vadd.f32 %v1737, 1.0
    %v1739 = vrcp.pop %v1738
    %v1740 = vmul.f32 %v1738, %v1739
    %v1741 = vsub.f32 1.0, %v1740
    %v1742 = vmul.f32 %v1739, %v1741
    %v1743 = vadd.f32 %v1739, %v1742
    %vm1744 = vweird.f32 %v1738
    %vm1745 = vweird.f32 %v1739
    %vm1746 = vmor %vm1744, %vm1745
    %v1747 = vsel %vm1746, %v1739, %v1743
    %v1748 = vand.u32 2147483647, %v1738
    %vm1749 = vcmp.eq.f32.partialorder %v1748, 8.507059e+37
    %v1750 = vand.u32 %v1738, 2147483648
    %v1751 = vor.u32 1.1754944e-38, %v1750
    %v1752 = vsel %vm1749, %v1751, %v1747
    %v1753 = vmul.f32 1.0, %v1752
    %v1754 = vld [vmem:[#allocation3] sm:$0xff]
    %1755 = vmatpush.msra.mxu0 0.0
    %1756 = vmatpush.msra.mxu0 0.0
    %1757 = vmatpush.msra.mxu0 0.0
    %1758 = vmatpush.msra.mxu0 0.0
    %1759 = vmatpush.msra.mxu0 0.0
    %1760 = vmatpush.msra.mxu0 0.0
    %1761 = vmatpush.msra.mxu0 0.0
    %1762 = vmatpush.msra.mxu0 0.0
    %1763 = vmatpush.msra.mxu0 %v573
    %1764 = vmatpush.msra.mxu0 %v572
    %1765 = vmatpush.msra.mxu0 %v571
    %1766 = vmatpush.msra.mxu0 %v570
    %1767 = vmatpush.msra.mxu0 %v569
    %1768 = vmatpush.msra.mxu0 %v568
    %1769 = vmatpush.msra.mxu0 %v567
    %1770 = vmatpush.msra.mxu0 %v566
    %1771 = vmatmul.f32.gmra.mxu0 %v1712
    %v1772 = vpop.f32.mrf.mxu0
    %v1773 = vadd.f32 0.0, %v1772
    %1774 = vdwg.mxu0
    %v1775 = vadd.f32 %v1754, %v1773
    %v1776 = vxor.u32 %v1775, 2147483648
    %v1777 = vmul.f32 %v1776, 1.442695
    %v1778 = vpow.pop %v1777
    %v1779 = vadd.f32 %v1778, 1.0
    %v1780 = vrcp.pop %v1779
    %v1781 = vmul.f32 %v1779, %v1780
    %v1782 = vsub.f32 1.0, %v1781
    %v1783 = vmul.f32 %v1780, %v1782
    %v1784 = vadd.f32 %v1780, %v1783
    %vm1785 = vweird.f32 %v1779
    %vm1786 = vweird.f32 %v1780
    %vm1787 = vmor %vm1785, %vm1786
    %v1788 = vsel %vm1787, %v1780, %v1784
    %v1789 = vand.u32 2147483647, %v1779
    %vm1790 = vcmp.eq.f32.partialorder %v1789, 8.507059e+37
    %v1791 = vand.u32 %v1779, 2147483648
    %v1792 = vor.u32 1.1754944e-38, %v1791
    %v1793 = vsel %vm1790, %v1792, %v1788
    %v1794 = vmul.f32 1.0, %v1793
    %v1795 = vld [vmem:[#allocation4] sm:$0xff]
    %1796 = vmatpush.msra.mxu0 0.0
    %1797 = vmatpush.msra.mxu0 0.0
    %1798 = vmatpush.msra.mxu0 0.0
    %1799 = vmatpush.msra.mxu0 0.0
    %1800 = vmatpush.msra.mxu0 0.0
    %1801 = vmatpush.msra.mxu0 0.0
    %1802 = vmatpush.msra.mxu0 0.0
    %1803 = vmatpush.msra.mxu0 0.0
    %1804 = vmatpush.msra.mxu0 %v581
    %1805 = vmatpush.msra.mxu0 %v580
    %1806 = vmatpush.msra.mxu0 %v579
    %1807 = vmatpush.msra.mxu0 %v578
    %1808 = vmatpush.msra.mxu0 %v577
    %1809 = vmatpush.msra.mxu0 %v576
    %1810 = vmatpush.msra.mxu0 %v575
    %1811 = vmatpush.msra.mxu0 %v574
    %1812 = vmatmul.f32.gmra.mxu0 %v1712
    %v1813 = vpop.f32.mrf.mxu0
    %v1814 = vadd.f32 0.0, %v1813
    %1815 = vdwg.mxu0
    %v1816 = vadd.f32 %v1795, %v1814
    %v1817 = vtanh.pop %v1816
    %v1818 = vld [vmem:[#allocation5] sm:$0xff]
    %1819 = vmatpush.msra.mxu0 0.0
    %1820 = vmatpush.msra.mxu0 0.0
    %1821 = vmatpush.msra.mxu0 0.0
    %1822 = vmatpush.msra.mxu0 0.0
    %1823 = vmatpush.msra.mxu0 0.0
    %1824 = vmatpush.msra.mxu0 0.0
    %1825 = vmatpush.msra.mxu0 0.0
    %1826 = vmatpush.msra.mxu0 0.0
    %1827 = vmatpush.msra.mxu0 %v589
    %1828 = vmatpush.msra.mxu0 %v588
    %1829 = vmatpush.msra.mxu0 %v587
    %1830 = vmatpush.msra.mxu0 %v586
    %1831 = vmatpush.msra.mxu0 %v585
    %1832 = vmatpush.msra.mxu0 %v584
    %1833 = vmatpush.msra.mxu0 %v583
    %1834 = vmatpush.msra.mxu0 %v582
    %1835 = vmatmul.f32.gmra.mxu0 %v1712
    %v1836 = vpop.f32.mrf.mxu0
    %v1837 = vadd.f32 0.0, %v1836
    %1838 = vdwg.mxu0
    %v1839 = vadd.f32 %v1818, %v1837
    %v1840 = vxor.u32 %v1839, 2147483648
    %v1841 = vmul.f32 %v1840, 1.442695
    %v1842 = vpow.pop %v1841
    %v1843 = vadd.f32 %v1842, 1.0
    %v1844 = vrcp.pop %v1843
    %v1845 = vmul.f32 %v1843, %v1844
    %v1846 = vsub.f32 1.0, %v1845
    %v1847 = vmul.f32 %v1844, %v1846
    %v1848 = vadd.f32 %v1844, %v1847
    %vm1849 = vweird.f32 %v1843
    %vm1850 = vweird.f32 %v1844
    %vm1851 = vmor %vm1849, %vm1850
    %v1852 = vsel %vm1851, %v1844, %v1848
    %v1853 = vand.u32 2147483647, %v1843
    %vm1854 = vcmp.eq.f32.partialorder %v1853, 8.507059e+37
    %v1855 = vand.u32 %v1843, 2147483648
    %v1856 = vor.u32 1.1754944e-38, %v1855
    %v1857 = vsel %vm1854, %v1856, %v1852
    %v1858 = vmul.f32 1.0, %v1857
    %v1859 = vmul.f32 %v1794, %v1705
    %v1860 = vmul.f32 %v1753, %v1817
    %v1861 = vadd.f32 %v1859, %v1860
    %v1862 = vtanh.pop %v1861
    %v1863 = vmul.f32 %v1858, %v1862
    %1864 = vst.msk [vmem:[#allocation6] sm:$0xff] %vm384, %v1863
    %v1865 = vld [vmem:[#allocation6] sm:$0xff]
    %v1866 = vld [vmem:[#allocation6 + $0x8] sm:$0xff]
    %v1867 = vld [vmem:[#allocation6 + $0x10] sm:$0xff]
    %v1868 = vld [vmem:[#allocation6 + $0x18] sm:$0xff]
    %v1869 = vld [vmem:[#allocation6 + $0x20] sm:$0xff]
    %v1870 = vld [vmem:[#allocation6 + $0x28] sm:$0xff]
    %v1871 = vld [vmem:[#allocation6 + $0x30] sm:$0xff]
    %v1872 = vld [vmem:[#allocation6 + $0x38] sm:$0xff]
    %v1873 = vld [vmem:[%s31] sm:$0xff]
    %v1874 = vld [vmem:[%s31 + $0x8] sm:$0xff]
    %v1875 = vld [vmem:[%s31 + $0x10] sm:$0xff]
    %v1876 = vld [vmem:[%s31 + $0x18] sm:$0xff]
    %v1877 = vld [vmem:[%s31 + $0x20] sm:$0xff]
    %v1878 = vld [vmem:[%s31 + $0x28] sm:$0xff]
    %v1879 = vld [vmem:[%s31 + $0x30] sm:$0xff]
    %v1880 = vld [vmem:[%s31 + $0x38] sm:$0xff]
    %v1882 = vsel %vm384, %v1865, 0
    %v1885 = vsel %vm384, %v1866, 0
    %v1888 = vsel %vm384, %v1867, 0
    %v1891 = vsel %vm384, %v1868, 0
    %v1894 = vsel %vm384, %v1869, 0
    %v1897 = vsel %vm384, %v1870, 0
    %v1900 = vsel %vm384, %v1871, 0
    %v1903 = vsel %vm384, %v1872, 0
    %1905 = vmatpush.msra.mxu0 0.0
    %1906 = vmatpush.msra.mxu0 0.0
    %1907 = vmatpush.msra.mxu0 0.0
    %1908 = vmatpush.msra.mxu0 0.0
    %1909 = vmatpush.msra.mxu0 0.0
    %1910 = vmatpush.msra.mxu0 0.0
    %1911 = vmatpush.msra.mxu0 0.0
    %1912 = vmatpush.msra.mxu0 0.0
    %1913 = vmatpush.msra.mxu0 %v1880
    %1914 = vmatpush.msra.mxu0 %v1879
    %1915 = vmatpush.msra.mxu0 %v1878
    %1916 = vmatpush.msra.mxu0 %v1877
    %1917 = vmatpush.msra.mxu0 %v1876
    %1918 = vmatpush.msra.mxu0 %v1875
    %1919 = vmatpush.msra.mxu0 %v1874
    %1920 = vmatpush.msra.mxu0 %v1873
    %1921 = vmatmul.f32.gmra.mxu0 %v1882
    %v1922 = vpop.f32.mrf.mxu0
    %v1923 = vadd.f32 0.0, %v1922
    %1924 = vmatmul.f32.gmra.mxu0 %v1885
    %v1925 = vpop.f32.mrf.mxu0
    %v1926 = vadd.f32 0.0, %v1925
    %1927 = vmatmul.f32.gmra.mxu0 %v1888
    %v1928 = vpop.f32.mrf.mxu0
    %v1929 = vadd.f32 0.0, %v1928
    %1930 = vmatmul.f32.gmra.mxu0 %v1891
    %v1931 = vpop.f32.mrf.mxu0
    %v1932 = vadd.f32 0.0, %v1931
    %1933 = vmatmul.f32.gmra.mxu0 %v1894
    %v1934 = vpop.f32.mrf.mxu0
    %v1935 = vadd.f32 0.0, %v1934
    %1936 = vmatmul.f32.gmra.mxu0 %v1897
    %v1937 = vpop.f32.mrf.mxu0
    %v1938 = vadd.f32 0.0, %v1937
    %1939 = vmatmul.f32.gmra.mxu0 %v1900
    %v1940 = vpop.f32.mrf.mxu0
    %v1941 = vadd.f32 0.0, %v1940
    %1942 = vmatmul.f32.gmra.mxu0 %v1903
    %v1943 = vpop.f32.mrf.mxu0
    %v1944 = vadd.f32 0.0, %v1943
    %1945 = vdwg.mxu0
    %v1946 = vmul.f32 %v1923, 0.5
    %v1947 = vmul.f32 %v1926, 0.5
    %v1948 = vmul.f32 %v1929, 0.5
    %v1949 = vmul.f32 %v1932, 0.5
    %v1950 = vmul.f32 %v1935, 0.5
    %v1951 = vmul.f32 %v1938, 0.5
    %v1952 = vmul.f32 %v1941, 0.5
    %v1953 = vmul.f32 %v1944, 0.5
    %v1954 = vld [vmem:[#allocation17] sm:$0x1]
    %v1956 = vperm.slane %v1954, 0
    %v1958 = vadd.f32 %v1946, %v1956
    %v1959 = vadd.f32 %v1947, %v1956
    %v1960 = vadd.f32 %v1948, %v1956
    %v1961 = vadd.f32 %v1949, %v1956
    %v1962 = vadd.f32 %v1950, %v1956
    %v1963 = vadd.f32 %v1951, %v1956
    %v1964 = vadd.f32 %v1952, %v1956
    %v1965 = vadd.f32 %v1953, %v1956
    %1966 = vst.msk [vmem:[#allocation7] sm:$0xff] %vm384, %v1958
    %1967 = vst.msk [vmem:[#allocation7 + $0x8] sm:$0xff] %vm384, %v1959
    %1968 = vst.msk [vmem:[#allocation7 + $0x10] sm:$0xff] %vm384, %v1960
    %1969 = vst.msk [vmem:[#allocation7 + $0x18] sm:$0xff] %vm384, %v1961
    %1970 = vst.msk [vmem:[#allocation7 + $0x20] sm:$0xff] %vm384, %v1962
    %1971 = vst.msk [vmem:[#allocation7 + $0x28] sm:$0xff] %vm384, %v1963
    %1972 = vst.msk [vmem:[#allocation7 + $0x30] sm:$0xff] %vm384, %v1964
    %1973 = vst.msk [vmem:[#allocation7 + $0x38] sm:$0xff] %vm384, %v1965
    %v1974 = vld [vmem:[#allocation15] sm:$0xff]
    %v1975 = vld [vmem:[#allocation15 + $0x8] sm:$0xff]
    %v1976 = vld [vmem:[%s35] sm:$0xff]
    %v1977 = vld [vmem:[%s35 + $0x8] sm:$0xff]
    %v1978 = vld [vmem:[%s35 + $0x10] sm:$0xff]
    %v1979 = vld [vmem:[%s35 + $0x18] sm:$0xff]
    %v1980 = vld [vmem:[%s35 + $0x20] sm:$0xff]
    %v1981 = vld [vmem:[%s35 + $0x28] sm:$0xff]
    %v1982 = vld [vmem:[%s35 + $0x30] sm:$0xff]
    %v1983 = vld [vmem:[%s35 + $0x38] sm:$0xff]
    %v1984 = vld [vmem:[#allocation18] sm:$0x1]
    %v1985 = vld [vmem:[%s39] sm:$0xff]
    %v1986 = vld [vmem:[%s39 + $0x8] sm:$0xff]
    %v1987 = vld [vmem:[%s39 + $0x10] sm:$0xff]
    %v1988 = vld [vmem:[%s39 + $0x18] sm:$0xff]
    %v1989 = vld [vmem:[%s39 + $0x20] sm:$0xff]
    %v1990 = vld [vmem:[%s39 + $0x28] sm:$0xff]
    %v1991 = vld [vmem:[%s39 + $0x30] sm:$0xff]
    %v1992 = vld [vmem:[%s39 + $0x38] sm:$0xff]
    %v1993 = vld [vmem:[%s39 + $0x40] sm:$0xff]
    %v1994 = vld [vmem:[%s39 + $0x48] sm:$0xff]
    %v1995 = vld [vmem:[%s39 + $0x50] sm:$0xff]
    %v1996 = vld [vmem:[%s39 + $0x58] sm:$0xff]
    %v1997 = vld [vmem:[%s39 + $0x60] sm:$0xff]
    %v1998 = vld [vmem:[%s39 + $0x68] sm:$0xff]
    %v1999 = vld [vmem:[%s39 + $0x70] sm:$0xff]
    %v2000 = vld [vmem:[%s39 + $0x78] sm:$0xff]
    %v2001 = vld [vmem:[#allocation20] sm:$0x1]
    %v2002 = vld [vmem:[%s43] sm:$0xff]
    %v2003 = vld [vmem:[%s43 + $0x8] sm:$0xff]
    %v2004 = vld [vmem:[%s43 + $0x10] sm:$0xff]
    %v2005 = vld [vmem:[%s43 + $0x18] sm:$0xff]
    %v2006 = vld [vmem:[%s43 + $0x20] sm:$0xff]
    %v2007 = vld [vmem:[%s43 + $0x28] sm:$0xff]
    %v2008 = vld [vmem:[%s43 + $0x30] sm:$0xff]
    %v2009 = vld [vmem:[%s43 + $0x38] sm:$0xff]
    %v2010 = vld [vmem:[#allocation21] sm:$0x1]
    %v2011 = vld [vmem:[%s47] sm:$0xff]
    %v2012 = vld [vmem:[%s47 + $0x8] sm:$0xff]
    %v2013 = vld [vmem:[%s47 + $0x10] sm:$0xff]
    %v2014 = vld [vmem:[%s47 + $0x18] sm:$0xff]
    %v2015 = vld [vmem:[%s47 + $0x20] sm:$0xff]
    %v2016 = vld [vmem:[%s47 + $0x28] sm:$0xff]
    %v2017 = vld [vmem:[%s47 + $0x30] sm:$0xff]
    %v2018 = vld [vmem:[%s47 + $0x38] sm:$0xff]
    %v2019 = vld [vmem:[#allocation23] sm:$0x1]
    %2020 = vst.msk [vmem:[#allocation8] sm:$0xff] %vm318, 0.0
    %v2021 = vsel %vm318, 0.0, 0
    %2023 = vmatpush.msra.mxu0 0.0
    %2024 = vmatpush.msra.mxu0 0.0
    %2025 = vmatpush.msra.mxu0 0.0
    %2026 = vmatpush.msra.mxu0 0.0
    %2027 = vmatpush.msra.mxu0 0.0
    %2028 = vmatpush.msra.mxu0 0.0
    %2029 = vmatpush.msra.mxu0 0.0
    %2030 = vmatpush.msra.mxu0 0.0
    %2031 = vmatpush.msra.mxu0 0.0
    %2032 = vmatpush.msra.mxu0 0.0
    %2033 = vmatpush.msra.mxu0 0.0
    %2034 = vmatpush.msra.mxu0 0.0
    %2035 = vmatpush.msra.mxu0 0.0
    %2036 = vmatpush.msra.mxu0 0.0
    %2037 = vmatpush.msra.mxu0 %v1975
    %2038 = vmatpush.msra.mxu0 %v1974
    %2039 = vmatmul.f32.gmra.mxu0 %v2021
    %v2040 = vpop.f32.mrf.mxu0
    %v2041 = vadd.f32 0.0, %v2040
    %2042 = vdwg.mxu0
    %v2043 = vmul.f32 %v2041, 0.5
    %v2044 = vld [vmem:[#allocation7] sm:$0xff]
    %v2045 = vadd.f32 %v2043, %v2044
    %v2046 = vtanh.pop %v2045
    %v2048 = vperm.slane %v1984, 0
    %v2051 = vsel %vm384, %v2046, 0
    %2053 = vmatpush.msra.mxu0 0.0
    %2054 = vmatpush.msra.mxu0 0.0
    %2055 = vmatpush.msra.mxu0 0.0
    %2056 = vmatpush.msra.mxu0 0.0
    %2057 = vmatpush.msra.mxu0 0.0
    %2058 = vmatpush.msra.mxu0 0.0
    %2059 = vmatpush.msra.mxu0 0.0
    %2060 = vmatpush.msra.mxu0 0.0
    %2061 = vmatpush.msra.mxu0 %v1983
    %2062 = vmatpush.msra.mxu0 %v1982
    %2063 = vmatpush.msra.mxu0 %v1981
    %2064 = vmatpush.msra.mxu0 %v1980
    %2065 = vmatpush.msra.mxu0 %v1979
    %2066 = vmatpush.msra.mxu0 %v1978
    %2067 = vmatpush.msra.mxu0 %v1977
    %2068 = vmatpush.msra.mxu0 %v1976
    %2069 = vmatmul.f32.gmra.mxu0 %v2051
    %v2070 = vpop.f32.mrf.mxu0
    %v2071 = vadd.f32 %v2048, %v2070
    %2072 = vdwg.mxu0
    %v2073 = vtanh.pop %v2071
    %v2075 = vperm.slane %v2001, 0
    %2077 = vmatpush.msra.mxu0 %v2000
    %2078 = vmatpush.msra.mxu0 %v1999
    %2079 = vmatpush.msra.mxu0 %v1998
    %2080 = vmatpush.msra.mxu0 %v1997
    %2081 = vmatpush.msra.mxu0 %v1996
    %2082 = vmatpush.msra.mxu0 %v1995
    %2083 = vmatpush.msra.mxu0 %v1994
    %2084 = vmatpush.msra.mxu0 %v1993
    %2085 = vmatpush.msra.mxu0 %v1992
    %2086 = vmatpush.msra.mxu0 %v1991
    %2087 = vmatpush.msra.mxu0 %v1990
    %2088 = vmatpush.msra.mxu0 %v1989
    %2089 = vmatpush.msra.mxu0 %v1988
    %2090 = vmatpush.msra.mxu0 %v1987
    %2091 = vmatpush.msra.mxu0 %v1986
    %2092 = vmatpush.msra.mxu0 %v1985
    %2093 = vmatmul.f32.gmra.mxu0 %v2073
    %v2094 = vpop.f32.mrf.mxu0
    %v2095 = vadd.f32 %v2075, %v2094
    %2096 = vdwg.mxu0
    %v2097 = vtanh.pop %v2095
    %v2099 = vperm.slane %v2010, 0
    %v2102 = vsel %vm384, %v2097, 0
    %2104 = vmatpush.msra.mxu0 0.0
    %2105 = vmatpush.msra.mxu0 0.0
    %2106 = vmatpush.msra.mxu0 0.0
    %2107 = vmatpush.msra.mxu0 0.0
    %2108 = vmatpush.msra.mxu0 0.0
    %2109 = vmatpush.msra.mxu0 0.0
    %2110 = vmatpush.msra.mxu0 0.0
    %2111 = vmatpush.msra.mxu0 0.0
    %2112 = vmatpush.msra.mxu0 %v2009
    %2113 = vmatpush.msra.mxu0 %v2008
    %2114 = vmatpush.msra.mxu0 %v2007
    %2115 = vmatpush.msra.mxu0 %v2006
    %2116 = vmatpush.msra.mxu0 %v2005
    %2117 = vmatpush.msra.mxu0 %v2004
    %2118 = vmatpush.msra.mxu0 %v2003
    %2119 = vmatpush.msra.mxu0 %v2002
    %2120 = vmatmul.f32.gmra.mxu0 %v2102
    %v2121 = vpop.f32.mrf.mxu0
    %v2122 = vadd.f32 %v2099, %v2121
    %2123 = vdwg.mxu0
    %v2125 = vperm.slane %v2019, 0
    %2127 = vmatpush.msra.mxu0 0.0
    %2128 = vmatpush.msra.mxu0 0.0
    %2129 = vmatpush.msra.mxu0 0.0
    %2130 = vmatpush.msra.mxu0 0.0
    %2131 = vmatpush.msra.mxu0 0.0
    %2132 = vmatpush.msra.mxu0 0.0
    %2133 = vmatpush.msra.mxu0 0.0
    %2134 = vmatpush.msra.mxu0 0.0
    %2135 = vmatpush.msra.mxu0 %v2018
    %2136 = vmatpush.msra.mxu0 %v2017
    %2137 = vmatpush.msra.mxu0 %v2016
    %2138 = vmatpush.msra.mxu0 %v2015
    %2139 = vmatpush.msra.mxu0 %v2014
    %2140 = vmatpush.msra.mxu0 %v2013
    %2141 = vmatpush.msra.mxu0 %v2012
    %2142 = vmatpush.msra.mxu0 %v2011
    %2143 = vmatmul.f32.gmra.mxu0 %v2102
    %v2144 = vpop.f32.mrf.mxu0
    %v2145 = vadd.f32 %v2125, %v2144
    %2146 = vdwg.mxu0
    %2147 = vst.msk [vmem:[%s67] sm:$0xff] %vm318, %v2122
    %2148 = vst.msk [vmem:[%s69] sm:$0xff] %vm318, %v2145
    %v2149 = vld [vmem:[%s3] sm:$0xff]
    %v2150 = vmul.f32 %v2145, 0.5
    %v2151 = vmul.f32 %v2150, 1.442695
    %v2152 = vpow.pop %v2151
    %v2153 = vmul.f32 %v2149, %v2152
    %v2154 = vadd.f32 %v2122, %v2153
    %2155 = vst.msk [vmem:[#allocation9] sm:$0xff] %vm318, %v2154
    %s2156 = scalar_lea.vmem [#allocation8], 8
    %2157 = vst.msk [vmem:[%s2156] sm:$0xff] %vm318, %v2154
    %v2159 = vsel %vm318, %v2154, 0
    %2161 = vmatpush.msra.mxu0 0.0
    %2162 = vmatpush.msra.mxu0 0.0
    %2163 = vmatpush.msra.mxu0 0.0
    %2164 = vmatpush.msra.mxu0 0.0
    %2165 = vmatpush.msra.mxu0 0.0
    %2166 = vmatpush.msra.mxu0 0.0
    %2167 = vmatpush.msra.mxu0 0.0
    %2168 = vmatpush.msra.mxu0 0.0
    %2169 = vmatpush.msra.mxu0 0.0
    %2170 = vmatpush.msra.mxu0 0.0
    %2171 = vmatpush.msra.mxu0 0.0
    %2172 = vmatpush.msra.mxu0 0.0
    %2173 = vmatpush.msra.mxu0 0.0
    %2174 = vmatpush.msra.mxu0 0.0
    %2175 = vmatpush.msra.mxu0 %v1975
    %2176 = vmatpush.msra.mxu0 %v1974
    %2177 = vmatmul.f32.gmra.mxu0 %v2159
    %v2178 = vpop.f32.mrf.mxu0
    %v2179 = vadd.f32 0.0, %v2178
    %2180 = vdwg.mxu0
    %v2181 = vmul.f32 %v2179, 0.5
    %s2182 = scalar_lea.vmem [#allocation7], 8
    %v2183 = vld [vmem:[%s2182] sm:$0xff]
    %v2184 = vadd.f32 %v2181, %v2183
    %v2185 = vtanh.pop %v2184
    %v2187 = vsel %vm384, %v2185, 0
    %2189 = vmatpush.msra.mxu0 0.0
    %2190 = vmatpush.msra.mxu0 0.0
    %2191 = vmatpush.msra.mxu0 0.0
    %2192 = vmatpush.msra.mxu0 0.0
    %2193 = vmatpush.msra.mxu0 0.0
    %2194 = vmatpush.msra.mxu0 0.0
    %2195 = vmatpush.msra.mxu0 0.0
    %2196 = vmatpush.msra.mxu0 0.0
    %2197 = vmatpush.msra.mxu0 %v1983
    %2198 = vmatpush.msra.mxu0 %v1982
    %2199 = vmatpush.msra.mxu0 %v1981
    %2200 = vmatpush.msra.mxu0 %v1980
    %2201 = vmatpush.msra.mxu0 %v1979
    %2202 = vmatpush.msra.mxu0 %v1978
    %2203 = vmatpush.msra.mxu0 %v1977
    %2204 = vmatpush.msra.mxu0 %v1976
    %2205 = vmatmul.f32.gmra.mxu0 %v2187
    %v2206 = vpop.f32.mrf.mxu0
    %v2207 = vadd.f32 %v2048, %v2206
    %2208 = vdwg.mxu0
    %v2209 = vtanh.pop %v2207
    %2210 = vmatpush.msra.mxu0 %v2000
    %2211 = vmatpush.msra.mxu0 %v1999
    %2212 = vmatpush.msra.mxu0 %v1998
    %2213 = vmatpush.msra.mxu0 %v1997
    %2214 = vmatpush.msra.mxu0 %v1996
    %2215 = vmatpush.msra.mxu0 %v1995
    %2216 = vmatpush.msra.mxu0 %v1994
    %2217 = vmatpush.msra.mxu0 %v1993
    %2218 = vmatpush.msra.mxu0 %v1992
    %2219 = vmatpush.msra.mxu0 %v1991
    %2220 = vmatpush.msra.mxu0 %v1990
    %2221 = vmatpush.msra.mxu0 %v1989
    %2222 = vmatpush.msra.mxu0 %v1988
    %2223 = vmatpush.msra.mxu0 %v1987
    %2224 = vmatpush.msra.mxu0 %v1986
    %2225 = vmatpush.msra.mxu0 %v1985
    %2226 = vmatmul.f32.gmra.mxu0 %v2209
    %v2227 = vpop.f32.mrf.mxu0
    %v2228 = vadd.f32 %v2075, %v2227
    %2229 = vdwg.mxu0
    %v2230 = vtanh.pop %v2228
    %v2232 = vsel %vm384, %v2230, 0
    %2234 = vmatpush.msra.mxu0 0.0
    %2235 = vmatpush.msra.mxu0 0.0
    %2236 = vmatpush.msra.mxu0 0.0
    %2237 = vmatpush.msra.mxu0 0.0
    %2238 = vmatpush.msra.mxu0 0.0
    %2239 = vmatpush.msra.mxu0 0.0
    %2240 = vmatpush.msra.mxu0 0.0
    %2241 = vmatpush.msra.mxu0 0.0
    %2242 = vmatpush.msra.mxu0 %v2009
    %2243 = vmatpush.msra.mxu0 %v2008
    %2244 = vmatpush.msra.mxu0 %v2007
    %2245 = vmatpush.msra.mxu0 %v2006
    %2246 = vmatpush.msra.mxu0 %v2005
    %2247 = vmatpush.msra.mxu0 %v2004
    %2248 = vmatpush.msra.mxu0 %v2003
    %2249 = vmatpush.msra.mxu0 %v2002
    %2250 = vmatmul.f32.gmra.mxu0 %v2232
    %v2251 = vpop.f32.mrf.mxu0
    %v2252 = vadd.f32 %v2099, %v2251
    %2253 = vdwg.mxu0
    %2254 = vmatpush.msra.mxu0 0.0
    %2255 = vmatpush.msra.mxu0 0.0
    %2256 = vmatpush.msra.mxu0 0.0
    %2257 = vmatpush.msra.mxu0 0.0
    %2258 = vmatpush.msra.mxu0 0.0
    %2259 = vmatpush.msra.mxu0 0.0
    %2260 = vmatpush.msra.mxu0 0.0
    %2261 = vmatpush.msra.mxu0 0.0
    %2262 = vmatpush.msra.mxu0 %v2018
    %2263 = vmatpush.msra.mxu0 %v2017
    %2264 = vmatpush.msra.mxu0 %v2016
    %2265 = vmatpush.msra.mxu0 %v2015
    %2266 = vmatpush.msra.mxu0 %v2014
    %2267 = vmatpush.msra.mxu0 %v2013
    %2268 = vmatpush.msra.mxu0 %v2012
    %2269 = vmatpush.msra.mxu0 %v2011
    %2270 = vmatmul.f32.gmra.mxu0 %v2232
    %v2271 = vpop.f32.mrf.mxu0
    %v2272 = vadd.f32 %v2125, %v2271
    %2273 = vdwg.mxu0
    %s2274 = scalar_lea.vmem %s67, 8
    %2275 = vst.msk [vmem:[%s2274] sm:$0xff] %vm318, %v2252
    %s2276 = scalar_lea.vmem %s69, 8
    %2277 = vst.msk [vmem:[%s2276] sm:$0xff] %vm318, %v2272
    %s2278 = scalar_lea.vmem %s3, 8
    %v2279 = vld [vmem:[%s2278] sm:$0xff]
    %v2280 = vmul.f32 %v2272, 0.5
    %v2281 = vmul.f32 %v2280, 1.442695
    %v2282 = vpow.pop %v2281
    %v2283 = vmul.f32 %v2279, %v2282
    %v2284 = vadd.f32 %v2252, %v2283
    %s2285 = scalar_lea.vmem [#allocation9], 8
    %2286 = vst.msk [vmem:[%s2285] sm:$0xff] %vm318, %v2284
    %s2287 = scalar_lea.vmem [#allocation8], 16
    %2288 = vst.msk [vmem:[%s2287] sm:$0xff] %vm318, %v2284
    %v2290 = vsel %vm318, %v2284, 0
    %2292 = vmatpush.msra.mxu0 0.0
    %2293 = vmatpush.msra.mxu0 0.0
    %2294 = vmatpush.msra.mxu0 0.0
    %2295 = vmatpush.msra.mxu0 0.0
    %2296 = vmatpush.msra.mxu0 0.0
    %2297 = vmatpush.msra.mxu0 0.0
    %2298 = vmatpush.msra.mxu0 0.0
    %2299 = vmatpush.msra.mxu0 0.0
    %2300 = vmatpush.msra.mxu0 0.0
    %2301 = vmatpush.msra.mxu0 0.0
    %2302 = vmatpush.msra.mxu0 0.0
    %2303 = vmatpush.msra.mxu0 0.0
    %2304 = vmatpush.msra.mxu0 0.0
    %2305 = vmatpush.msra.mxu0 0.0
    %2306 = vmatpush.msra.mxu0 %v1975
    %2307 = vmatpush.msra.mxu0 %v1974
    %2308 = vmatmul.f32.gmra.mxu0 %v2290
    %v2309 = vpop.f32.mrf.mxu0
    %v2310 = vadd.f32 0.0, %v2309
    %2311 = vdwg.mxu0
    %v2312 = vmul.f32 %v2310, 0.5
    %s2313 = scalar_lea.vmem [#allocation7], 16
    %v2314 = vld [vmem:[%s2313] sm:$0xff]
    %v2315 = vadd.f32 %v2312, %v2314
    %v2316 = vtanh.pop %v2315
    %v2318 = vsel %vm384, %v2316, 0
    %2320 = vmatpush.msra.mxu0 0.0
    %2321 = vmatpush.msra.mxu0 0.0
    %2322 = vmatpush.msra.mxu0 0.0
    %2323 = vmatpush.msra.mxu0 0.0
    %2324 = vmatpush.msra.mxu0 0.0
    %2325 = vmatpush.msra.mxu0 0.0
    %2326 = vmatpush.msra.mxu0 0.0
    %2327 = vmatpush.msra.mxu0 0.0
    %2328 = vmatpush.msra.mxu0 %v1983
    %2329 = vmatpush.msra.mxu0 %v1982
    %2330 = vmatpush.msra.mxu0 %v1981
    %2331 = vmatpush.msra.mxu0 %v1980
    %2332 = vmatpush.msra.mxu0 %v1979
    %2333 = vmatpush.msra.mxu0 %v1978
    %2334 = vmatpush.msra.mxu0 %v1977
    %2335 = vmatpush.msra.mxu0 %v1976
    %2336 = vmatmul.f32.gmra.mxu0 %v2318
    %v2337 = vpop.f32.mrf.mxu0
    %v2338 = vadd.f32 %v2048, %v2337
    %2339 = vdwg.mxu0
    %v2340 = vtanh.pop %v2338
    %2341 = vmatpush.msra.mxu0 %v2000
    %2342 = vmatpush.msra.mxu0 %v1999
    %2343 = vmatpush.msra.mxu0 %v1998
    %2344 = vmatpush.msra.mxu0 %v1997
    %2345 = vmatpush.msra.mxu0 %v1996
    %2346 = vmatpush.msra.mxu0 %v1995
    %2347 = vmatpush.msra.mxu0 %v1994
    %2348 = vmatpush.msra.mxu0 %v1993
    %2349 = vmatpush.msra.mxu0 %v1992
    %2350 = vmatpush.msra.mxu0 %v1991
    %2351 = vmatpush.msra.mxu0 %v1990
    %2352 = vmatpush.msra.mxu0 %v1989
    %2353 = vmatpush.msra.mxu0 %v1988
    %2354 = vmatpush.msra.mxu0 %v1987
    %2355 = vmatpush.msra.mxu0 %v1986
    %2356 = vmatpush.msra.mxu0 %v1985
    %2357 = vmatmul.f32.gmra.mxu0 %v2340
    %v2358 = vpop.f32.mrf.mxu0
    %v2359 = vadd.f32 %v2075, %v2358
    %2360 = vdwg.mxu0
    %v2361 = vtanh.pop %v2359
    %v2363 = vsel %vm384, %v2361, 0
    %2365 = vmatpush.msra.mxu0 0.0
    %2366 = vmatpush.msra.mxu0 0.0
    %2367 = vmatpush.msra.mxu0 0.0
    %2368 = vmatpush.msra.mxu0 0.0
    %2369 = vmatpush.msra.mxu0 0.0
    %2370 = vmatpush.msra.mxu0 0.0
    %2371 = vmatpush.msra.mxu0 0.0
    %2372 = vmatpush.msra.mxu0 0.0
    %2373 = vmatpush.msra.mxu0 %v2009
    %2374 = vmatpush.msra.mxu0 %v2008
    %2375 = vmatpush.msra.mxu0 %v2007
    %2376 = vmatpush.msra.mxu0 %v2006
    %2377 = vmatpush.msra.mxu0 %v2005
    %2378 = vmatpush.msra.mxu0 %v2004
    %2379 = vmatpush.msra.mxu0 %v2003
    %2380 = vmatpush.msra.mxu0 %v2002
    %2381 = vmatmul.f32.gmra.mxu0 %v2363
    %v2382 = vpop.f32.mrf.mxu0
    %v2383 = vadd.f32 %v2099, %v2382
    %2384 = vdwg.mxu0
    %2385 = vmatpush.msra.mxu0 0.0
    %2386 = vmatpush.msra.mxu0 0.0
    %2387 = vmatpush.msra.mxu0 0.0
    %2388 = vmatpush.msra.mxu0 0.0
    %2389 = vmatpush.msra.mxu0 0.0
    %2390 = vmatpush.msra.mxu0 0.0
    %2391 = vmatpush.msra.mxu0 0.0
    %2392 = vmatpush.msra.mxu0 0.0
    %2393 = vmatpush.msra.mxu0 %v2018
    %2394 = vmatpush.msra.mxu0 %v2017
    %2395 = vmatpush.msra.mxu0 %v2016
    %2396 = vmatpush.msra.mxu0 %v2015
    %2397 = vmatpush.msra.mxu0 %v2014
    %2398 = vmatpush.msra.mxu0 %v2013
    %2399 = vmatpush.msra.mxu0 %v2012
    %2400 = vmatpush.msra.mxu0 %v2011
    %2401 = vmatmul.f32.gmra.mxu0 %v2363
    %v2402 = vpop.f32.mrf.mxu0
    %v2403 = vadd.f32 %v2125, %v2402
    %2404 = vdwg.mxu0
    %s2405 = scalar_lea.vmem %s67, 16
    %2406 = vst.msk [vmem:[%s2405] sm:$0xff] %vm318, %v2383
    %s2407 = scalar_lea.vmem %s69, 16
    %2408 = vst.msk [vmem:[%s2407] sm:$0xff] %vm318, %v2403
    %s2409 = scalar_lea.vmem %s3, 16
    %v2410 = vld [vmem:[%s2409] sm:$0xff]
    %v2411 = vmul.f32 %v2403, 0.5
    %v2412 = vmul.f32 %v2411, 1.442695
    %v2413 = vpow.pop %v2412
    %v2414 = vmul.f32 %v2410, %v2413
    %v2415 = vadd.f32 %v2383, %v2414
    %s2416 = scalar_lea.vmem [#allocation9], 16
    %2417 = vst.msk [vmem:[%s2416] sm:$0xff] %vm318, %v2415
    %s2418 = scalar_lea.vmem [#allocation8], 24
    %2419 = vst.msk [vmem:[%s2418] sm:$0xff] %vm318, %v2415
    %v2421 = vsel %vm318, %v2415, 0
    %2423 = vmatpush.msra.mxu0 0.0
    %2424 = vmatpush.msra.mxu0 0.0
    %2425 = vmatpush.msra.mxu0 0.0
    %2426 = vmatpush.msra.mxu0 0.0
    %2427 = vmatpush.msra.mxu0 0.0
    %2428 = vmatpush.msra.mxu0 0.0
    %2429 = vmatpush.msra.mxu0 0.0
    %2430 = vmatpush.msra.mxu0 0.0
    %2431 = vmatpush.msra.mxu0 0.0
    %2432 = vmatpush.msra.mxu0 0.0
    %2433 = vmatpush.msra.mxu0 0.0
    %2434 = vmatpush.msra.mxu0 0.0
    %2435 = vmatpush.msra.mxu0 0.0
    %2436 = vmatpush.msra.mxu0 0.0
    %2437 = vmatpush.msra.mxu0 %v1975
    %2438 = vmatpush.msra.mxu0 %v1974
    %2439 = vmatmul.f32.gmra.mxu0 %v2421
    %v2440 = vpop.f32.mrf.mxu0
    %v2441 = vadd.f32 0.0, %v2440
    %2442 = vdwg.mxu0
    %v2443 = vmul.f32 %v2441, 0.5
    %s2444 = scalar_lea.vmem [#allocation7], 24
    %v2445 = vld [vmem:[%s2444] sm:$0xff]
    %v2446 = vadd.f32 %v2443, %v2445
    %v2447 = vtanh.pop %v2446
    %v2449 = vsel %vm384, %v2447, 0
    %2451 = vmatpush.msra.mxu0 0.0
    %2452 = vmatpush.msra.mxu0 0.0
    %2453 = vmatpush.msra.mxu0 0.0
    %2454 = vmatpush.msra.mxu0 0.0
    %2455 = vmatpush.msra.mxu0 0.0
    %2456 = vmatpush.msra.mxu0 0.0
    %2457 = vmatpush.msra.mxu0 0.0
    %2458 = vmatpush.msra.mxu0 0.0
    %2459 = vmatpush.msra.mxu0 %v1983
    %2460 = vmatpush.msra.mxu0 %v1982
    %2461 = vmatpush.msra.mxu0 %v1981
    %2462 = vmatpush.msra.mxu0 %v1980
    %2463 = vmatpush.msra.mxu0 %v1979
    %2464 = vmatpush.msra.mxu0 %v1978
    %2465 = vmatpush.msra.mxu0 %v1977
    %2466 = vmatpush.msra.mxu0 %v1976
    %2467 = vmatmul.f32.gmra.mxu0 %v2449
    %v2468 = vpop.f32.mrf.mxu0
    %v2469 = vadd.f32 %v2048, %v2468
    %2470 = vdwg.mxu0
    %v2471 = vtanh.pop %v2469
    %2472 = vmatpush.msra.mxu0 %v2000
    %2473 = vmatpush.msra.mxu0 %v1999
    %2474 = vmatpush.msra.mxu0 %v1998
    %2475 = vmatpush.msra.mxu0 %v1997
    %2476 = vmatpush.msra.mxu0 %v1996
    %2477 = vmatpush.msra.mxu0 %v1995
    %2478 = vmatpush.msra.mxu0 %v1994
    %2479 = vmatpush.msra.mxu0 %v1993
    %2480 = vmatpush.msra.mxu0 %v1992
    %2481 = vmatpush.msra.mxu0 %v1991
    %2482 = vmatpush.msra.mxu0 %v1990
    %2483 = vmatpush.msra.mxu0 %v1989
    %2484 = vmatpush.msra.mxu0 %v1988
    %2485 = vmatpush.msra.mxu0 %v1987
    %2486 = vmatpush.msra.mxu0 %v1986
    %2487 = vmatpush.msra.mxu0 %v1985
    %2488 = vmatmul.f32.gmra.mxu0 %v2471
    %v2489 = vpop.f32.mrf.mxu0
    %v2490 = vadd.f32 %v2075, %v2489
    %2491 = vdwg.mxu0
    %v2492 = vtanh.pop %v2490
    %v2494 = vsel %vm384, %v2492, 0
    %2496 = vmatpush.msra.mxu0 0.0
    %2497 = vmatpush.msra.mxu0 0.0
    %2498 = vmatpush.msra.mxu0 0.0
    %2499 = vmatpush.msra.mxu0 0.0
    %2500 = vmatpush.msra.mxu0 0.0
    %2501 = vmatpush.msra.mxu0 0.0
    %2502 = vmatpush.msra.mxu0 0.0
    %2503 = vmatpush.msra.mxu0 0.0
    %2504 = vmatpush.msra.mxu0 %v2009
    %2505 = vmatpush.msra.mxu0 %v2008
    %2506 = vmatpush.msra.mxu0 %v2007
    %2507 = vmatpush.msra.mxu0 %v2006
    %2508 = vmatpush.msra.mxu0 %v2005
    %2509 = vmatpush.msra.mxu0 %v2004
    %2510 = vmatpush.msra.mxu0 %v2003
    %2511 = vmatpush.msra.mxu0 %v2002
    %2512 = vmatmul.f32.gmra.mxu0 %v2494
    %v2513 = vpop.f32.mrf.mxu0
    %v2514 = vadd.f32 %v2099, %v2513
    %2515 = vdwg.mxu0
    %2516 = vmatpush.msra.mxu0 0.0
    %2517 = vmatpush.msra.mxu0 0.0
    %2518 = vmatpush.msra.mxu0 0.0
    %2519 = vmatpush.msra.mxu0 0.0
    %2520 = vmatpush.msra.mxu0 0.0
    %2521 = vmatpush.msra.mxu0 0.0
    %2522 = vmatpush.msra.mxu0 0.0
    %2523 = vmatpush.msra.mxu0 0.0
    %2524 = vmatpush.msra.mxu0 %v2018
    %2525 = vmatpush.msra.mxu0 %v2017
    %2526 = vmatpush.msra.mxu0 %v2016
    %2527 = vmatpush.msra.mxu0 %v2015
    %2528 = vmatpush.msra.mxu0 %v2014
    %2529 = vmatpush.msra.mxu0 %v2013
    %2530 = vmatpush.msra.mxu0 %v2012
    %2531 = vmatpush.msra.mxu0 %v2011
    %2532 = vmatmul.f32.gmra.mxu0 %v2494
    %v2533 = vpop.f32.mrf.mxu0
    %v2534 = vadd.f32 %v2125, %v2533
    %2535 = vdwg.mxu0
    %s2536 = scalar_lea.vmem %s67, 24
    %2537 = vst.msk [vmem:[%s2536] sm:$0xff] %vm318, %v2514
    %s2538 = scalar_lea.vmem %s69, 24
    %2539 = vst.msk [vmem:[%s2538] sm:$0xff] %vm318, %v2534
    %s2540 = scalar_lea.vmem %s3, 24
    %v2541 = vld [vmem:[%s2540] sm:$0xff]
    %v2542 = vmul.f32 %v2534, 0.5
    %v2543 = vmul.f32 %v2542, 1.442695
    %v2544 = vpow.pop %v2543
    %v2545 = vmul.f32 %v2541, %v2544
    %v2546 = vadd.f32 %v2514, %v2545
    %s2547 = scalar_lea.vmem [#allocation9], 24
    %2548 = vst.msk [vmem:[%s2547] sm:$0xff] %vm318, %v2546
    %s2549 = scalar_lea.vmem [#allocation8], 32
    %2550 = vst.msk [vmem:[%s2549] sm:$0xff] %vm318, %v2546
    %v2552 = vsel %vm318, %v2546, 0
    %2554 = vmatpush.msra.mxu0 0.0
    %2555 = vmatpush.msra.mxu0 0.0
    %2556 = vmatpush.msra.mxu0 0.0
    %2557 = vmatpush.msra.mxu0 0.0
    %2558 = vmatpush.msra.mxu0 0.0
    %2559 = vmatpush.msra.mxu0 0.0
    %2560 = vmatpush.msra.mxu0 0.0
    %2561 = vmatpush.msra.mxu0 0.0
    %2562 = vmatpush.msra.mxu0 0.0
    %2563 = vmatpush.msra.mxu0 0.0
    %2564 = vmatpush.msra.mxu0 0.0
    %2565 = vmatpush.msra.mxu0 0.0
    %2566 = vmatpush.msra.mxu0 0.0
    %2567 = vmatpush.msra.mxu0 0.0
    %2568 = vmatpush.msra.mxu0 %v1975
    %2569 = vmatpush.msra.mxu0 %v1974
    %2570 = vmatmul.f32.gmra.mxu0 %v2552
    %v2571 = vpop.f32.mrf.mxu0
    %v2572 = vadd.f32 0.0, %v2571
    %2573 = vdwg.mxu0
    %v2574 = vmul.f32 %v2572, 0.5
    %s2575 = scalar_lea.vmem [#allocation7], 32
    %v2576 = vld [vmem:[%s2575] sm:$0xff]
    %v2577 = vadd.f32 %v2574, %v2576
    %v2578 = vtanh.pop %v2577
    %v2580 = vsel %vm384, %v2578, 0
    %2582 = vmatpush.msra.mxu0 0.0
    %2583 = vmatpush.msra.mxu0 0.0
    %2584 = vmatpush.msra.mxu0 0.0
    %2585 = vmatpush.msra.mxu0 0.0
    %2586 = vmatpush.msra.mxu0 0.0
    %2587 = vmatpush.msra.mxu0 0.0
    %2588 = vmatpush.msra.mxu0 0.0
    %2589 = vmatpush.msra.mxu0 0.0
    %2590 = vmatpush.msra.mxu0 %v1983
    %2591 = vmatpush.msra.mxu0 %v1982
    %2592 = vmatpush.msra.mxu0 %v1981
    %2593 = vmatpush.msra.mxu0 %v1980
    %2594 = vmatpush.msra.mxu0 %v1979
    %2595 = vmatpush.msra.mxu0 %v1978
    %2596 = vmatpush.msra.mxu0 %v1977
    %2597 = vmatpush.msra.mxu0 %v1976
    %2598 = vmatmul.f32.gmra.mxu0 %v2580
    %v2599 = vpop.f32.mrf.mxu0
    %v2600 = vadd.f32 %v2048, %v2599
    %2601 = vdwg.mxu0
    %v2602 = vtanh.pop %v2600
    %2603 = vmatpush.msra.mxu0 %v2000
    %2604 = vmatpush.msra.mxu0 %v1999
    %2605 = vmatpush.msra.mxu0 %v1998
    %2606 = vmatpush.msra.mxu0 %v1997
    %2607 = vmatpush.msra.mxu0 %v1996
    %2608 = vmatpush.msra.mxu0 %v1995
    %2609 = vmatpush.msra.mxu0 %v1994
    %2610 = vmatpush.msra.mxu0 %v1993
    %2611 = vmatpush.msra.mxu0 %v1992
    %2612 = vmatpush.msra.mxu0 %v1991
    %2613 = vmatpush.msra.mxu0 %v1990
    %2614 = vmatpush.msra.mxu0 %v1989
    %2615 = vmatpush.msra.mxu0 %v1988
    %2616 = vmatpush.msra.mxu0 %v1987
    %2617 = vmatpush.msra.mxu0 %v1986
    %2618 = vmatpush.msra.mxu0 %v1985
    %2619 = vmatmul.f32.gmra.mxu0 %v2602
    %v2620 = vpop.f32.mrf.mxu0
    %v2621 = vadd.f32 %v2075, %v2620
    %2622 = vdwg.mxu0
    %v2623 = vtanh.pop %v2621
    %v2625 = vsel %vm384, %v2623, 0
    %2627 = vmatpush.msra.mxu0 0.0
    %2628 = vmatpush.msra.mxu0 0.0
    %2629 = vmatpush.msra.mxu0 0.0
    %2630 = vmatpush.msra.mxu0 0.0
    %2631 = vmatpush.msra.mxu0 0.0
    %2632 = vmatpush.msra.mxu0 0.0
    %2633 = vmatpush.msra.mxu0 0.0
    %2634 = vmatpush.msra.mxu0 0.0
    %2635 = vmatpush.msra.mxu0 %v2009
    %2636 = vmatpush.msra.mxu0 %v2008
    %2637 = vmatpush.msra.mxu0 %v2007
    %2638 = vmatpush.msra.mxu0 %v2006
    %2639 = vmatpush.msra.mxu0 %v2005
    %2640 = vmatpush.msra.mxu0 %v2004
    %2641 = vmatpush.msra.mxu0 %v2003
    %2642 = vmatpush.msra.mxu0 %v2002
    %2643 = vmatmul.f32.gmra.mxu0 %v2625
    %v2644 = vpop.f32.mrf.mxu0
    %v2645 = vadd.f32 %v2099, %v2644
    %2646 = vdwg.mxu0
    %2647 = vmatpush.msra.mxu0 0.0
    %2648 = vmatpush.msra.mxu0 0.0
    %2649 = vmatpush.msra.mxu0 0.0
    %2650 = vmatpush.msra.mxu0 0.0
    %2651 = vmatpush.msra.mxu0 0.0
    %2652 = vmatpush.msra.mxu0 0.0
    %2653 = vmatpush.msra.mxu0 0.0
    %2654 = vmatpush.msra.mxu0 0.0
    %2655 = vmatpush.msra.mxu0 %v2018
    %2656 = vmatpush.msra.mxu0 %v2017
    %2657 = vmatpush.msra.mxu0 %v2016
    %2658 = vmatpush.msra.mxu0 %v2015
    %2659 = vmatpush.msra.mxu0 %v2014
    %2660 = vmatpush.msra.mxu0 %v2013
    %2661 = vmatpush.msra.mxu0 %v2012
    %2662 = vmatpush.msra.mxu0 %v2011
    %2663 = vmatmul.f32.gmra.mxu0 %v2625
    %v2664 = vpop.f32.mrf.mxu0
    %v2665 = vadd.f32 %v2125, %v2664
    %2666 = vdwg.mxu0
    %s2667 = scalar_lea.vmem %s67, 32
    %2668 = vst.msk [vmem:[%s2667] sm:$0xff] %vm318, %v2645
    %s2669 = scalar_lea.vmem %s69, 32
    %2670 = vst.msk [vmem:[%s2669] sm:$0xff] %vm318, %v2665
    %s2671 = scalar_lea.vmem %s3, 32
    %v2672 = vld [vmem:[%s2671] sm:$0xff]
    %v2673 = vmul.f32 %v2665, 0.5
    %v2674 = vmul.f32 %v2673, 1.442695
    %v2675 = vpow.pop %v2674
    %v2676 = vmul.f32 %v2672, %v2675
    %v2677 = vadd.f32 %v2645, %v2676
    %s2678 = scalar_lea.vmem [#allocation9], 32
    %2679 = vst.msk [vmem:[%s2678] sm:$0xff] %vm318, %v2677
    %s2680 = scalar_lea.vmem [#allocation8], 40
    %2681 = vst.msk [vmem:[%s2680] sm:$0xff] %vm318, %v2677
    %v2683 = vsel %vm318, %v2677, 0
    %2685 = vmatpush.msra.mxu0 0.0
    %2686 = vmatpush.msra.mxu0 0.0
    %2687 = vmatpush.msra.mxu0 0.0
    %2688 = vmatpush.msra.mxu0 0.0
    %2689 = vmatpush.msra.mxu0 0.0
    %2690 = vmatpush.msra.mxu0 0.0
    %2691 = vmatpush.msra.mxu0 0.0
    %2692 = vmatpush.msra.mxu0 0.0
    %2693 = vmatpush.msra.mxu0 0.0
    %2694 = vmatpush.msra.mxu0 0.0
    %2695 = vmatpush.msra.mxu0 0.0
    %2696 = vmatpush.msra.mxu0 0.0
    %2697 = vmatpush.msra.mxu0 0.0
    %2698 = vmatpush.msra.mxu0 0.0
    %2699 = vmatpush.msra.mxu0 %v1975
    %2700 = vmatpush.msra.mxu0 %v1974
    %2701 = vmatmul.f32.gmra.mxu0 %v2683
    %v2702 = vpop.f32.mrf.mxu0
    %v2703 = vadd.f32 0.0, %v2702
    %2704 = vdwg.mxu0
    %v2705 = vmul.f32 %v2703, 0.5
    %s2706 = scalar_lea.vmem [#allocation7], 40
    %v2707 = vld [vmem:[%s2706] sm:$0xff]
    %v2708 = vadd.f32 %v2705, %v2707
    %v2709 = vtanh.pop %v2708
    %v2711 = vsel %vm384, %v2709, 0
    %2713 = vmatpush.msra.mxu0 0.0
    %2714 = vmatpush.msra.mxu0 0.0
    %2715 = vmatpush.msra.mxu0 0.0
    %2716 = vmatpush.msra.mxu0 0.0
    %2717 = vmatpush.msra.mxu0 0.0
    %2718 = vmatpush.msra.mxu0 0.0
    %2719 = vmatpush.msra.mxu0 0.0
    %2720 = vmatpush.msra.mxu0 0.0
    %2721 = vmatpush.msra.mxu0 %v1983
    %2722 = vmatpush.msra.mxu0 %v1982
    %2723 = vmatpush.msra.mxu0 %v1981
    %2724 = vmatpush.msra.mxu0 %v1980
    %2725 = vmatpush.msra.mxu0 %v1979
    %2726 = vmatpush.msra.mxu0 %v1978
    %2727 = vmatpush.msra.mxu0 %v1977
    %2728 = vmatpush.msra.mxu0 %v1976
    %2729 = vmatmul.f32.gmra.mxu0 %v2711
    %v2730 = vpop.f32.mrf.mxu0
    %v2731 = vadd.f32 %v2048, %v2730
    %2732 = vdwg.mxu0
    %v2733 = vtanh.pop %v2731
    %2734 = vmatpush.msra.mxu0 %v2000
    %2735 = vmatpush.msra.mxu0 %v1999
    %2736 = vmatpush.msra.mxu0 %v1998
    %2737 = vmatpush.msra.mxu0 %v1997
    %2738 = vmatpush.msra.mxu0 %v1996
    %2739 = vmatpush.msra.mxu0 %v1995
    %2740 = vmatpush.msra.mxu0 %v1994
    %2741 = vmatpush.msra.mxu0 %v1993
    %2742 = vmatpush.msra.mxu0 %v1992
    %2743 = vmatpush.msra.mxu0 %v1991
    %2744 = vmatpush.msra.mxu0 %v1990
    %2745 = vmatpush.msra.mxu0 %v1989
    %2746 = vmatpush.msra.mxu0 %v1988
    %2747 = vmatpush.msra.mxu0 %v1987
    %2748 = vmatpush.msra.mxu0 %v1986
    %2749 = vmatpush.msra.mxu0 %v1985
    %2750 = vmatmul.f32.gmra.mxu0 %v2733
    %v2751 = vpop.f32.mrf.mxu0
    %v2752 = vadd.f32 %v2075, %v2751
    %2753 = vdwg.mxu0
    %v2754 = vtanh.pop %v2752
    %v2756 = vsel %vm384, %v2754, 0
    %2758 = vmatpush.msra.mxu0 0.0
    %2759 = vmatpush.msra.mxu0 0.0
    %2760 = vmatpush.msra.mxu0 0.0
    %2761 = vmatpush.msra.mxu0 0.0
    %2762 = vmatpush.msra.mxu0 0.0
    %2763 = vmatpush.msra.mxu0 0.0
    %2764 = vmatpush.msra.mxu0 0.0
    %2765 = vmatpush.msra.mxu0 0.0
    %2766 = vmatpush.msra.mxu0 %v2009
    %2767 = vmatpush.msra.mxu0 %v2008
    %2768 = vmatpush.msra.mxu0 %v2007
    %2769 = vmatpush.msra.mxu0 %v2006
    %2770 = vmatpush.msra.mxu0 %v2005
    %2771 = vmatpush.msra.mxu0 %v2004
    %2772 = vmatpush.msra.mxu0 %v2003
    %2773 = vmatpush.msra.mxu0 %v2002
    %2774 = vmatmul.f32.gmra.mxu0 %v2756
    %v2775 = vpop.f32.mrf.mxu0
    %v2776 = vadd.f32 %v2099, %v2775
    %2777 = vdwg.mxu0
    %2778 = vmatpush.msra.mxu0 0.0
    %2779 = vmatpush.msra.mxu0 0.0
    %2780 = vmatpush.msra.mxu0 0.0
    %2781 = vmatpush.msra.mxu0 0.0
    %2782 = vmatpush.msra.mxu0 0.0
    %2783 = vmatpush.msra.mxu0 0.0
    %2784 = vmatpush.msra.mxu0 0.0
    %2785 = vmatpush.msra.mxu0 0.0
    %2786 = vmatpush.msra.mxu0 %v2018
    %2787 = vmatpush.msra.mxu0 %v2017
    %2788 = vmatpush.msra.mxu0 %v2016
    %2789 = vmatpush.msra.mxu0 %v2015
    %2790 = vmatpush.msra.mxu0 %v2014
    %2791 = vmatpush.msra.mxu0 %v2013
    %2792 = vmatpush.msra.mxu0 %v2012
    %2793 = vmatpush.msra.mxu0 %v2011
    %2794 = vmatmul.f32.gmra.mxu0 %v2756
    %v2795 = vpop.f32.mrf.mxu0
    %v2796 = vadd.f32 %v2125, %v2795
    %2797 = vdwg.mxu0
    %s2798 = scalar_lea.vmem %s67, 40
    %2799 = vst.msk [vmem:[%s2798] sm:$0xff] %vm318, %v2776
    %s2800 = scalar_lea.vmem %s69, 40
    %2801 = vst.msk [vmem:[%s2800] sm:$0xff] %vm318, %v2796
    %s2802 = scalar_lea.vmem %s3, 40
    %v2803 = vld [vmem:[%s2802] sm:$0xff]
    %v2804 = vmul.f32 %v2796, 0.5
    %v2805 = vmul.f32 %v2804, 1.442695
    %v2806 = vpow.pop %v2805
    %v2807 = vmul.f32 %v2803, %v2806
    %v2808 = vadd.f32 %v2776, %v2807
    %s2809 = scalar_lea.vmem [#allocation9], 40
    %2810 = vst.msk [vmem:[%s2809] sm:$0xff] %vm318, %v2808
    %s2811 = scalar_lea.vmem [#allocation8], 48
    %2812 = vst.msk [vmem:[%s2811] sm:$0xff] %vm318, %v2808
    %v2814 = vsel %vm318, %v2808, 0
    %2816 = vmatpush.msra.mxu0 0.0
    %2817 = vmatpush.msra.mxu0 0.0
    %2818 = vmatpush.msra.mxu0 0.0
    %2819 = vmatpush.msra.mxu0 0.0
    %2820 = vmatpush.msra.mxu0 0.0
    %2821 = vmatpush.msra.mxu0 0.0
    %2822 = vmatpush.msra.mxu0 0.0
    %2823 = vmatpush.msra.mxu0 0.0
    %2824 = vmatpush.msra.mxu0 0.0
    %2825 = vmatpush.msra.mxu0 0.0
    %2826 = vmatpush.msra.mxu0 0.0
    %2827 = vmatpush.msra.mxu0 0.0
    %2828 = vmatpush.msra.mxu0 0.0
    %2829 = vmatpush.msra.mxu0 0.0
    %2830 = vmatpush.msra.mxu0 %v1975
    %2831 = vmatpush.msra.mxu0 %v1974
    %2832 = vmatmul.f32.gmra.mxu0 %v2814
    %v2833 = vpop.f32.mrf.mxu0
    %v2834 = vadd.f32 0.0, %v2833
    %2835 = vdwg.mxu0
    %v2836 = vmul.f32 %v2834, 0.5
    %s2837 = scalar_lea.vmem [#allocation7], 48
    %v2838 = vld [vmem:[%s2837] sm:$0xff]
    %v2839 = vadd.f32 %v2836, %v2838
    %v2840 = vtanh.pop %v2839
    %v2842 = vsel %vm384, %v2840, 0
    %2844 = vmatpush.msra.mxu0 0.0
    %2845 = vmatpush.msra.mxu0 0.0
    %2846 = vmatpush.msra.mxu0 0.0
    %2847 = vmatpush.msra.mxu0 0.0
    %2848 = vmatpush.msra.mxu0 0.0
    %2849 = vmatpush.msra.mxu0 0.0
    %2850 = vmatpush.msra.mxu0 0.0
    %2851 = vmatpush.msra.mxu0 0.0
    %2852 = vmatpush.msra.mxu0 %v1983
    %2853 = vmatpush.msra.mxu0 %v1982
    %2854 = vmatpush.msra.mxu0 %v1981
    %2855 = vmatpush.msra.mxu0 %v1980
    %2856 = vmatpush.msra.mxu0 %v1979
    %2857 = vmatpush.msra.mxu0 %v1978
    %2858 = vmatpush.msra.mxu0 %v1977
    %2859 = vmatpush.msra.mxu0 %v1976
    %2860 = vmatmul.f32.gmra.mxu0 %v2842
    %v2861 = vpop.f32.mrf.mxu0
    %v2862 = vadd.f32 %v2048, %v2861
    %2863 = vdwg.mxu0
    %v2864 = vtanh.pop %v2862
    %2865 = vmatpush.msra.mxu0 %v2000
    %2866 = vmatpush.msra.mxu0 %v1999
    %2867 = vmatpush.msra.mxu0 %v1998
    %2868 = vmatpush.msra.mxu0 %v1997
    %2869 = vmatpush.msra.mxu0 %v1996
    %2870 = vmatpush.msra.mxu0 %v1995
    %2871 = vmatpush.msra.mxu0 %v1994
    %2872 = vmatpush.msra.mxu0 %v1993
    %2873 = vmatpush.msra.mxu0 %v1992
    %2874 = vmatpush.msra.mxu0 %v1991
    %2875 = vmatpush.msra.mxu0 %v1990
    %2876 = vmatpush.msra.mxu0 %v1989
    %2877 = vmatpush.msra.mxu0 %v1988
    %2878 = vmatpush.msra.mxu0 %v1987
    %2879 = vmatpush.msra.mxu0 %v1986
    %2880 = vmatpush.msra.mxu0 %v1985
    %2881 = vmatmul.f32.gmra.mxu0 %v2864
    %v2882 = vpop.f32.mrf.mxu0
    %v2883 = vadd.f32 %v2075, %v2882
    %2884 = vdwg.mxu0
    %v2885 = vtanh.pop %v2883
    %v2887 = vsel %vm384, %v2885, 0
    %2889 = vmatpush.msra.mxu0 0.0
    %2890 = vmatpush.msra.mxu0 0.0
    %2891 = vmatpush.msra.mxu0 0.0
    %2892 = vmatpush.msra.mxu0 0.0
    %2893 = vmatpush.msra.mxu0 0.0
    %2894 = vmatpush.msra.mxu0 0.0
    %2895 = vmatpush.msra.mxu0 0.0
    %2896 = vmatpush.msra.mxu0 0.0
    %2897 = vmatpush.msra.mxu0 %v2009
    %2898 = vmatpush.msra.mxu0 %v2008
    %2899 = vmatpush.msra.mxu0 %v2007
    %2900 = vmatpush.msra.mxu0 %v2006
    %2901 = vmatpush.msra.mxu0 %v2005
    %2902 = vmatpush.msra.mxu0 %v2004
    %2903 = vmatpush.msra.mxu0 %v2003
    %2904 = vmatpush.msra.mxu0 %v2002
    %2905 = vmatmul.f32.gmra.mxu0 %v2887
    %v2906 = vpop.f32.mrf.mxu0
    %v2907 = vadd.f32 %v2099, %v2906
    %2908 = vdwg.mxu0
    %2909 = vmatpush.msra.mxu0 0.0
    %2910 = vmatpush.msra.mxu0 0.0
    %2911 = vmatpush.msra.mxu0 0.0
    %2912 = vmatpush.msra.mxu0 0.0
    %2913 = vmatpush.msra.mxu0 0.0
    %2914 = vmatpush.msra.mxu0 0.0
    %2915 = vmatpush.msra.mxu0 0.0
    %2916 = vmatpush.msra.mxu0 0.0
    %2917 = vmatpush.msra.mxu0 %v2018
    %2918 = vmatpush.msra.mxu0 %v2017
    %2919 = vmatpush.msra.mxu0 %v2016
    %2920 = vmatpush.msra.mxu0 %v2015
    %2921 = vmatpush.msra.mxu0 %v2014
    %2922 = vmatpush.msra.mxu0 %v2013
    %2923 = vmatpush.msra.mxu0 %v2012
    %2924 = vmatpush.msra.mxu0 %v2011
    %2925 = vmatmul.f32.gmra.mxu0 %v2887
    %v2926 = vpop.f32.mrf.mxu0
    %v2927 = vadd.f32 %v2125, %v2926
    %2928 = vdwg.mxu0
    %s2929 = scalar_lea.vmem %s67, 48
    %2930 = vst.msk [vmem:[%s2929] sm:$0xff] %vm318, %v2907
    %s2931 = scalar_lea.vmem %s69, 48
    %2932 = vst.msk [vmem:[%s2931] sm:$0xff] %vm318, %v2927
    %s2933 = scalar_lea.vmem %s3, 48
    %v2934 = vld [vmem:[%s2933] sm:$0xff]
    %v2935 = vmul.f32 %v2927, 0.5
    %v2936 = vmul.f32 %v2935, 1.442695
    %v2937 = vpow.pop %v2936
    %v2938 = vmul.f32 %v2934, %v2937
    %v2939 = vadd.f32 %v2907, %v2938
    %s2940 = scalar_lea.vmem [#allocation9], 48
    %2941 = vst.msk [vmem:[%s2940] sm:$0xff] %vm318, %v2939
    %s2942 = scalar_lea.vmem [#allocation8], 56
    %2943 = vst.msk [vmem:[%s2942] sm:$0xff] %vm318, %v2939
    %v2945 = vsel %vm318, %v2939, 0
    %2947 = vmatpush.msra.mxu0 0.0
    %2948 = vmatpush.msra.mxu0 0.0
    %2949 = vmatpush.msra.mxu0 0.0
    %2950 = vmatpush.msra.mxu0 0.0
    %2951 = vmatpush.msra.mxu0 0.0
    %2952 = vmatpush.msra.mxu0 0.0
    %2953 = vmatpush.msra.mxu0 0.0
    %2954 = vmatpush.msra.mxu0 0.0
    %2955 = vmatpush.msra.mxu0 0.0
    %2956 = vmatpush.msra.mxu0 0.0
    %2957 = vmatpush.msra.mxu0 0.0
    %2958 = vmatpush.msra.mxu0 0.0
    %2959 = vmatpush.msra.mxu0 0.0
    %2960 = vmatpush.msra.mxu0 0.0
    %2961 = vmatpush.msra.mxu0 %v1975
    %2962 = vmatpush.msra.mxu0 %v1974
    %2963 = vmatmul.f32.gmra.mxu0 %v2945
    %v2964 = vpop.f32.mrf.mxu0
    %v2965 = vadd.f32 0.0, %v2964
    %2966 = vdwg.mxu0
    %v2967 = vmul.f32 %v2965, 0.5
    %s2968 = scalar_lea.vmem [#allocation7], 56
    %v2969 = vld [vmem:[%s2968] sm:$0xff]
    %v2970 = vadd.f32 %v2967, %v2969
    %v2971 = vtanh.pop %v2970
    %v2973 = vsel %vm384, %v2971, 0
    %2975 = vmatpush.msra.mxu0 0.0
    %2976 = vmatpush.msra.mxu0 0.0
    %2977 = vmatpush.msra.mxu0 0.0
    %2978 = vmatpush.msra.mxu0 0.0
    %2979 = vmatpush.msra.mxu0 0.0
    %2980 = vmatpush.msra.mxu0 0.0
    %2981 = vmatpush.msra.mxu0 0.0
    %2982 = vmatpush.msra.mxu0 0.0
    %2983 = vmatpush.msra.mxu0 %v1983
    %2984 = vmatpush.msra.mxu0 %v1982
    %2985 = vmatpush.msra.mxu0 %v1981
    %2986 = vmatpush.msra.mxu0 %v1980
    %2987 = vmatpush.msra.mxu0 %v1979
    %2988 = vmatpush.msra.mxu0 %v1978
    %2989 = vmatpush.msra.mxu0 %v1977
    %2990 = vmatpush.msra.mxu0 %v1976
    %2991 = vmatmul.f32.gmra.mxu0 %v2973
    %v2992 = vpop.f32.mrf.mxu0
    %v2993 = vadd.f32 %v2048, %v2992
    %2994 = vdwg.mxu0
    %v2995 = vtanh.pop %v2993
    %2996 = vmatpush.msra.mxu0 %v2000
    %2997 = vmatpush.msra.mxu0 %v1999
    %2998 = vmatpush.msra.mxu0 %v1998
    %2999 = vmatpush.msra.mxu0 %v1997
    %3000 = vmatpush.msra.mxu0 %v1996
    %3001 = vmatpush.msra.mxu0 %v1995
    %3002 = vmatpush.msra.mxu0 %v1994
    %3003 = vmatpush.msra.mxu0 %v1993
    %3004 = vmatpush.msra.mxu0 %v1992
    %3005 = vmatpush.msra.mxu0 %v1991
    %3006 = vmatpush.msra.mxu0 %v1990
    %3007 = vmatpush.msra.mxu0 %v1989
    %3008 = vmatpush.msra.mxu0 %v1988
    %3009 = vmatpush.msra.mxu0 %v1987
    %3010 = vmatpush.msra.mxu0 %v1986
    %3011 = vmatpush.msra.mxu0 %v1985
    %3012 = vmatmul.f32.gmra.mxu0 %v2995
    %v3013 = vpop.f32.mrf.mxu0
    %v3014 = vadd.f32 %v2075, %v3013
    %3015 = vdwg.mxu0
    %v3016 = vtanh.pop %v3014
    %v3018 = vsel %vm384, %v3016, 0
    %3020 = vmatpush.msra.mxu0 0.0
    %3021 = vmatpush.msra.mxu0 0.0
    %3022 = vmatpush.msra.mxu0 0.0
    %3023 = vmatpush.msra.mxu0 0.0
    %3024 = vmatpush.msra.mxu0 0.0
    %3025 = vmatpush.msra.mxu0 0.0
    %3026 = vmatpush.msra.mxu0 0.0
    %3027 = vmatpush.msra.mxu0 0.0
    %3028 = vmatpush.msra.mxu0 %v2009
    %3029 = vmatpush.msra.mxu0 %v2008
    %3030 = vmatpush.msra.mxu0 %v2007
    %3031 = vmatpush.msra.mxu0 %v2006
    %3032 = vmatpush.msra.mxu0 %v2005
    %3033 = vmatpush.msra.mxu0 %v2004
    %3034 = vmatpush.msra.mxu0 %v2003
    %3035 = vmatpush.msra.mxu0 %v2002
    %3036 = vmatmul.f32.gmra.mxu0 %v3018
    %v3037 = vpop.f32.mrf.mxu0
    %v3038 = vadd.f32 %v2099, %v3037
    %3039 = vdwg.mxu0
    %3040 = vmatpush.msra.mxu0 0.0
    %3041 = vmatpush.msra.mxu0 0.0
    %3042 = vmatpush.msra.mxu0 0.0
    %3043 = vmatpush.msra.mxu0 0.0
    %3044 = vmatpush.msra.mxu0 0.0
    %3045 = vmatpush.msra.mxu0 0.0
    %3046 = vmatpush.msra.mxu0 0.0
    %3047 = vmatpush.msra.mxu0 0.0
    %3048 = vmatpush.msra.mxu0 %v2018
    %3049 = vmatpush.msra.mxu0 %v2017
    %3050 = vmatpush.msra.mxu0 %v2016
    %3051 = vmatpush.msra.mxu0 %v2015
    %3052 = vmatpush.msra.mxu0 %v2014
    %3053 = vmatpush.msra.mxu0 %v2013
    %3054 = vmatpush.msra.mxu0 %v2012
    %3055 = vmatpush.msra.mxu0 %v2011
    %3056 = vmatmul.f32.gmra.mxu0 %v3018
    %v3057 = vpop.f32.mrf.mxu0
    %v3058 = vadd.f32 %v2125, %v3057
    %3059 = vdwg.mxu0
    %s3060 = scalar_lea.vmem %s67, 56
    %3061 = vst.msk [vmem:[%s3060] sm:$0xff] %vm318, %v3038
    %s3062 = scalar_lea.vmem %s69, 56
    %3063 = vst.msk [vmem:[%s3062] sm:$0xff] %vm318, %v3058
    %s3064 = scalar_lea.vmem %s3, 56
    %v3065 = vld [vmem:[%s3064] sm:$0xff]
    %v3066 = vmul.f32 %v3058, 0.5
    %v3067 = vmul.f32 %v3066, 1.442695
    %v3068 = vpow.pop %v3067
    %v3069 = vmul.f32 %v3065, %v3068
    %v3070 = vadd.f32 %v3038, %v3069
    %s3071 = scalar_lea.vmem [#allocation9], 56
    %3072 = vst.msk [vmem:[%s3071] sm:$0xff] %vm318, %v3070
    %v3073 = vld [vmem:[#allocation8] sm:$0xff]
    %v3074 = vld [vmem:[#allocation8 + $0x8] sm:$0xff]
    %v3075 = vld [vmem:[#allocation8 + $0x10] sm:$0xff]
    %v3076 = vld [vmem:[#allocation8 + $0x18] sm:$0xff]
    %v3077 = vld [vmem:[#allocation8 + $0x20] sm:$0xff]
    %v3078 = vld [vmem:[#allocation8 + $0x28] sm:$0xff]
    %v3079 = vld [vmem:[#allocation8 + $0x30] sm:$0xff]
    %v3080 = vld [vmem:[#allocation8 + $0x38] sm:$0xff]
    %v3081 = vld [vmem:[%s51] sm:$0xff]
    %v3082 = vld [vmem:[%s51 + $0x8] sm:$0xff]
    %v3083 = vld [vmem:[#allocation24] sm:$0x1]
    %v3085 = vperm.slane %v3083, 0
    %v3088 = vsel %vm318, %v3073, 0
    %v3091 = vsel %vm318, %v3074, 0
    %v3094 = vsel %vm318, %v3075, 0
    %v3097 = vsel %vm318, %v3076, 0
    %v3100 = vsel %vm318, %v3077, 0
    %v3103 = vsel %vm318, %v3078, 0
    %v3106 = vsel %vm318, %v3079, 0
    %v3109 = vsel %vm318, %v3080, 0
    %3111 = vmatpush.msra.mxu0 0.0
    %3112 = vmatpush.msra.mxu0 0.0
    %3113 = vmatpush.msra.mxu0 0.0
    %3114 = vmatpush.msra.mxu0 0.0
    %3115 = vmatpush.msra.mxu0 0.0
    %3116 = vmatpush.msra.mxu0 0.0
    %3117 = vmatpush.msra.mxu0 0.0
    %3118 = vmatpush.msra.mxu0 0.0
    %3119 = vmatpush.msra.mxu0 0.0
    %3120 = vmatpush.msra.mxu0 0.0
    %3121 = vmatpush.msra.mxu0 0.0
    %3122 = vmatpush.msra.mxu0 0.0
    %3123 = vmatpush.msra.mxu0 0.0
    %3124 = vmatpush.msra.mxu0 0.0
    %3125 = vmatpush.msra.mxu0 %v3082
    %3126 = vmatpush.msra.mxu0 %v3081
    %3127 = vmatmul.f32.gmra.mxu0 %v3088
    %v3128 = vpop.f32.mrf.mxu0
    %v3129 = vadd.f32 %v3085, %v3128
    %3130 = vmatmul.f32.gmra.mxu0 %v3091
    %v3131 = vpop.f32.mrf.mxu0
    %v3132 = vadd.f32 %v3085, %v3131
    %3133 = vmatmul.f32.gmra.mxu0 %v3094
    %v3134 = vpop.f32.mrf.mxu0
    %v3135 = vadd.f32 %v3085, %v3134
    %3136 = vmatmul.f32.gmra.mxu0 %v3097
    %v3137 = vpop.f32.mrf.mxu0
    %v3138 = vadd.f32 %v3085, %v3137
    %3139 = vmatmul.f32.gmra.mxu0 %v3100
    %v3140 = vpop.f32.mrf.mxu0
    %v3141 = vadd.f32 %v3085, %v3140
    %3142 = vmatmul.f32.gmra.mxu0 %v3103
    %v3143 = vpop.f32.mrf.mxu0
    %v3144 = vadd.f32 %v3085, %v3143
    %3145 = vmatmul.f32.gmra.mxu0 %v3106
    %v3146 = vpop.f32.mrf.mxu0
    %v3147 = vadd.f32 %v3085, %v3146
    %3148 = vmatmul.f32.gmra.mxu0 %v3109
    %v3149 = vpop.f32.mrf.mxu0
    %v3150 = vadd.f32 %v3085, %v3149
    %3151 = vdwg.mxu0
    %vm3152 = vcmask 261120
    %3153 = vst.msk [vmem:[%s71] sm:$0xff] %vm3152, %v3129
    %3154 = vst.msk [vmem:[%s71 + $0x8] sm:$0xff] %vm3152, %v3132
    %3155 = vst.msk [vmem:[%s71 + $0x10] sm:$0xff] %vm3152, %v3135
    %3156 = vst.msk [vmem:[%s71 + $0x18] sm:$0xff] %vm3152, %v3138
    %3157 = vst.msk [vmem:[%s71 + $0x20] sm:$0xff] %vm3152, %v3141
    %3158 = vst.msk [vmem:[%s71 + $0x28] sm:$0xff] %vm3152, %v3144
    %3159 = vst.msk [vmem:[%s71 + $0x30] sm:$0xff] %vm3152, %v3147
    %3160 = vst.msk [vmem:[%s71 + $0x38] sm:$0xff] %vm3152, %v3150
    %v3161 = vld [vmem:[#allocation9] sm:$0xff]
    %v3162 = vld [vmem:[#allocation9 + $0x8] sm:$0xff]
    %v3163 = vld [vmem:[#allocation9 + $0x10] sm:$0xff]
    %v3164 = vld [vmem:[#allocation9 + $0x18] sm:$0xff]
    %v3165 = vld [vmem:[#allocation9 + $0x20] sm:$0xff]
    %v3166 = vld [vmem:[#allocation9 + $0x28] sm:$0xff]
    %v3167 = vld [vmem:[#allocation9 + $0x30] sm:$0xff]
    %v3168 = vld [vmem:[#allocation9 + $0x38] sm:$0xff]
    %v3169 = vld [vmem:[#allocation26] sm:$0xff]
    %v3170 = vld [vmem:[#allocation26 + $0x8] sm:$0xff]
    %v3171 = vld [vmem:[%s57] sm:$0x1]
    %v3173 = vperm.slane %v3171, 0
    %v3176 = vsel %vm318, %v3161, 0
    %v3179 = vsel %vm318, %v3162, 0
    %v3182 = vsel %vm318, %v3163, 0
    %v3185 = vsel %vm318, %v3164, 0
    %v3188 = vsel %vm318, %v3165, 0
    %v3191 = vsel %vm318, %v3166, 0
    %v3194 = vsel %vm318, %v3167, 0
    %v3197 = vsel %vm318, %v3168, 0
    %3199 = vmatpush.msra.mxu0 0.0
    %3200 = vmatpush.msra.mxu0 0.0
    %3201 = vmatpush.msra.mxu0 0.0
    %3202 = vmatpush.msra.mxu0 0.0
    %3203 = vmatpush.msra.mxu0 0.0
    %3204 = vmatpush.msra.mxu0 0.0
    %3205 = vmatpush.msra.mxu0 0.0
    %3206 = vmatpush.msra.mxu0 0.0
    %3207 = vmatpush.msra.mxu0 0.0
    %3208 = vmatpush.msra.mxu0 0.0
    %3209 = vmatpush.msra.mxu0 0.0
    %3210 = vmatpush.msra.mxu0 0.0
    %3211 = vmatpush.msra.mxu0 0.0
    %3212 = vmatpush.msra.mxu0 0.0
    %3213 = vmatpush.msra.mxu0 %v3170
    %3214 = vmatpush.msra.mxu0 %v3169
    %3215 = vmatmul.f32.gmra.mxu0 %v3176
    %v3216 = vpop.f32.mrf.mxu0
    %v3217 = vadd.f32 %v3173, %v3216
    %3218 = vmatmul.f32.gmra.mxu0 %v3179
    %v3219 = vpop.f32.mrf.mxu0
    %v3220 = vadd.f32 %v3173, %v3219
    %3221 = vmatmul.f32.gmra.mxu0 %v3182
    %v3222 = vpop.f32.mrf.mxu0
    %v3223 = vadd.f32 %v3173, %v3222
    %3224 = vmatmul.f32.gmra.mxu0 %v3185
    %v3225 = vpop.f32.mrf.mxu0
    %v3226 = vadd.f32 %v3173, %v3225
    %3227 = vmatmul.f32.gmra.mxu0 %v3188
    %v3228 = vpop.f32.mrf.mxu0
    %v3229 = vadd.f32 %v3173, %v3228
    %3230 = vmatmul.f32.gmra.mxu0 %v3191
    %v3231 = vpop.f32.mrf.mxu0
    %v3232 = vadd.f32 %v3173, %v3231
    %3233 = vmatmul.f32.gmra.mxu0 %v3194
    %v3234 = vpop.f32.mrf.mxu0
    %v3235 = vadd.f32 %v3173, %v3234
    %3236 = vmatmul.f32.gmra.mxu0 %v3197
    %v3237 = vpop.f32.mrf.mxu0
    %v3238 = vadd.f32 %v3173, %v3237
    %3239 = vdwg.mxu0
    %v3240 = vtanh.pop %v3217
    %v3241 = vtanh.pop %v3220
    %v3242 = vtanh.pop %v3223
    %v3243 = vtanh.pop %v3226
    %v3244 = vtanh.pop %v3229
    %v3245 = vtanh.pop %v3232
    %v3246 = vtanh.pop %v3235
    %v3247 = vtanh.pop %v3238
    %v3248 = vld [vmem:[%s59] sm:$0xff]
    %v3249 = vld [vmem:[%s59 + $0x8] sm:$0xff]
    %v3250 = vld [vmem:[%s59 + $0x10] sm:$0xff]
    %v3251 = vld [vmem:[%s59 + $0x18] sm:$0xff]
    %v3252 = vld [vmem:[%s59 + $0x20] sm:$0xff]
    %v3253 = vld [vmem:[%s59 + $0x28] sm:$0xff]
    %v3254 = vld [vmem:[%s59 + $0x30] sm:$0xff]
    %v3255 = vld [vmem:[%s59 + $0x38] sm:$0xff]
    %v3256 = vld [vmem:[%s61] sm:$0x1]
    %v3258 = vperm.slane %v3256, 0
    %v3261 = vsel %vm384, %v3240, 0
    %v3264 = vsel %vm384, %v3241, 0
    %v3267 = vsel %vm384, %v3242, 0
    %v3270 = vsel %vm384, %v3243, 0
    %v3273 = vsel %vm384, %v3244, 0
    %v3276 = vsel %vm384, %v3245, 0
    %v3279 = vsel %vm384, %v3246, 0
    %v3282 = vsel %vm384, %v3247, 0
    %3284 = vmatpush.msra.mxu0 0.0
    %3285 = vmatpush.msra.mxu0 0.0
    %3286 = vmatpush.msra.mxu0 0.0
    %3287 = vmatpush.msra.mxu0 0.0
    %3288 = vmatpush.msra.mxu0 0.0
    %3289 = vmatpush.msra.mxu0 0.0
    %3290 = vmatpush.msra.mxu0 0.0
    %3291 = vmatpush.msra.mxu0 0.0
    %3292 = vmatpush.msra.mxu0 %v3255
    %3293 = vmatpush.msra.mxu0 %v3254
    %3294 = vmatpush.msra.mxu0 %v3253
    %3295 = vmatpush.msra.mxu0 %v3252
    %3296 = vmatpush.msra.mxu0 %v3251
    %3297 = vmatpush.msra.mxu0 %v3250
    %3298 = vmatpush.msra.mxu0 %v3249
    %3299 = vmatpush.msra.mxu0 %v3248
    %3300 = vmatmul.f32.gmra.mxu0 %v3261
    %v3301 = vpop.f32.mrf.mxu0
    %v3302 = vadd.f32 %v3258, %v3301
    %3303 = vmatmul.f32.gmra.mxu0 %v3264
    %v3304 = vpop.f32.mrf.mxu0
    %v3305 = vadd.f32 %v3258, %v3304
    %3306 = vmatmul.f32.gmra.mxu0 %v3267
    %v3307 = vpop.f32.mrf.mxu0
    %v3308 = vadd.f32 %v3258, %v3307
    %3309 = vmatmul.f32.gmra.mxu0 %v3270
    %v3310 = vpop.f32.mrf.mxu0
    %v3311 = vadd.f32 %v3258, %v3310
    %3312 = vmatmul.f32.gmra.mxu0 %v3273
    %v3313 = vpop.f32.mrf.mxu0
    %v3314 = vadd.f32 %v3258, %v3313
    %3315 = vmatmul.f32.gmra.mxu0 %v3276
    %v3316 = vpop.f32.mrf.mxu0
    %v3317 = vadd.f32 %v3258, %v3316
    %3318 = vmatmul.f32.gmra.mxu0 %v3279
    %v3319 = vpop.f32.mrf.mxu0
    %v3320 = vadd.f32 %v3258, %v3319
    %3321 = vmatmul.f32.gmra.mxu0 %v3282
    %v3322 = vpop.f32.mrf.mxu0
    %v3323 = vadd.f32 %v3258, %v3322
    %3324 = vdwg.mxu0
    %v3325 = vtanh.pop %v3302
    %v3326 = vtanh.pop %v3305
    %v3327 = vtanh.pop %v3308
    %v3328 = vtanh.pop %v3311
    %v3329 = vtanh.pop %v3314
    %v3330 = vtanh.pop %v3317
    %v3331 = vtanh.pop %v3320
    %v3332 = vtanh.pop %v3323
    %v3333 = vld [vmem:[%s63] sm:$0xff]
    %v3334 = vld [vmem:[%s63 + $0x8] sm:$0xff]
    %v3335 = vld [vmem:[%s63 + $0x10] sm:$0xff]
    %v3336 = vld [vmem:[%s63 + $0x18] sm:$0xff]
    %v3337 = vld [vmem:[%s63 + $0x20] sm:$0xff]
    %v3338 = vld [vmem:[%s63 + $0x28] sm:$0xff]
    %v3339 = vld [vmem:[%s63 + $0x30] sm:$0xff]
    %v3340 = vld [vmem:[%s63 + $0x38] sm:$0xff]
    %v3341 = vld [vmem:[%s65] sm:$0x1]
    %v3343 = vperm.slane %v3341, 0
    %v3346 = vsel %vm384, %v3325, 0
    %v3349 = vsel %vm384, %v3326, 0
    %v3352 = vsel %vm384, %v3327, 0
    %v3355 = vsel %vm384, %v3328, 0
    %v3358 = vsel %vm384, %v3329, 0
    %v3361 = vsel %vm384, %v3330, 0
    %v3364 = vsel %vm384, %v3331, 0
    %v3367 = vsel %vm384, %v3332, 0
    %3369 = vmatpush.msra.mxu0 0.0
    %3370 = vmatpush.msra.mxu0 0.0
    %3371 = vmatpush.msra.mxu0 0.0
    %3372 = vmatpush.msra.mxu0 0.0
    %3373 = vmatpush.msra.mxu0 0.0
    %3374 = vmatpush.msra.mxu0 0.0
    %3375 = vmatpush.msra.mxu0 0.0
    %3376 = vmatpush.msra.mxu0 0.0
    %3377 = vmatpush.msra.mxu0 %v3340
    %3378 = vmatpush.msra.mxu0 %v3339
    %3379 = vmatpush.msra.mxu0 %v3338
    %3380 = vmatpush.msra.mxu0 %v3337
    %3381 = vmatpush.msra.mxu0 %v3336
    %3382 = vmatpush.msra.mxu0 %v3335
    %3383 = vmatpush.msra.mxu0 %v3334
    %3384 = vmatpush.msra.mxu0 %v3333
    %3385 = vmatmul.f32.gmra.mxu0 %v3346
    %v3386 = vpop.f32.mrf.mxu0
    %v3387 = vadd.f32 %v3343, %v3386
    %3388 = vmatmul.f32.gmra.mxu0 %v3349
    %v3389 = vpop.f32.mrf.mxu0
    %v3390 = vadd.f32 %v3343, %v3389
    %3391 = vmatmul.f32.gmra.mxu0 %v3352
    %v3392 = vpop.f32.mrf.mxu0
    %v3393 = vadd.f32 %v3343, %v3392
    %3394 = vmatmul.f32.gmra.mxu0 %v3355
    %v3395 = vpop.f32.mrf.mxu0
    %v3396 = vadd.f32 %v3343, %v3395
    %3397 = vmatmul.f32.gmra.mxu0 %v3358
    %v3398 = vpop.f32.mrf.mxu0
    %v3399 = vadd.f32 %v3343, %v3398
    %3400 = vmatmul.f32.gmra.mxu0 %v3361
    %v3401 = vpop.f32.mrf.mxu0
    %v3402 = vadd.f32 %v3343, %v3401
    %3403 = vmatmul.f32.gmra.mxu0 %v3364
    %v3404 = vpop.f32.mrf.mxu0
    %v3405 = vadd.f32 %v3343, %v3404
    %3406 = vmatmul.f32.gmra.mxu0 %v3367
    %v3407 = vpop.f32.mrf.mxu0
    %v3408 = vadd.f32 %v3343, %v3407
    %3409 = vdwg.mxu0
    %3410 = vst.msk [vmem:[%s73] sm:$0xff] %vm3152, %v3387
    %3411 = vst.msk [vmem:[%s73 + $0x8] sm:$0xff] %vm3152, %v3390
    %3412 = vst.msk [vmem:[%s73 + $0x10] sm:$0xff] %vm3152, %v3393
    %3413 = vst.msk [vmem:[%s73 + $0x18] sm:$0xff] %vm3152, %v3396
    %3414 = vst.msk [vmem:[%s73 + $0x20] sm:$0xff] %vm3152, %v3399
    %3415 = vst.msk [vmem:[%s73 + $0x28] sm:$0xff] %vm3152, %v3402
    %3416 = vst.msk [vmem:[%s73 + $0x30] sm:$0xff] %vm3152, %v3405
    %3417 = vst.msk [vmem:[%s73 + $0x38] sm:$0xff] %vm3152, %v3408
    // Predicated region
    $region178: #{tpu_custom_call.1} parent=1 // pred_check
      _
    $region179: #{tpu_custom_call.1} parent=1 // pred_check_branch
      %3419 = sbr.rel (0) target = $region181
    $region180: #{tpu_custom_call.1} parent=1 // pred_region
      _
    $region181: #{tpu_custom_call.1} parent=1 // pred_fallthru
      _
    // Predicated region
    $region182: #{tpu_custom_call.1} parent=1 // pred_check
      _
    $region183: #{tpu_custom_call.1} parent=1 // pred_check_branch
      %3421 = sbr.rel (0) target = $region185
    $region184: #{tpu_custom_call.1} parent=1 // pred_region
      _
    $region185: #{tpu_custom_call.1} parent=1 // pred_fallthru
      _
    // Predicated region
    $region186: #{tpu_custom_call.1} parent=1 // pred_check
      _
    $region187: #{tpu_custom_call.1} parent=1 // pred_check_branch
      %3423 = sbr.rel (0) target = $region189
    $region188: #{tpu_custom_call.1} parent=1 // pred_region
      _
    $region189: #{tpu_custom_call.1} parent=1 // pred_fallthru
      _
    // Predicated region
    $region190: #{tpu_custom_call.1} parent=1 // pred_check
      _
    $region191: #{tpu_custom_call.1} parent=1 // pred_check_branch
      %3425 = sbr.rel (0) target = $region193
    $region192: #{tpu_custom_call.1} parent=1 // pred_region
      _
    $region193: #{tpu_custom_call.1} parent=1 // pred_fallthru
      _
    // Predicated region
    $region194: #{tpu_custom_call.1} parent=1 // pred_check
      _
    $region195: #{tpu_custom_call.1} parent=1 // pred_check_branch
      %3427 = sbr.rel (0) target = $region197
    $region196: #{tpu_custom_call.1} parent=1 // pred_region
      _
    $region197: #{tpu_custom_call.1} parent=1 // pred_fallthru
      _
    // Predicated region
    $region198: #{tpu_custom_call.1} parent=1 // pred_check
      _
    $region199: #{tpu_custom_call.1} parent=1 // pred_check_branch
      %3429 = sbr.rel (0) target = $region201
    $region200: #{tpu_custom_call.1} parent=1 // pred_region
      _
    $region201: #{tpu_custom_call.1} parent=1 // pred_fallthru
      _
    // Predicated region
    $region202: #{tpu_custom_call.1} parent=1 // pred_check
      _
    $region203: #{tpu_custom_call.1} parent=1 // pred_check_branch
      %3431 = sbr.rel (0) target = $region205
    $region204: #{tpu_custom_call.1} parent=1 // pred_region
      _
    $region205: #{tpu_custom_call.1} parent=1 // pred_fallthru
      _
    // Predicated region
    $region206: #{tpu_custom_call.1} parent=1 // pred_check
      _
    $region207: #{tpu_custom_call.1} parent=1 // pred_check_branch
      %3433 = sbr.rel (0) target = $region209
    $region208: #{tpu_custom_call.1} parent=1 // pred_region
      _
    $region209: #{tpu_custom_call.1} parent=1 // pred_fallthru
      _
    %3434 = vsyncpa [#allocation11], 1
    %3435 = vsyncpa [#allocation13], 1
    %3436 = vsyncpa [#allocation16], 1
    %3437 = vsyncpa [#allocation19], 1
    %3438 = vsyncpa [#allocation22], 1
    %3439 = vsyncpa [#allocation25], 1

</llo_original>
